<compile_context>
chip_gen: v7x
topology: tpu7x:2x2x1
jax: 0.10.0
libtpu: 0.0.40
codegen_flags: <defaults>
</compile_context>

<pallas_src>
import jax
import jax.numpy as jnp
import numpy as np
from jax.experimental import pallas as pl
from jax.experimental.pallas import tpu as pltpu

MXU_DTYPE = jnp.bfloat16
VMEM_LIMIT_BYTES = 32 * 1024 * 1024   # raises v5e's 16 MiB scoped default; safe on v6e/v7x


def _largest_divisor_leq(n, cap):
    t = min(n, cap)
    while n % t:
        t -= 1
    return t


def _row_tile(n, cap=512):
    """Largest row tile (multiple of 8 when tiling) that divides n, capped."""
    if n <= cap:
        return n
    t = cap - cap % 8
    while t >= 8:
        if n % t == 0:
            return t
        t -= 8
    return n


def _attn_seq_tile(S, B, row_cap=1024):
    """Sequence tile for attention so the row block (t*B) is 8-aligned."""
    for t in range(S, 0, -1):
        if S % t == 0 and t * B <= row_cap and (t * B) % 8 == 0:
            return t
    return S   # whole array in one block (always a legal block shape)


# ---------------------------------------------------------------------------
# 1) Input projection: xp[d, row, :] = x[row, :] @ Wih[d] + bih[d]
#    (all timesteps, both directions, gates fused -> N = 3H).  bf16 in/out.
# ---------------------------------------------------------------------------
def _in_proj_kernel(x_ref, w_ref, b_ref, o_ref):
    acc = jnp.dot(x_ref[...], w_ref[...], preferred_element_type=jnp.float32)
    o_ref[...] = (acc + b_ref[...]).astype(o_ref.dtype)


def input_projection(x, wih, bih):
    """x: (S,B,E) bf16; wih: (2,E,3H) bf16; bih: (2,1,3H) f32 -> (2,S,B,3H) bf16."""
    S, B, E = x.shape
    threeH = wih.shape[-1]
    SB = S * B
    x2 = x.reshape(SB, E)
    tm = _row_tile(SB)
    grid_spec = pltpu.PrefetchScalarGridSpec(
        num_scalar_prefetch=0,
        grid=(2, SB // tm),
        in_specs=[
            pl.BlockSpec((tm, E), lambda d, m: (m, 0)),
            pl.BlockSpec((None, E, threeH), lambda d, m: (d, 0, 0)),
            pl.BlockSpec((None, 1, threeH), lambda d, m: (d, 0, 0)),
        ],
        out_specs=pl.BlockSpec((None, tm, threeH), lambda d, m: (d, m, 0)),
    )
    xp2 = pl.pallas_call(
        _in_proj_kernel,
        out_shape=jax.ShapeDtypeStruct((2, SB, threeH), MXU_DTYPE),
        grid_spec=grid_spec,
        compiler_params=pltpu.CompilerParams(
            dimension_semantics=("parallel", "parallel"),
            vmem_limit_bytes=VMEM_LIMIT_BYTES),
    )(x2, wih, bih)
    return xp2.reshape(2, S, B, threeH)


# ---------------------------------------------------------------------------
# 2) Fused bidirectional GRU recurrence.  One kernel, grid over time blocks;
#    forward and backward directions are interleaved in the same loop so the
#    two independent per-step matmul->EUP->VPU chains overlap.  The backward
#    direction reads/writes reversed time blocks (states land at original t).
# ---------------------------------------------------------------------------
def _bigru_kernel(xpf_ref, xpb_ref, whh_ref, bhh_ref, h0_ref,
                  hf_ref, hb_ref, hn_ref, hf_scr, hb_scr):
    g = pl.program_id(0)
    nblk = pl.num_programs(0)
    ts = xpf_ref.shape[0]
    H = h0_ref.shape[-1]

    @pl.when(g == 0)
    def _():
        hf_scr[...] = h0_ref[0]
        hb_scr[...] = h0_ref[1]

    whh_f = whh_ref[0]          # (H, 3H) bf16
    whh_b = whh_ref[1]
    bhh_f = bhh_ref[0]          # (1, 3H) f32
    bhh_b = bhh_ref[1]

    def gru_cell(xg, h_prev, whh, bhh):
        hg = jnp.dot(h_prev.astype(whh.dtype), whh,
                     preferred_element_type=jnp.float32) + bhh
        rz = jax.nn.sigmoid(xg[:, :2 * H] + hg[:, :2 * H])   # fused r|z sigmoid
        r = rz[:, :H]
        z = rz[:, H:]
        n = jnp.tanh(xg[:, 2 * H:] + r * hg[:, 2 * H:])
        return (1.0 - z) * n + z * h_prev

    def step(k, carry):
        h_f, h_b = carry
        kb = ts - 1 - k          # backward local index (block is time-reversed)
        h_f = gru_cell(xpf_ref[k].astype(jnp.float32), h_f, whh_f, bhh_f)
        h_b = gru_cell(xpb_ref[kb].astype(jnp.float32), h_b, whh_b, bhh_b)
        hf_ref[k] = h_f.astype(hf_ref.dtype)
        hb_ref[kb] = h_b.astype(hb_ref.dtype)
        return (h_f, h_b)

    h_f, h_b = jax.lax.fori_loop(0, ts, step, (hf_scr[...], hb_scr[...]),
                                 unroll=True)
    hf_scr[...] = h_f
    hb_scr[...] = h_b

    @pl.when(g == nblk - 1)
    def _():
        hn_ref[0] = h_f
        hn_ref[1] = h_b


def bigru(xp, whh, bhh, h0, *, ts=None):
    """xp: (2,S,B,3H) bf16; whh: (2,H,3H) bf16; bhh: (2,1,3H) f32; h0: (2,B,H) f32.

    Returns hseq_f, hseq_b: (S,B,H) bf16 (original time order) and h_n (2,B,H) f32."""
    _, S, B, threeH = xp.shape
    H = threeH // 3
    if ts is None:
        # ~8-16 timesteps per grid step keeps vreg pressure bounded while
        # amortizing the ~0.35us per-grid-step overhead.
        ts = _largest_divisor_leq(S, 16)
    assert S % ts == 0  # TODO(synk): pad S for prime lengths instead of degrading to ts=1.
    sb = S // ts

    grid_spec = pltpu.PrefetchScalarGridSpec(
        num_scalar_prefetch=0,
        grid=(sb,),
        in_specs=[
            # xp passed twice: forward blocks (d=0, g) and backward blocks (d=1, reversed).
            pl.BlockSpec((None, ts, B, threeH), lambda g: (0, g, 0, 0)),
            pl.BlockSpec((None, ts, B, threeH), lambda g: (1, sb - 1 - g, 0, 0)),
            pl.BlockSpec((2, H, threeH), lambda g: (0, 0, 0)),
            pl.BlockSpec((2, 1, threeH), lambda g: (0, 0, 0)),
            pl.BlockSpec((2, B, H), lambda g: (0, 0, 0)),
        ],
        out_specs=(
            pl.BlockSpec((ts, B, H), lambda g: (g, 0, 0)),
            pl.BlockSpec((ts, B, H), lambda g: (sb - 1 - g, 0, 0)),
            pl.BlockSpec((2, B, H), lambda g: (0, 0, 0)),
        ),
        scratch_shapes=[pltpu.VMEM((B, H), jnp.float32),
                        pltpu.VMEM((B, H), jnp.float32)],
    )
    return pl.pallas_call(
        _bigru_kernel,
        out_shape=(jax.ShapeDtypeStruct((S, B, H), MXU_DTYPE),
                   jax.ShapeDtypeStruct((S, B, H), MXU_DTYPE),
                   jax.ShapeDtypeStruct((2, B, H), jnp.float32)),
        grid_spec=grid_spec,
        compiler_params=pltpu.CompilerParams(
            dimension_semantics=("arbitrary",),
            vmem_limit_bytes=VMEM_LIMIT_BYTES),
    )(xp, xp, whh, bhh, h0)


# ---------------------------------------------------------------------------
# 3) Word attention.  No per-batch loop / strided gathers / concatenate:
#      u = tanh(hf @ W[:H] + hb @ W[H:] + b)           two lane-dense matmuls
#      score = tanh(<u, cw>)  in [-1, 1]  -> exp needs no running max, so the
#      softmax numerator/denominator accumulate exactly over sequence blocks.
#    Per-batch grouped sums over the flat (s*B + b) row axis are one-hot
#    selection matmuls (MXU), avoiding sublane-strided reductions.
# ---------------------------------------------------------------------------
def _word_attn_kernel(hf_ref, hb_ref, ww_ref, wb_ref, cw_ref, out_ref,
                      nf_scr, nb_scr, den_scr):
    g = pl.program_id(0)

    @pl.when(g == 0)
    def _():
        nf_scr[...] = jnp.zeros_like(nf_scr)
        nb_scr[...] = jnp.zeros_like(nb_scr)
        den_scr[...] = jnp.zeros_like(den_scr)

    n_rows, H = hf_ref.shape
    B = den_scr.shape[0]

    hf = hf_ref[...]                                       # (rows, H) bf16
    hb = hb_ref[...]
    u = jnp.tanh(jnp.dot(hf, ww_ref[0], preferred_element_type=jnp.float32)
                 + jnp.dot(hb, ww_ref[1], preferred_element_type=jnp.float32)
                 + wb_ref[...])                            # (rows, 2H) f32
    score = jnp.tanh(jnp.sum(u * cw_ref[...], axis=-1, keepdims=True))  # (rows, 1)
    e = jnp.exp(score)                                     # bounded: score in [-1, 1]

    # One-hot per-batch selector: sel[b, row] = 1 iff (row % B) == b.
    b_idx = jax.lax.broadcasted_iota(jnp.int32, (B, n_rows), 0)
    r_idx = jax.lax.broadcasted_iota(jnp.int32, (B, n_rows), 1)
    sel = jnp.where(r_idx % B == b_idx, 1.0, 0.0).astype(jnp.float32)    # (B, rows)

    nf_scr[...] += jnp.dot(sel, e * hf.astype(jnp.float32),
                           preferred_element_type=jnp.float32)           # (B, H)
    nb_scr[...] += jnp.dot(sel, e * hb.astype(jnp.float32),
                           preferred_element_type=jnp.float32)           # (B, H)
    den_scr[...] += jnp.dot(sel, e, preferred_element_type=jnp.float32)  # (B, 1)

    @pl.when(g == pl.num_programs(0) - 1)
    def _():
        inv = 1.0 / den_scr[...]
        out_ref[...] = jnp.concatenate(
            [nf_scr[...] * inv, nb_scr[...] * inv], axis=-1).astype(out_ref.dtype)


def word_attention(hseq_f, hseq_b, word_weight2, word_bias, context_weight):
    """hseq_f/hseq_b: (S,B,H) bf16; word_weight2: (2,H,2H) bf16 -> (B, 2H) f32."""
    S, B, H = hseq_f.shape
    D = 2 * H
    hf2 = hseq_f.reshape(S * B, H)             # contiguous merge, no transpose
    hb2 = hseq_b.reshape(S * B, H)
    cw_row = context_weight.reshape(1, D)
    ts = _attn_seq_tile(S, B)
    nblk = S // ts
    rows = ts * B
    grid_spec = pltpu.PrefetchScalarGridSpec(
        num_scalar_prefetch=0,
        grid=(nblk,),
        in_specs=[
            pl.BlockSpec((rows, H), lambda g: (g, 0)),
            pl.BlockSpec((rows, H), lambda g: (g, 0)),
            pl.BlockSpec((2, H, D), lambda g: (0, 0, 0)),
            pl.BlockSpec((1, D), lambda g: (0, 0)),
            pl.BlockSpec((1, D), lambda g: (0, 0)),
        ],
        out_specs=pl.BlockSpec((B, D), lambda g: (0, 0)),
        scratch_shapes=[pltpu.VMEM((B, H), jnp.float32),
                        pltpu.VMEM((B, H), jnp.float32),
                        pltpu.VMEM((B, 1), jnp.float32)],
    )
    return pl.pallas_call(
        _word_attn_kernel,
        out_shape=jax.ShapeDtypeStruct((B, D), jnp.float32),
        grid_spec=grid_spec,
        compiler_params=pltpu.CompilerParams(
            dimension_semantics=("arbitrary",),
            vmem_limit_bytes=VMEM_LIMIT_BYTES),
    )(hf2, hb2, word_weight2, word_bias, cw_row)


# ---------------------------------------------------------------------------
# Full WordAttn forward.
# ---------------------------------------------------------------------------
def word_attn_forward(token_ids, hidden_state, params):
    H = hidden_state.shape[-1]
    # TODO(synk): the data-dependent embedding gather stays in XLA (jnp.take);
    # it could be fused into input_projection via scalar-prefetched token ids
    # and a pl.Element row index_map on the embedding table.
    x = jnp.take(params["embedding"], token_ids, axis=0).astype(MXU_DTYPE)   # (S,B,E) bf16

    wih = params["wih"].astype(MXU_DTYPE)
    whh = params["whh"].astype(MXU_DTYPE)
    ww2 = params["word_weight"].astype(MXU_DTYPE).reshape(2, H, 2 * H)

    xp = input_projection(x, wih, params["bih"])                      # (2,S,B,3H) bf16
    hseq_f, hseq_b, h_n = bigru(xp, whh, params["bhh"], hidden_state)  # bf16, bf16, f32
    s = word_attention(hseq_f, hseq_b, ww2, params["word_bias"],
                       params["context_weight"])                      # (B, 2H) f32
    s_i = s[None]                                                     # (1, B, 2H)
    return s_i, h_n


# ---------------------------------------------------------------------------
# Pure-JAX reference (f32) for a correctness check.
# ---------------------------------------------------------------------------
def reference_forward(token_ids, hidden_state, params):
    H = hidden_state.shape[-1]
    x = jnp.take(params["embedding"], token_ids, axis=0).astype(jnp.float32)

    def gru_dir(xseq, wih, whh, bih, bhh, h0):
        def step(h, x_t):
            xg = x_t @ wih + bih
            hg = h @ whh + bhh
            r = jax.nn.sigmoid(xg[:, :H] + hg[:, :H])
            z = jax.nn.sigmoid(xg[:, H:2 * H] + hg[:, H:2 * H])
            n = jnp.tanh(xg[:, 2 * H:] + r * hg[:, 2 * H:])
            h_new = (1.0 - z) * n + z * h
            return h_new, h_new
        hT, hs = jax.lax.scan(step, h0, xseq)
        return hs, hT

    hf, hnf = gru_dir(x, params["wih"][0], params["whh"][0],
                      params["bih"][0], params["bhh"][0], hidden_state[0])
    hb_rev, hnb = gru_dir(jnp.flip(x, 0), params["wih"][1], params["whh"][1],
                          params["bih"][1], params["bhh"][1], hidden_state[1])
    hb = jnp.flip(hb_rev, 0)
    h_t = jnp.concatenate([hf, hb], -1)                               # (S,B,2H)
    u = jnp.tanh(h_t @ params["word_weight"] + params["word_bias"])
    score = jnp.tanh(jnp.einsum("sbd,dk->sbk", u,
                                params["context_weight"]))[..., 0]    # (S,B)
    a = jax.nn.softmax(score, axis=0)
    s_i = jnp.sum(h_t * a[..., None], axis=0)[None]                   # (1,B,2H)
    h_n = jnp.stack([hnf, hnb], 0)
    return s_i, h_n


def init_params(key, vocab, E, H):
    D = 2 * H
    ks = jax.random.split(key, 8)
    k_inv = 1.0 / np.sqrt(H)

    def uni(k, shape):
        return jax.random.uniform(k, shape, jnp.float32, -k_inv, k_inv)

    emb = jax.random.normal(ks[0], (vocab, E), jnp.float32) * 0.1
    emb = jnp.concatenate([emb, jnp.zeros((1, E), jnp.float32)], axis=0)  # unk row
    return dict(
        embedding=emb,
        wih=uni(ks[1], (2, E, 3 * H)),     # [direction, E, gates r|z|n]
        whh=uni(ks[2], (2, H, 3 * H)),
        bih=uni(ks[3], (2, 1, 3 * H)),
        bhh=uni(ks[4], (2, 1, 3 * H)),
        word_weight=jax.random.normal(ks[5], (D, D), jnp.float32) * 0.05,
        word_bias=jax.random.normal(ks[6], (1, D), jnp.float32) * 0.05,
        context_weight=jax.random.normal(ks[7], (D, 1), jnp.float32) * 0.05,
    )


if __name__ == "__main__":
    S, B, H, E, VOCAB = 8, 2, 32, 32, 20
    key = jax.random.PRNGKey(0)
    kp, ki, kh = jax.random.split(key, 3)

    params = init_params(kp, VOCAB, E, H)
    token_ids = jax.random.randint(ki, (S, B), 0, VOCAB + 1, dtype=jnp.int32)
    hidden_state = jax.random.normal(kh, (2, B, H), jnp.float32) * 0.1

    s_i, h_n = jax.jit(word_attn_forward)(token_ids, hidden_state, params)
    jax.block_until_ready((s_i, h_n))

    s_ref, hn_ref = reference_forward(token_ids, hidden_state, params)
    assert s_i.shape == (1, B, 2 * H) and h_n.shape == (2, B, H)
    # bf16 x/xp/hseq intermediates + bf16 MXU operands (f32 accumulation) ->
    # slightly looser tolerance than pure f32.
    np.testing.assert_allclose(np.asarray(s_i), np.asarray(s_ref), atol=2e-2, rtol=2e-2)
    np.testing.assert_allclose(np.asarray(h_n), np.asarray(hn_ref), atol=2e-2, rtol=2e-2)
    print("KERNEL_OK")
</pallas_src>

<mosaic_0001>
module attributes {stable_mosaic.version = 11 : i64} {
  func.func @_in_proj_kernel(%arg0: i32, %arg1: i32, %arg2: memref<16x32xbf16, #tpu.memory_space<vmem>>, %arg3: memref<1x32x96xbf16, #tpu.memory_space<vmem>>, %arg4: memref<1x1x96xf32, #tpu.memory_space<vmem>>, %arg5: memref<1x16x96xbf16, #tpu.memory_space<vmem>>) attributes {dimension_semantics = [#tpu.dimension_semantics<parallel>, #tpu.dimension_semantics<parallel>], iteration_bounds = array<i64: 2, 1>, scalar_prefetch = 0 : i64, scratch_operands = 0 : i64, tpu.core_type = #tpu.core_type<tc>, window_params = [{transform_indices = @transform_0, window_bounds = array<i64: 16, 32>}, {transform_indices = @transform_1, window_bounds = array<i64: 1, 32, 96>}, {transform_indices = @transform_2, window_bounds = array<i64: 1, 1, 96>}, {transform_indices = @transform_3, window_bounds = array<i64: 1, 16, 96>}]} {
    %c0 = arith.constant 0 : index
    %c0_0 = arith.constant 0 : index
    %0 = vector.load %arg2[%c0, %c0_0] : memref<16x32xbf16, #tpu.memory_space<vmem>>, vector<16x32xbf16>
    %c0_1 = arith.constant 0 : index
    %c0_2 = arith.constant 0 : index
    %c0_3 = arith.constant 0 : index
    %1 = vector.load %arg3[%c0_1, %c0_2, %c0_3] : memref<1x32x96xbf16, #tpu.memory_space<vmem>>, vector<1x32x96xbf16>
    %2 = vector.shape_cast %1 : vector<1x32x96xbf16> to vector<32x96xbf16>
    %cst = arith.constant dense<0.000000e+00> : vector<16x96xf32>
    %3 = tpu.matmul %0, %2, %cst {dimension_numbers = #tpu.dot_dimension_numbers<[1], [0], [0], [1], [0, 0, 1, 1], [], []>} : vector<16x32xbf16>, vector<32x96xbf16>, vector<16x96xf32> -> vector<16x96xf32>
    %c0_4 = arith.constant 0 : index
    %c0_5 = arith.constant 0 : index
    %c0_6 = arith.constant 0 : index
    %4 = vector.load %arg4[%c0_4, %c0_5, %c0_6] : memref<1x1x96xf32, #tpu.memory_space<vmem>>, vector<1x1x96xf32>
    %5 = vector.shape_cast %4 : vector<1x1x96xf32> to vector<1x96xf32>
    %6 = vector.broadcast %5 : vector<1x96xf32> to vector<16x96xf32>
    %7 = arith.addf %3, %6 : vector<16x96xf32>
    %8 = arith.truncf %7 : vector<16x96xf32> to vector<16x96xbf16>
    %c0_7 = arith.constant 0 : index
    %c0_8 = arith.constant 0 : index
    %c0_9 = arith.constant 0 : index
    %9 = vector.load %arg5[%c0_7, %c0_8, %c0_9] : memref<1x16x96xbf16, #tpu.memory_space<vmem>>, vector<1x16x96xbf16>
    %10 = vector.shape_cast %9 : vector<1x16x96xbf16> to vector<16x96xbf16>
    %11 = vector.shape_cast %8 : vector<16x96xbf16> to vector<1x16x96xbf16>
    tpu.vector_store %arg5[%c0_7, %c0_8, %c0_9], %11 {strides = array<i32>} : memref<1x16x96xbf16, #tpu.memory_space<vmem>>, vector<1x16x96xbf16>,
    return
  }
  func.func @transform_0(%arg0: i32, %arg1: i32) -> (i32, i32) {
    %c0_i32 = arith.constant 0 : i32
    %c0_i32_0 = arith.constant 0 : i32
    return %arg1, %c0_i32 : i32, i32
  }
  func.func @transform_1(%arg0: i32, %arg1: i32) -> (i32, i32, i32) {
    %c0_i32 = arith.constant 0 : i32
    %c0_i32_0 = arith.constant 0 : i32
    %c0_i32_1 = arith.constant 0 : i32
    return %arg0, %c0_i32, %c0_i32_0 : i32, i32, i32
  }
  func.func @transform_2(%arg0: i32, %arg1: i32) -> (i32, i32, i32) {
    %c0_i32 = arith.constant 0 : i32
    %c0_i32_0 = arith.constant 0 : i32
    %c0_i32_1 = arith.constant 0 : i32
    return %arg0, %c0_i32, %c0_i32_0 : i32, i32, i32
  }
  func.func @transform_3(%arg0: i32, %arg1: i32) -> (i32, i32, i32) {
    %c0_i32 = arith.constant 0 : i32
    %c0_i32_0 = arith.constant 0 : i32
    return %arg0, %arg1, %c0_i32 : i32, i32, i32
  }
}

module attributes {stable_mosaic.version = 11 : i64} {
  func.func @_word_attn_kernel(%arg0: i32, %arg1: memref<16x32xbf16, #tpu.memory_space<vmem>>, %arg2: memref<16x32xbf16, #tpu.memory_space<vmem>>, %arg3: memref<2x32x64xbf16, #tpu.memory_space<vmem>>, %arg4: memref<1x64xf32, #tpu.memory_space<vmem>>, %arg5: memref<1x64xf32, #tpu.memory_space<vmem>>, %arg6: memref<2x64xf32, #tpu.memory_space<vmem>>, %arg7: memref<2x32xf32, #tpu.memory_space<vmem>>, %arg8: memref<2x32xf32, #tpu.memory_space<vmem>>, %arg9: memref<2x1xf32, #tpu.memory_space<vmem>>) attributes {dimension_semantics = [#tpu.dimension_semantics<arbitrary>], iteration_bounds = array<i64: 1>, scalar_prefetch = 0 : i64, scratch_operands = 3 : i64, tpu.core_type = #tpu.core_type<tc>, window_params = [{transform_indices = @transform_0, window_bounds = array<i64: 16, 32>}, {transform_indices = @transform_1, window_bounds = array<i64: 16, 32>}, {pipeline_mode = #tpu.pipeline_mode<synchronous>, transform_indices = @transform_2, window_bounds = array<i64: 2, 32, 64>}, {pipeline_mode = #tpu.pipeline_mode<synchronous>, transform_indices = @transform_3, window_bounds = array<i64: 1, 64>}, {pipeline_mode = #tpu.pipeline_mode<synchronous>, transform_indices = @transform_4, window_bounds = array<i64: 1, 64>}, {pipeline_mode = #tpu.pipeline_mode<synchronous>, transform_indices = @transform_5, window_bounds = array<i64: 2, 64>}]} {
    %c0_i32 = arith.constant 0 : i32
    %0 = arith.cmpi eq, %arg0, %c0_i32 : i32
    %1 = arith.extui %0 : i1 to i32
    %c0_i32_0 = arith.constant 0 : i32
    %2 = arith.cmpi ne, %1, %c0_i32_0 : i32
    scf.if %2 {
      %cst_38 = arith.constant 0.000000e+00 : f32
      %66 = vector.broadcast %cst_38 : f32 to vector<2x32xf32>
      %c0_39 = arith.constant 0 : index
      %c0_40 = arith.constant 0 : index
      %67 = vector.load %arg7[%c0_39, %c0_40] : memref<2x32xf32, #tpu.memory_space<vmem>>, vector<2x32xf32>
      tpu.vector_store %arg7[%c0_39, %c0_40], %66 {strides = array<i32>} : memref<2x32xf32, #tpu.memory_space<vmem>>, vector<2x32xf32>,
      %cst_41 = arith.constant 0.000000e+00 : f32
      %68 = vector.broadcast %cst_41 : f32 to vector<2x32xf32>
      %c0_42 = arith.constant 0 : index
      %c0_43 = arith.constant 0 : index
      %69 = vector.load %arg8[%c0_42, %c0_43] : memref<2x32xf32, #tpu.memory_space<vmem>>, vector<2x32xf32>
      tpu.vector_store %arg8[%c0_42, %c0_43], %68 {strides = array<i32>} : memref<2x32xf32, #tpu.memory_space<vmem>>, vector<2x32xf32>,
      %cst_44 = arith.constant 0.000000e+00 : f32
      %70 = vector.broadcast %cst_44 : f32 to vector<2x1xf32>
      %c0_45 = arith.constant 0 : index
      %c0_46 = arith.constant 0 : index
      %71 = vector.load %arg9[%c0_45, %c0_46] : memref<2x1xf32, #tpu.memory_space<vmem>>, vector<2x1xf32>
      tpu.vector_store %arg9[%c0_45, %c0_46], %70 {strides = array<i32>} : memref<2x1xf32, #tpu.memory_space<vmem>>, vector<2x1xf32>,
    } else {
    }
    %c0 = arith.constant 0 : index
    %c0_1 = arith.constant 0 : index
    %3 = vector.load %arg1[%c0, %c0_1] : memref<16x32xbf16, #tpu.memory_space<vmem>>, vector<16x32xbf16>
    %c0_2 = arith.constant 0 : index
    %c0_3 = arith.constant 0 : index
    %4 = vector.load %arg2[%c0_2, %c0_3] : memref<16x32xbf16, #tpu.memory_space<vmem>>, vector<16x32xbf16>
    %c0_4 = arith.constant 0 : index
    %c0_5 = arith.constant 0 : index
    %c0_6 = arith.constant 0 : index
    %5 = vector.load %arg3[%c0_4, %c0_5, %c0_6] : memref<2x32x64xbf16, #tpu.memory_space<vmem>>, vector<1x32x64xbf16>
    %6 = vector.shape_cast %5 : vector<1x32x64xbf16> to vector<32x64xbf16>
    %cst = arith.constant dense<0.000000e+00> : vector<16x64xf32>
    %7 = tpu.matmul %3, %6, %cst {dimension_numbers = #tpu.dot_dimension_numbers<[1], [0], [0], [1], [0, 0, 1, 1], [], []>} : vector<16x32xbf16>, vector<32x64xbf16>, vector<16x64xf32> -> vector<16x64xf32>
    %c1 = arith.constant 1 : index
    %c0_7 = arith.constant 0 : index
    %c0_8 = arith.constant 0 : index
    %8 = vector.load %arg3[%c1, %c0_7, %c0_8] : memref<2x32x64xbf16, #tpu.memory_space<vmem>>, vector<1x32x64xbf16>
    %9 = vector.shape_cast %8 : vector<1x32x64xbf16> to vector<32x64xbf16>
    %cst_9 = arith.constant dense<0.000000e+00> : vector<16x64xf32>
    %10 = tpu.matmul %4, %9, %cst_9 {dimension_numbers = #tpu.dot_dimension_numbers<[1], [0], [0], [1], [0, 0, 1, 1], [], []>} : vector<16x32xbf16>, vector<32x64xbf16>, vector<16x64xf32> -> vector<16x64xf32>
    %11 = arith.addf %7, %10 : vector<16x64xf32>
    %c0_10 = arith.constant 0 : index
    %c0_11 = arith.constant 0 : index
    %12 = vector.load %arg4[%c0_10, %c0_11] : memref<1x64xf32, #tpu.memory_space<vmem>>, vector<1x64xf32>
    %13 = vector.broadcast %12 : vector<1x64xf32> to vector<16x64xf32>
    %14 = arith.addf %11, %13 : vector<16x64xf32>
    %15 = math.tanh %14 : vector<16x64xf32>
    %c0_12 = arith.constant 0 : index
    %c0_13 = arith.constant 0 : index
    %16 = vector.load %arg5[%c0_12, %c0_13] : memref<1x64xf32, #tpu.memory_space<vmem>>, vector<1x64xf32>
    %17 = vector.broadcast %16 : vector<1x64xf32> to vector<16x64xf32>
    %18 = arith.mulf %15, %17 : vector<16x64xf32>
    %cst_14 = arith.constant dense<0.000000e+00> : vector<16xf32>
    %19 = vector.multi_reduction <add>, %18, %cst_14 [1] : vector<16x64xf32> to vector<16xf32>
    %20 = vector.shape_cast %19 : vector<16xf32> to vector<16x1xf32>
    %21 = math.tanh %20 : vector<16x1xf32>
    %22 = math.exp %21 : vector<16x1xf32>
    %23 = tpu.iota {dimensions = array<i32: 0>} : vector<2x16xi32>
    %24 = tpu.iota {dimensions = array<i32: 1>} : vector<2x16xi32>
    %c2_i32 = arith.constant 2 : i32
    %c0_i32_15 = arith.constant 0 : i32
    %25 = arith.cmpi eq, %c2_i32, %c0_i32_15 : i32
    %c1_i32 = arith.constant 1 : i32
    %26 = arith.select %25, %c1_i32, %c2_i32 : i32
    %27 = vector.broadcast %26 : i32 to vector<2x16xi32>
    %28 = arith.remsi %24, %27 : vector<2x16xi32>
    %c0_i32_16 = arith.constant 0 : i32
    %29 = vector.broadcast %c0_i32_16 : i32 to vector<2x16xi32>
    %30 = arith.cmpi ne, %28, %29 : vector<2x16xi32>
    %c0_i32_17 = arith.constant 0 : i32
    %31 = vector.broadcast %c0_i32_17 : i32 to vector<2x16xi32>
    %32 = arith.cmpi slt, %28, %31 : vector<2x16xi32>
    %c0_i32_18 = arith.constant 0 : i32
    %33 = arith.cmpi slt, %26, %c0_i32_18 : i32
    %34 = vector.broadcast %33 : i1 to vector<2x16xi1>
    %35 = vector.broadcast %34 : vector<2x16xi1> to vector<2x16xi1>
    %36 = arith.xori %32, %35 : vector<2x16xi1>
    %37 = arith.andi %36, %30 : vector<2x16xi1>
    %38 = vector.broadcast %26 : i32 to vector<2x16xi32>
    %39 = arith.addi %28, %38 : vector<2x16xi32>
    %40 = arith.select %37, %39, %28 : vector<2x16xi1>, vector<2x16xi32>
    %41 = arith.cmpi eq, %40, %23 : vector<2x16xi32>
    %cst_19 = arith.constant 1.000000e+00 : f32
    %cst_20 = arith.constant 0.000000e+00 : f32
    %42 = vector.broadcast %cst_19 : f32 to vector<2x16xf32>
    %43 = vector.broadcast %cst_20 : f32 to vector<2x16xf32>
    %44 = arith.select %41, %42, %43 : vector<2x16xi1>, vector<2x16xf32>
    %c0_21 = arith.constant 0 : index
    %c0_22 = arith.constant 0 : index
    %45 = vector.load %arg7[%c0_21, %c0_22] : memref<2x32xf32, #tpu.memory_space<vmem>>, vector<2x32xf32>
    %46 = arith.extf %3 : vector<16x32xbf16> to vector<16x32xf32>
    %47 = vector.broadcast %22 : vector<16x1xf32> to vector<16x32xf32>
    %48 = arith.mulf %47, %46 : vector<16x32xf32>
    %cst_23 = arith.constant dense<0.000000e+00> : vector<2x32xf32>
    %49 = tpu.matmul %44, %48, %cst_23 {dimension_numbers = #tpu.dot_dimension_numbers<[1], [0], [0], [1], [0, 0, 1, 1], [], []>} : vector<2x16xf32>, vector<16x32xf32>, vector<2x32xf32> -> vector<2x32xf32>
    %50 = arith.addf %45, %49 : vector<2x32xf32>
    %c0_24 = arith.constant 0 : index
    %c0_25 = arith.constant 0 : index
    %51 = vector.load %arg7[%c0_24, %c0_25] : memref<2x32xf32, #tpu.memory_space<vmem>>, vector<2x32xf32>
    tpu.vector_store %arg7[%c0_24, %c0_25], %50 {strides = array<i32>} : memref<2x32xf32, #tpu.memory_space<vmem>>, vector<2x32xf32>,
    %c0_26 = arith.constant 0 : index
    %c0_27 = arith.constant 0 : index
    %52 = vector.load %arg8[%c0_26, %c0_27] : memref<2x32xf32, #tpu.memory_space<vmem>>, vector<2x32xf32>
    %53 = arith.extf %4 : vector<16x32xbf16> to vector<16x32xf32>
    %54 = vector.broadcast %22 : vector<16x1xf32> to vector<16x32xf32>
    %55 = arith.mulf %54, %53 : vector<16x32xf32>
    %cst_28 = arith.constant dense<0.000000e+00> : vector<2x32xf32>
    %56 = tpu.matmul %44, %55, %cst_28 {dimension_numbers = #tpu.dot_dimension_numbers<[1], [0], [0], [1], [0, 0, 1, 1], [], []>} : vector<2x16xf32>, vector<16x32xf32>, vector<2x32xf32> -> vector<2x32xf32>
    %57 = arith.addf %52, %56 : vector<2x32xf32>
    %c0_29 = arith.constant 0 : index
    %c0_30 = arith.constant 0 : index
    %58 = vector.load %arg8[%c0_29, %c0_30] : memref<2x32xf32, #tpu.memory_space<vmem>>, vector<2x32xf32>
    tpu.vector_store %arg8[%c0_29, %c0_30], %57 {strides = array<i32>} : memref<2x32xf32, #tpu.memory_space<vmem>>, vector<2x32xf32>,
    %c0_31 = arith.constant 0 : index
    %c0_32 = arith.constant 0 : index
    %59 = vector.load %arg9[%c0_31, %c0_32] : memref<2x1xf32, #tpu.memory_space<vmem>>, vector<2x1xf32>
    %cst_33 = arith.constant dense<0.000000e+00> : vector<2x1xf32>
    %60 = tpu.matmul %44, %22, %cst_33 {dimension_numbers = #tpu.dot_dimension_numbers<[1], [0], [0], [1], [0, 0, 1, 1], [], []>} : vector<2x16xf32>, vector<16x1xf32>, vector<2x1xf32> -> vector<2x1xf32>
    %61 = arith.addf %59, %60 : vector<2x1xf32>
    %c0_34 = arith.constant 0 : index
    %c0_35 = arith.constant 0 : index
    %62 = vector.load %arg9[%c0_34, %c0_35] : memref<2x1xf32, #tpu.memory_space<vmem>>, vector<2x1xf32>
    tpu.vector_store %arg9[%c0_34, %c0_35], %61 {strides = array<i32>} : memref<2x1xf32, #tpu.memory_space<vmem>>, vector<2x1xf32>,
    %c0_i32_36 = arith.constant 0 : i32
    %63 = arith.cmpi eq, %arg0, %c0_i32_36 : i32
    %64 = arith.extui %63 : i1 to i32
    %c0_i32_37 = arith.constant 0 : i32
    %65 = arith.cmpi ne, %64, %c0_i32_37 : i32
    scf.if %65 {
      %c0_38 = arith.constant 0 : index
      %c0_39 = arith.constant 0 : index
      %66 = vector.load %arg9[%c0_38, %c0_39] : memref<2x1xf32, #tpu.memory_space<vmem>>, vector<2x1xf32>
      %cst_40 = arith.constant 1.000000e+00 : f32
      %67 = vector.broadcast %cst_40 : f32 to vector<2x1xf32>
      %68 = arith.divf %67, %66 : vector<2x1xf32>
      %c0_41 = arith.constant 0 : index
      %c0_42 = arith.constant 0 : index
      %69 = vector.load %arg7[%c0_41, %c0_42] : memref<2x32xf32, #tpu.memory_space<vmem>>, vector<2x32xf32>
      %70 = vector.broadcast %68 : vector<2x1xf32> to vector<2x32xf32>
      %71 = arith.mulf %69, %70 : vector<2x32xf32>
      %c0_43 = arith.constant 0 : index
      %c0_44 = arith.constant 0 : index
      %72 = vector.load %arg8[%c0_43, %c0_44] : memref<2x32xf32, #tpu.memory_space<vmem>>, vector<2x32xf32>
      %73 = vector.broadcast %68 : vector<2x1xf32> to vector<2x32xf32>
      %74 = arith.mulf %72, %73 : vector<2x32xf32>
      %75 = tpu.concatenate %71, %74 in 1 : vector<2x32xf32>, vector<2x32xf32> -> vector<2x64xf32>
      %c0_45 = arith.constant 0 : index
      %c0_46 = arith.constant 0 : index
      %76 = vector.load %arg6[%c0_45, %c0_46] : memref<2x64xf32, #tpu.memory_space<vmem>>, vector<2x64xf32>
      tpu.vector_store %arg6[%c0_45, %c0_46], %75 {strides = array<i32>} : memref<2x64xf32, #tpu.memory_space<vmem>>, vector<2x64xf32>,
    } else {
    }
    return
  }
  func.func @transform_0(%arg0: i32) -> (i32, i32) {
    %c0_i32 = arith.constant 0 : i32
    %c0_i32_0 = arith.constant 0 : i32
    return %arg0, %c0_i32 : i32, i32
  }
  func.func @transform_1(%arg0: i32) -> (i32, i32) {
    %c0_i32 = arith.constant 0 : i32
    %c0_i32_0 = arith.constant 0 : i32
    return %arg0, %c0_i32 : i32, i32
  }
  func.func @transform_2(%arg0: i32) -> (i32, i32, i32) {
    %c0_i32 = arith.constant 0 : i32
    %c0_i32_0 = arith.constant 0 : i32
    %c0_i32_1 = arith.constant 0 : i32
    %c0_i32_2 = arith.constant 0 : i32
    return %c0_i32, %c0_i32_0, %c0_i32_1 : i32, i32, i32
  }
  func.func @transform_3(%arg0: i32) -> (i32, i32) {
    %c0_i32 = arith.constant 0 : i32
    %c0_i32_0 = arith.constant 0 : i32
    %c0_i32_1 = arith.constant 0 : i32
    return %c0_i32, %c0_i32_0 : i32, i32
  }
  func.func @transform_4(%arg0: i32) -> (i32, i32) {
    %c0_i32 = arith.constant 0 : i32
    %c0_i32_0 = arith.constant 0 : i32
    %c0_i32_1 = arith.constant 0 : i32
    return %c0_i32, %c0_i32_0 : i32, i32
  }
  func.func @transform_5(%arg0: i32) -> (i32, i32) {
    %c0_i32 = arith.constant 0 : i32
    %c0_i32_0 = arith.constant 0 : i32
    %c0_i32_1 = arith.constant 0 : i32
    return %c0_i32, %c0_i32_0 : i32, i32
  }
}

module attributes {stable_mosaic.version = 11 : i64} {
  func.func @_bigru_kernel(%arg0: i32, %arg1: memref<1x8x2x96xbf16, #tpu.memory_space<vmem>>, %arg2: memref<1x8x2x96xbf16, #tpu.memory_space<vmem>>, %arg3: memref<2x32x96xbf16, #tpu.memory_space<vmem>>, %arg4: memref<2x1x96xf32, #tpu.memory_space<vmem>>, %arg5: memref<2x2x32xf32, #tpu.memory_space<vmem>>, %arg6: memref<8x2x32xbf16, #tpu.memory_space<vmem>>, %arg7: memref<8x2x32xbf16, #tpu.memory_space<vmem>>, %arg8: memref<2x2x32xf32, #tpu.memory_space<vmem>>, %arg9: memref<2x32xf32, #tpu.memory_space<vmem>>, %arg10: memref<2x32xf32, #tpu.memory_space<vmem>>) attributes {dimension_semantics = [#tpu.dimension_semantics<arbitrary>], iteration_bounds = array<i64: 1>, scalar_prefetch = 0 : i64, scratch_operands = 2 : i64, tpu.core_type = #tpu.core_type<tc>, window_params = [{transform_indices = @transform_0, window_bounds = array<i64: 1, 8, 2, 96>}, {transform_indices = @transform_1, window_bounds = array<i64: 1, 8, 2, 96>}, {pipeline_mode = #tpu.pipeline_mode<synchronous>, transform_indices = @transform_2, window_bounds = array<i64: 2, 32, 96>}, {pipeline_mode = #tpu.pipeline_mode<synchronous>, transform_indices = @transform_3, window_bounds = array<i64: 2, 1, 96>}, {pipeline_mode = #tpu.pipeline_mode<synchronous>, transform_indices = @transform_4, window_bounds = array<i64: 2, 2, 32>}, {transform_indices = @transform_5, window_bounds = array<i64: 8, 2, 32>}, {transform_indices = @transform_6, window_bounds = array<i64: 8, 2, 32>}, {pipeline_mode = #tpu.pipeline_mode<synchronous>, transform_indices = @transform_7, window_bounds = array<i64: 2, 2, 32>}]} {
    %c0_i32 = arith.constant 0 : i32
    %0 = arith.cmpi eq, %arg0, %c0_i32 : i32
    %1 = arith.extui %0 : i1 to i32
    %c0_i32_0 = arith.constant 0 : i32
    %2 = arith.cmpi ne, %1, %c0_i32_0 : i32
    scf.if %2 {
      %c0_157 = arith.constant 0 : index
      %c0_158 = arith.constant 0 : index
      %c0_159 = arith.constant 0 : index
      %554 = vector.load %arg5[%c0_157, %c0_158, %c0_159] : memref<2x2x32xf32, #tpu.memory_space<vmem>>, vector<1x2x32xf32>
      %555 = vector.shape_cast %554 : vector<1x2x32xf32> to vector<2x32xf32>
      %c0_160 = arith.constant 0 : index
      %c0_161 = arith.constant 0 : index
      %556 = vector.load %arg9[%c0_160, %c0_161] : memref<2x32xf32, #tpu.memory_space<vmem>>, vector<2x32xf32>
      tpu.vector_store %arg9[%c0_160, %c0_161], %555 {strides = array<i32>} : memref<2x32xf32, #tpu.memory_space<vmem>>, vector<2x32xf32>,
      %c1_162 = arith.constant 1 : index
      %c0_163 = arith.constant 0 : index
      %c0_164 = arith.constant 0 : index
      %557 = vector.load %arg5[%c1_162, %c0_163, %c0_164] : memref<2x2x32xf32, #tpu.memory_space<vmem>>, vector<1x2x32xf32>
      %558 = vector.shape_cast %557 : vector<1x2x32xf32> to vector<2x32xf32>
      %c0_165 = arith.constant 0 : index
      %c0_166 = arith.constant 0 : index
      %559 = vector.load %arg10[%c0_165, %c0_166] : memref<2x32xf32, #tpu.memory_space<vmem>>, vector<2x32xf32>
      tpu.vector_store %arg10[%c0_165, %c0_166], %558 {strides = array<i32>} : memref<2x32xf32, #tpu.memory_space<vmem>>, vector<2x32xf32>,
    } else {
    }
    %c0 = arith.constant 0 : index
    %c0_1 = arith.constant 0 : index
    %c0_2 = arith.constant 0 : index
    %3 = vector.load %arg3[%c0, %c0_1, %c0_2] : memref<2x32x96xbf16, #tpu.memory_space<vmem>>, vector<1x32x96xbf16>
    %4 = vector.shape_cast %3 : vector<1x32x96xbf16> to vector<32x96xbf16>
    %c1 = arith.constant 1 : index
    %c0_3 = arith.constant 0 : index
    %c0_4 = arith.constant 0 : index
    %5 = vector.load %arg3[%c1, %c0_3, %c0_4] : memref<2x32x96xbf16, #tpu.memory_space<vmem>>, vector<1x32x96xbf16>
    %6 = vector.shape_cast %5 : vector<1x32x96xbf16> to vector<32x96xbf16>
    %c0_5 = arith.constant 0 : index
    %c0_6 = arith.constant 0 : index
    %c0_7 = arith.constant 0 : index
    %7 = vector.load %arg4[%c0_5, %c0_6, %c0_7] : memref<2x1x96xf32, #tpu.memory_space<vmem>>, vector<1x1x96xf32>
    %8 = vector.shape_cast %7 : vector<1x1x96xf32> to vector<1x96xf32>
    %c1_8 = arith.constant 1 : index
    %c0_9 = arith.constant 0 : index
    %c0_10 = arith.constant 0 : index
    %9 = vector.load %arg4[%c1_8, %c0_9, %c0_10] : memref<2x1x96xf32, #tpu.memory_space<vmem>>, vector<1x1x96xf32>
    %10 = vector.shape_cast %9 : vector<1x1x96xf32> to vector<1x96xf32>
    %c0_11 = arith.constant 0 : index
    %c0_12 = arith.constant 0 : index
    %11 = vector.load %arg9[%c0_11, %c0_12] : memref<2x32xf32, #tpu.memory_space<vmem>>, vector<2x32xf32>
    %c0_13 = arith.constant 0 : index
    %c0_14 = arith.constant 0 : index
    %12 = vector.load %arg10[%c0_13, %c0_14] : memref<2x32xf32, #tpu.memory_space<vmem>>, vector<2x32xf32>
    %c0_i32_15 = arith.constant 0 : i32
    %c7_i32 = arith.constant 7 : i32
    %13 = arith.subi %c7_i32, %c0_i32_15 : i32
    %c0_16 = arith.constant 0 : index
    %14 = arith.index_cast %c0_i32_15 : i32 to index
    %c0_17 = arith.constant 0 : index
    %c0_18 = arith.constant 0 : index
    %15 = vector.load %arg1[%c0_16, %14, %c0_17, %c0_18] : memref<1x8x2x96xbf16, #tpu.memory_space<vmem>>, vector<1x1x2x96xbf16>
    %16 = vector.shape_cast %15 : vector<1x1x2x96xbf16> to vector<2x96xbf16>
    %17 = arith.extf %16 : vector<2x96xbf16> to vector<2x96xf32>
    %18 = arith.truncf %11 : vector<2x32xf32> to vector<2x32xbf16>
    %cst = arith.constant dense<0.000000e+00> : vector<2x96xf32>
    %19 = tpu.matmul %18, %4, %cst {dimension_numbers = #tpu.dot_dimension_numbers<[1], [0], [0], [1], [0, 0, 1, 1], [], []>} : vector<2x32xbf16>, vector<32x96xbf16>, vector<2x96xf32> -> vector<2x96xf32>
    %20 = vector.broadcast %8 : vector<1x96xf32> to vector<2x96xf32>
    %21 = arith.addf %19, %20 : vector<2x96xf32>
    %22 = vector.extract_strided_slice %17 {offsets = [0, 0], sizes = [2, 64], strides = [1, 1]} : vector<2x96xf32> to vector<2x64xf32>
    %23 = vector.extract_strided_slice %21 {offsets = [0, 0], sizes = [2, 64], strides = [1, 1]} : vector<2x96xf32> to vector<2x64xf32>
    %24 = arith.addf %22, %23 : vector<2x64xf32>
    %25 = arith.negf %24 : vector<2x64xf32>
    %26 = math.exp %25 : vector<2x64xf32>
    %cst_19 = arith.constant 1.000000e+00 : f32
    %27 = vector.broadcast %cst_19 : f32 to vector<2x64xf32>
    %28 = arith.addf %27, %26 : vector<2x64xf32>
    %29 = arith.divf %27, %28 : vector<2x64xf32>
    %30 = vector.extract_strided_slice %29 {offsets = [0, 0], sizes = [2, 32], strides = [1, 1]} : vector<2x64xf32> to vector<2x32xf32>
    %31 = vector.extract_strided_slice %29 {offsets = [0, 32], sizes = [2, 32], strides = [1, 1]} : vector<2x64xf32> to vector<2x32xf32>
    %32 = vector.extract_strided_slice %17 {offsets = [0, 64], sizes = [2, 32], strides = [1, 1]} : vector<2x96xf32> to vector<2x32xf32>
    %33 = vector.extract_strided_slice %21 {offsets = [0, 64], sizes = [2, 32], strides = [1, 1]} : vector<2x96xf32> to vector<2x32xf32>
    %34 = arith.mulf %30, %33 : vector<2x32xf32>
    %35 = arith.addf %32, %34 : vector<2x32xf32>
    %36 = math.tanh %35 : vector<2x32xf32>
    %cst_20 = arith.constant 1.000000e+00 : f32
    %37 = vector.broadcast %cst_20 : f32 to vector<2x32xf32>
    %38 = arith.subf %37, %31 : vector<2x32xf32>
    %39 = arith.mulf %38, %36 : vector<2x32xf32>
    %40 = arith.mulf %31, %11 : vector<2x32xf32>
    %41 = arith.addf %39, %40 : vector<2x32xf32>
    %c0_21 = arith.constant 0 : index
    %42 = arith.index_cast %13 : i32 to index
    %c0_22 = arith.constant 0 : index
    %c0_23 = arith.constant 0 : index
    %43 = vector.load %arg2[%c0_21, %42, %c0_22, %c0_23] : memref<1x8x2x96xbf16, #tpu.memory_space<vmem>>, vector<1x1x2x96xbf16>
    %44 = vector.shape_cast %43 : vector<1x1x2x96xbf16> to vector<2x96xbf16>
    %45 = arith.extf %44 : vector<2x96xbf16> to vector<2x96xf32>
    %46 = arith.truncf %12 : vector<2x32xf32> to vector<2x32xbf16>
    %cst_24 = arith.constant dense<0.000000e+00> : vector<2x96xf32>
    %47 = tpu.matmul %46, %6, %cst_24 {dimension_numbers = #tpu.dot_dimension_numbers<[1], [0], [0], [1], [0, 0, 1, 1], [], []>} : vector<2x32xbf16>, vector<32x96xbf16>, vector<2x96xf32> -> vector<2x96xf32>
    %48 = vector.broadcast %10 : vector<1x96xf32> to vector<2x96xf32>
    %49 = arith.addf %47, %48 : vector<2x96xf32>
    %50 = vector.extract_strided_slice %45 {offsets = [0, 0], sizes = [2, 64], strides = [1, 1]} : vector<2x96xf32> to vector<2x64xf32>
    %51 = vector.extract_strided_slice %49 {offsets = [0, 0], sizes = [2, 64], strides = [1, 1]} : vector<2x96xf32> to vector<2x64xf32>
    %52 = arith.addf %50, %51 : vector<2x64xf32>
    %53 = arith.negf %52 : vector<2x64xf32>
    %54 = math.exp %53 : vector<2x64xf32>
    %cst_25 = arith.constant 1.000000e+00 : f32
    %55 = vector.broadcast %cst_25 : f32 to vector<2x64xf32>
    %56 = arith.addf %55, %54 : vector<2x64xf32>
    %57 = arith.divf %55, %56 : vector<2x64xf32>
    %58 = vector.extract_strided_slice %57 {offsets = [0, 0], sizes = [2, 32], strides = [1, 1]} : vector<2x64xf32> to vector<2x32xf32>
    %59 = vector.extract_strided_slice %57 {offsets = [0, 32], sizes = [2, 32], strides = [1, 1]} : vector<2x64xf32> to vector<2x32xf32>
    %60 = vector.extract_strided_slice %45 {offsets = [0, 64], sizes = [2, 32], strides = [1, 1]} : vector<2x96xf32> to vector<2x32xf32>
    %61 = vector.extract_strided_slice %49 {offsets = [0, 64], sizes = [2, 32], strides = [1, 1]} : vector<2x96xf32> to vector<2x32xf32>
    %62 = arith.mulf %58, %61 : vector<2x32xf32>
    %63 = arith.addf %60, %62 : vector<2x32xf32>
    %64 = math.tanh %63 : vector<2x32xf32>
    %cst_26 = arith.constant 1.000000e+00 : f32
    %65 = vector.broadcast %cst_26 : f32 to vector<2x32xf32>
    %66 = arith.subf %65, %59 : vector<2x32xf32>
    %67 = arith.mulf %66, %64 : vector<2x32xf32>
    %68 = arith.mulf %59, %12 : vector<2x32xf32>
    %69 = arith.addf %67, %68 : vector<2x32xf32>
    %70 = arith.truncf %41 : vector<2x32xf32> to vector<2x32xbf16>
    %71 = arith.index_cast %c0_i32_15 : i32 to index
    %c0_27 = arith.constant 0 : index
    %c0_28 = arith.constant 0 : index
    %72 = vector.load %arg6[%71, %c0_27, %c0_28] : memref<8x2x32xbf16, #tpu.memory_space<vmem>>, vector<1x2x32xbf16>
    %73 = vector.shape_cast %72 : vector<1x2x32xbf16> to vector<2x32xbf16>
    %74 = vector.shape_cast %70 : vector<2x32xbf16> to vector<1x2x32xbf16>
    tpu.vector_store %arg6[%71, %c0_27, %c0_28], %74 {strides = array<i32>} : memref<8x2x32xbf16, #tpu.memory_space<vmem>>, vector<1x2x32xbf16>,
    %75 = arith.truncf %69 : vector<2x32xf32> to vector<2x32xbf16>
    %76 = arith.index_cast %13 : i32 to index
    %c0_29 = arith.constant 0 : index
    %c0_30 = arith.constant 0 : index
    %77 = vector.load %arg7[%76, %c0_29, %c0_30] : memref<8x2x32xbf16, #tpu.memory_space<vmem>>, vector<1x2x32xbf16>
    %78 = vector.shape_cast %77 : vector<1x2x32xbf16> to vector<2x32xbf16>
    %79 = vector.shape_cast %75 : vector<2x32xbf16> to vector<1x2x32xbf16>
    tpu.vector_store %arg7[%76, %c0_29, %c0_30], %79 {strides = array<i32>} : memref<8x2x32xbf16, #tpu.memory_space<vmem>>, vector<1x2x32xbf16>,
    %c1_i32 = arith.constant 1 : i32
    %c7_i32_31 = arith.constant 7 : i32
    %80 = arith.subi %c7_i32_31, %c1_i32 : i32
    %c0_32 = arith.constant 0 : index
    %81 = arith.index_cast %c1_i32 : i32 to index
    %c0_33 = arith.constant 0 : index
    %c0_34 = arith.constant 0 : index
    %82 = vector.load %arg1[%c0_32, %81, %c0_33, %c0_34] : memref<1x8x2x96xbf16, #tpu.memory_space<vmem>>, vector<1x1x2x96xbf16>
    %83 = vector.shape_cast %82 : vector<1x1x2x96xbf16> to vector<2x96xbf16>
    %84 = arith.extf %83 : vector<2x96xbf16> to vector<2x96xf32>
    %85 = arith.truncf %41 : vector<2x32xf32> to vector<2x32xbf16>
    %cst_35 = arith.constant dense<0.000000e+00> : vector<2x96xf32>
    %86 = tpu.matmul %85, %4, %cst_35 {dimension_numbers = #tpu.dot_dimension_numbers<[1], [0], [0], [1], [0, 0, 1, 1], [], []>} : vector<2x32xbf16>, vector<32x96xbf16>, vector<2x96xf32> -> vector<2x96xf32>
    %87 = vector.broadcast %8 : vector<1x96xf32> to vector<2x96xf32>
    %88 = arith.addf %86, %87 : vector<2x96xf32>
    %89 = vector.extract_strided_slice %84 {offsets = [0, 0], sizes = [2, 64], strides = [1, 1]} : vector<2x96xf32> to vector<2x64xf32>
    %90 = vector.extract_strided_slice %88 {offsets = [0, 0], sizes = [2, 64], strides = [1, 1]} : vector<2x96xf32> to vector<2x64xf32>
    %91 = arith.addf %89, %90 : vector<2x64xf32>
    %92 = arith.negf %91 : vector<2x64xf32>
    %93 = math.exp %92 : vector<2x64xf32>
    %cst_36 = arith.constant 1.000000e+00 : f32
    %94 = vector.broadcast %cst_36 : f32 to vector<2x64xf32>
    %95 = arith.addf %94, %93 : vector<2x64xf32>
    %96 = arith.divf %94, %95 : vector<2x64xf32>
    %97 = vector.extract_strided_slice %96 {offsets = [0, 0], sizes = [2, 32], strides = [1, 1]} : vector<2x64xf32> to vector<2x32xf32>
    %98 = vector.extract_strided_slice %96 {offsets = [0, 32], sizes = [2, 32], strides = [1, 1]} : vector<2x64xf32> to vector<2x32xf32>
    %99 = vector.extract_strided_slice %84 {offsets = [0, 64], sizes = [2, 32], strides = [1, 1]} : vector<2x96xf32> to vector<2x32xf32>
    %100 = vector.extract_strided_slice %88 {offsets = [0, 64], sizes = [2, 32], strides = [1, 1]} : vector<2x96xf32> to vector<2x32xf32>
    %101 = arith.mulf %97, %100 : vector<2x32xf32>
    %102 = arith.addf %99, %101 : vector<2x32xf32>
    %103 = math.tanh %102 : vector<2x32xf32>
    %cst_37 = arith.constant 1.000000e+00 : f32
    %104 = vector.broadcast %cst_37 : f32 to vector<2x32xf32>
    %105 = arith.subf %104, %98 : vector<2x32xf32>
    %106 = arith.mulf %105, %103 : vector<2x32xf32>
    %107 = arith.mulf %98, %41 : vector<2x32xf32>
    %108 = arith.addf %106, %107 : vector<2x32xf32>
    %c0_38 = arith.constant 0 : index
    %109 = arith.index_cast %80 : i32 to index
    %c0_39 = arith.constant 0 : index
    %c0_40 = arith.constant 0 : index
    %110 = vector.load %arg2[%c0_38, %109, %c0_39, %c0_40] : memref<1x8x2x96xbf16, #tpu.memory_space<vmem>>, vector<1x1x2x96xbf16>
    %111 = vector.shape_cast %110 : vector<1x1x2x96xbf16> to vector<2x96xbf16>
    %112 = arith.extf %111 : vector<2x96xbf16> to vector<2x96xf32>
    %113 = arith.truncf %69 : vector<2x32xf32> to vector<2x32xbf16>
    %cst_41 = arith.constant dense<0.000000e+00> : vector<2x96xf32>
    %114 = tpu.matmul %113, %6, %cst_41 {dimension_numbers = #tpu.dot_dimension_numbers<[1], [0], [0], [1], [0, 0, 1, 1], [], []>} : vector<2x32xbf16>, vector<32x96xbf16>, vector<2x96xf32> -> vector<2x96xf32>
    %115 = vector.broadcast %10 : vector<1x96xf32> to vector<2x96xf32>
    %116 = arith.addf %114, %115 : vector<2x96xf32>
    %117 = vector.extract_strided_slice %112 {offsets = [0, 0], sizes = [2, 64], strides = [1, 1]} : vector<2x96xf32> to vector<2x64xf32>
    %118 = vector.extract_strided_slice %116 {offsets = [0, 0], sizes = [2, 64], strides = [1, 1]} : vector<2x96xf32> to vector<2x64xf32>
    %119 = arith.addf %117, %118 : vector<2x64xf32>
    %120 = arith.negf %119 : vector<2x64xf32>
    %121 = math.exp %120 : vector<2x64xf32>
    %cst_42 = arith.constant 1.000000e+00 : f32
    %122 = vector.broadcast %cst_42 : f32 to vector<2x64xf32>
    %123 = arith.addf %122, %121 : vector<2x64xf32>
    %124 = arith.divf %122, %123 : vector<2x64xf32>
    %125 = vector.extract_strided_slice %124 {offsets = [0, 0], sizes = [2, 32], strides = [1, 1]} : vector<2x64xf32> to vector<2x32xf32>
    %126 = vector.extract_strided_slice %124 {offsets = [0, 32], sizes = [2, 32], strides = [1, 1]} : vector<2x64xf32> to vector<2x32xf32>
    %127 = vector.extract_strided_slice %112 {offsets = [0, 64], sizes = [2, 32], strides = [1, 1]} : vector<2x96xf32> to vector<2x32xf32>
    %128 = vector.extract_strided_slice %116 {offsets = [0, 64], sizes = [2, 32], strides = [1, 1]} : vector<2x96xf32> to vector<2x32xf32>
    %129 = arith.mulf %125, %128 : vector<2x32xf32>
    %130 = arith.addf %127, %129 : vector<2x32xf32>
    %131 = math.tanh %130 : vector<2x32xf32>
    %cst_43 = arith.constant 1.000000e+00 : f32
    %132 = vector.broadcast %cst_43 : f32 to vector<2x32xf32>
    %133 = arith.subf %132, %126 : vector<2x32xf32>
    %134 = arith.mulf %133, %131 : vector<2x32xf32>
    %135 = arith.mulf %126, %69 : vector<2x32xf32>
    %136 = arith.addf %134, %135 : vector<2x32xf32>
    %137 = arith.truncf %108 : vector<2x32xf32> to vector<2x32xbf16>
    %138 = arith.index_cast %c1_i32 : i32 to index
    %c0_44 = arith.constant 0 : index
    %c0_45 = arith.constant 0 : index
    %139 = vector.load %arg6[%138, %c0_44, %c0_45] : memref<8x2x32xbf16, #tpu.memory_space<vmem>>, vector<1x2x32xbf16>
    %140 = vector.shape_cast %139 : vector<1x2x32xbf16> to vector<2x32xbf16>
    %141 = vector.shape_cast %137 : vector<2x32xbf16> to vector<1x2x32xbf16>
    tpu.vector_store %arg6[%138, %c0_44, %c0_45], %141 {strides = array<i32>} : memref<8x2x32xbf16, #tpu.memory_space<vmem>>, vector<1x2x32xbf16>,
    %142 = arith.truncf %136 : vector<2x32xf32> to vector<2x32xbf16>
    %143 = arith.index_cast %80 : i32 to index
    %c0_46 = arith.constant 0 : index
    %c0_47 = arith.constant 0 : index
    %144 = vector.load %arg7[%143, %c0_46, %c0_47] : memref<8x2x32xbf16, #tpu.memory_space<vmem>>, vector<1x2x32xbf16>
    %145 = vector.shape_cast %144 : vector<1x2x32xbf16> to vector<2x32xbf16>
    %146 = vector.shape_cast %142 : vector<2x32xbf16> to vector<1x2x32xbf16>
    tpu.vector_store %arg7[%143, %c0_46, %c0_47], %146 {strides = array<i32>} : memref<8x2x32xbf16, #tpu.memory_space<vmem>>, vector<1x2x32xbf16>,
    %c2_i32 = arith.constant 2 : i32
    %c7_i32_48 = arith.constant 7 : i32
    %147 = arith.subi %c7_i32_48, %c2_i32 : i32
    %c0_49 = arith.constant 0 : index
    %148 = arith.index_cast %c2_i32 : i32 to index
    %c0_50 = arith.constant 0 : index
    %c0_51 = arith.constant 0 : index
    %149 = vector.load %arg1[%c0_49, %148, %c0_50, %c0_51] : memref<1x8x2x96xbf16, #tpu.memory_space<vmem>>, vector<1x1x2x96xbf16>
    %150 = vector.shape_cast %149 : vector<1x1x2x96xbf16> to vector<2x96xbf16>
    %151 = arith.extf %150 : vector<2x96xbf16> to vector<2x96xf32>
    %152 = arith.truncf %108 : vector<2x32xf32> to vector<2x32xbf16>
    %cst_52 = arith.constant dense<0.000000e+00> : vector<2x96xf32>
    %153 = tpu.matmul %152, %4, %cst_52 {dimension_numbers = #tpu.dot_dimension_numbers<[1], [0], [0], [1], [0, 0, 1, 1], [], []>} : vector<2x32xbf16>, vector<32x96xbf16>, vector<2x96xf32> -> vector<2x96xf32>
    %154 = vector.broadcast %8 : vector<1x96xf32> to vector<2x96xf32>
    %155 = arith.addf %153, %154 : vector<2x96xf32>
    %156 = vector.extract_strided_slice %151 {offsets = [0, 0], sizes = [2, 64], strides = [1, 1]} : vector<2x96xf32> to vector<2x64xf32>
    %157 = vector.extract_strided_slice %155 {offsets = [0, 0], sizes = [2, 64], strides = [1, 1]} : vector<2x96xf32> to vector<2x64xf32>
    %158 = arith.addf %156, %157 : vector<2x64xf32>
    %159 = arith.negf %158 : vector<2x64xf32>
    %160 = math.exp %159 : vector<2x64xf32>
    %cst_53 = arith.constant 1.000000e+00 : f32
    %161 = vector.broadcast %cst_53 : f32 to vector<2x64xf32>
    %162 = arith.addf %161, %160 : vector<2x64xf32>
    %163 = arith.divf %161, %162 : vector<2x64xf32>
    %164 = vector.extract_strided_slice %163 {offsets = [0, 0], sizes = [2, 32], strides = [1, 1]} : vector<2x64xf32> to vector<2x32xf32>
    %165 = vector.extract_strided_slice %163 {offsets = [0, 32], sizes = [2, 32], strides = [1, 1]} : vector<2x64xf32> to vector<2x32xf32>
    %166 = vector.extract_strided_slice %151 {offsets = [0, 64], sizes = [2, 32], strides = [1, 1]} : vector<2x96xf32> to vector<2x32xf32>
    %167 = vector.extract_strided_slice %155 {offsets = [0, 64], sizes = [2, 32], strides = [1, 1]} : vector<2x96xf32> to vector<2x32xf32>
    %168 = arith.mulf %164, %167 : vector<2x32xf32>
    %169 = arith.addf %166, %168 : vector<2x32xf32>
    %170 = math.tanh %169 : vector<2x32xf32>
    %cst_54 = arith.constant 1.000000e+00 : f32
    %171 = vector.broadcast %cst_54 : f32 to vector<2x32xf32>
    %172 = arith.subf %171, %165 : vector<2x32xf32>
    %173 = arith.mulf %172, %170 : vector<2x32xf32>
    %174 = arith.mulf %165, %108 : vector<2x32xf32>
    %175 = arith.addf %173, %174 : vector<2x32xf32>
    %c0_55 = arith.constant 0 : index
    %176 = arith.index_cast %147 : i32 to index
    %c0_56 = arith.constant 0 : index
    %c0_57 = arith.constant 0 : index
    %177 = vector.load %arg2[%c0_55, %176, %c0_56, %c0_57] : memref<1x8x2x96xbf16, #tpu.memory_space<vmem>>, vector<1x1x2x96xbf16>
    %178 = vector.shape_cast %177 : vector<1x1x2x96xbf16> to vector<2x96xbf16>
    %179 = arith.extf %178 : vector<2x96xbf16> to vector<2x96xf32>
    %180 = arith.truncf %136 : vector<2x32xf32> to vector<2x32xbf16>
    %cst_58 = arith.constant dense<0.000000e+00> : vector<2x96xf32>
    %181 = tpu.matmul %180, %6, %cst_58 {dimension_numbers = #tpu.dot_dimension_numbers<[1], [0], [0], [1], [0, 0, 1, 1], [], []>} : vector<2x32xbf16>, vector<32x96xbf16>, vector<2x96xf32> -> vector<2x96xf32>
    %182 = vector.broadcast %10 : vector<1x96xf32> to vector<2x96xf32>
    %183 = arith.addf %181, %182 : vector<2x96xf32>
    %184 = vector.extract_strided_slice %179 {offsets = [0, 0], sizes = [2, 64], strides = [1, 1]} : vector<2x96xf32> to vector<2x64xf32>
    %185 = vector.extract_strided_slice %183 {offsets = [0, 0], sizes = [2, 64], strides = [1, 1]} : vector<2x96xf32> to vector<2x64xf32>
    %186 = arith.addf %184, %185 : vector<2x64xf32>
    %187 = arith.negf %186 : vector<2x64xf32>
    %188 = math.exp %187 : vector<2x64xf32>
    %cst_59 = arith.constant 1.000000e+00 : f32
    %189 = vector.broadcast %cst_59 : f32 to vector<2x64xf32>
    %190 = arith.addf %189, %188 : vector<2x64xf32>
    %191 = arith.divf %189, %190 : vector<2x64xf32>
    %192 = vector.extract_strided_slice %191 {offsets = [0, 0], sizes = [2, 32], strides = [1, 1]} : vector<2x64xf32> to vector<2x32xf32>
    %193 = vector.extract_strided_slice %191 {offsets = [0, 32], sizes = [2, 32], strides = [1, 1]} : vector<2x64xf32> to vector<2x32xf32>
    %194 = vector.extract_strided_slice %179 {offsets = [0, 64], sizes = [2, 32], strides = [1, 1]} : vector<2x96xf32> to vector<2x32xf32>
    %195 = vector.extract_strided_slice %183 {offsets = [0, 64], sizes = [2, 32], strides = [1, 1]} : vector<2x96xf32> to vector<2x32xf32>
    %196 = arith.mulf %192, %195 : vector<2x32xf32>
    %197 = arith.addf %194, %196 : vector<2x32xf32>
    %198 = math.tanh %197 : vector<2x32xf32>
    %cst_60 = arith.constant 1.000000e+00 : f32
    %199 = vector.broadcast %cst_60 : f32 to vector<2x32xf32>
    %200 = arith.subf %199, %193 : vector<2x32xf32>
    %201 = arith.mulf %200, %198 : vector<2x32xf32>
    %202 = arith.mulf %193, %136 : vector<2x32xf32>
    %203 = arith.addf %201, %202 : vector<2x32xf32>
    %204 = arith.truncf %175 : vector<2x32xf32> to vector<2x32xbf16>
    %205 = arith.index_cast %c2_i32 : i32 to index
    %c0_61 = arith.constant 0 : index
    %c0_62 = arith.constant 0 : index
    %206 = vector.load %arg6[%205, %c0_61, %c0_62] : memref<8x2x32xbf16, #tpu.memory_space<vmem>>, vector<1x2x32xbf16>
    %207 = vector.shape_cast %206 : vector<1x2x32xbf16> to vector<2x32xbf16>
    %208 = vector.shape_cast %204 : vector<2x32xbf16> to vector<1x2x32xbf16>
    tpu.vector_store %arg6[%205, %c0_61, %c0_62], %208 {strides = array<i32>} : memref<8x2x32xbf16, #tpu.memory_space<vmem>>, vector<1x2x32xbf16>,
    %209 = arith.truncf %203 : vector<2x32xf32> to vector<2x32xbf16>
    %210 = arith.index_cast %147 : i32 to index
    %c0_63 = arith.constant 0 : index
    %c0_64 = arith.constant 0 : index
    %211 = vector.load %arg7[%210, %c0_63, %c0_64] : memref<8x2x32xbf16, #tpu.memory_space<vmem>>, vector<1x2x32xbf16>
    %212 = vector.shape_cast %211 : vector<1x2x32xbf16> to vector<2x32xbf16>
    %213 = vector.shape_cast %209 : vector<2x32xbf16> to vector<1x2x32xbf16>
    tpu.vector_store %arg7[%210, %c0_63, %c0_64], %213 {strides = array<i32>} : memref<8x2x32xbf16, #tpu.memory_space<vmem>>, vector<1x2x32xbf16>,
    %c3_i32 = arith.constant 3 : i32
    %c7_i32_65 = arith.constant 7 : i32
    %214 = arith.subi %c7_i32_65, %c3_i32 : i32
    %c0_66 = arith.constant 0 : index
    %215 = arith.index_cast %c3_i32 : i32 to index
    %c0_67 = arith.constant 0 : index
    %c0_68 = arith.constant 0 : index
    %216 = vector.load %arg1[%c0_66, %215, %c0_67, %c0_68] : memref<1x8x2x96xbf16, #tpu.memory_space<vmem>>, vector<1x1x2x96xbf16>
    %217 = vector.shape_cast %216 : vector<1x1x2x96xbf16> to vector<2x96xbf16>
    %218 = arith.extf %217 : vector<2x96xbf16> to vector<2x96xf32>
    %219 = arith.truncf %175 : vector<2x32xf32> to vector<2x32xbf16>
    %cst_69 = arith.constant dense<0.000000e+00> : vector<2x96xf32>
    %220 = tpu.matmul %219, %4, %cst_69 {dimension_numbers = #tpu.dot_dimension_numbers<[1], [0], [0], [1], [0, 0, 1, 1], [], []>} : vector<2x32xbf16>, vector<32x96xbf16>, vector<2x96xf32> -> vector<2x96xf32>
    %221 = vector.broadcast %8 : vector<1x96xf32> to vector<2x96xf32>
    %222 = arith.addf %220, %221 : vector<2x96xf32>
    %223 = vector.extract_strided_slice %218 {offsets = [0, 0], sizes = [2, 64], strides = [1, 1]} : vector<2x96xf32> to vector<2x64xf32>
    %224 = vector.extract_strided_slice %222 {offsets = [0, 0], sizes = [2, 64], strides = [1, 1]} : vector<2x96xf32> to vector<2x64xf32>
    %225 = arith.addf %223, %224 : vector<2x64xf32>
    %226 = arith.negf %225 : vector<2x64xf32>
    %227 = math.exp %226 : vector<2x64xf32>
    %cst_70 = arith.constant 1.000000e+00 : f32
    %228 = vector.broadcast %cst_70 : f32 to vector<2x64xf32>
    %229 = arith.addf %228, %227 : vector<2x64xf32>
    %230 = arith.divf %228, %229 : vector<2x64xf32>
    %231 = vector.extract_strided_slice %230 {offsets = [0, 0], sizes = [2, 32], strides = [1, 1]} : vector<2x64xf32> to vector<2x32xf32>
    %232 = vector.extract_strided_slice %230 {offsets = [0, 32], sizes = [2, 32], strides = [1, 1]} : vector<2x64xf32> to vector<2x32xf32>
    %233 = vector.extract_strided_slice %218 {offsets = [0, 64], sizes = [2, 32], strides = [1, 1]} : vector<2x96xf32> to vector<2x32xf32>
    %234 = vector.extract_strided_slice %222 {offsets = [0, 64], sizes = [2, 32], strides = [1, 1]} : vector<2x96xf32> to vector<2x32xf32>
    %235 = arith.mulf %231, %234 : vector<2x32xf32>
    %236 = arith.addf %233, %235 : vector<2x32xf32>
    %237 = math.tanh %236 : vector<2x32xf32>
    %cst_71 = arith.constant 1.000000e+00 : f32
    %238 = vector.broadcast %cst_71 : f32 to vector<2x32xf32>
    %239 = arith.subf %238, %232 : vector<2x32xf32>
    %240 = arith.mulf %239, %237 : vector<2x32xf32>
    %241 = arith.mulf %232, %175 : vector<2x32xf32>
    %242 = arith.addf %240, %241 : vector<2x32xf32>
    %c0_72 = arith.constant 0 : index
    %243 = arith.index_cast %214 : i32 to index
    %c0_73 = arith.constant 0 : index
    %c0_74 = arith.constant 0 : index
    %244 = vector.load %arg2[%c0_72, %243, %c0_73, %c0_74] : memref<1x8x2x96xbf16, #tpu.memory_space<vmem>>, vector<1x1x2x96xbf16>
    %245 = vector.shape_cast %244 : vector<1x1x2x96xbf16> to vector<2x96xbf16>
    %246 = arith.extf %245 : vector<2x96xbf16> to vector<2x96xf32>
    %247 = arith.truncf %203 : vector<2x32xf32> to vector<2x32xbf16>
    %cst_75 = arith.constant dense<0.000000e+00> : vector<2x96xf32>
    %248 = tpu.matmul %247, %6, %cst_75 {dimension_numbers = #tpu.dot_dimension_numbers<[1], [0], [0], [1], [0, 0, 1, 1], [], []>} : vector<2x32xbf16>, vector<32x96xbf16>, vector<2x96xf32> -> vector<2x96xf32>
    %249 = vector.broadcast %10 : vector<1x96xf32> to vector<2x96xf32>
    %250 = arith.addf %248, %249 : vector<2x96xf32>
    %251 = vector.extract_strided_slice %246 {offsets = [0, 0], sizes = [2, 64], strides = [1, 1]} : vector<2x96xf32> to vector<2x64xf32>
    %252 = vector.extract_strided_slice %250 {offsets = [0, 0], sizes = [2, 64], strides = [1, 1]} : vector<2x96xf32> to vector<2x64xf32>
    %253 = arith.addf %251, %252 : vector<2x64xf32>
    %254 = arith.negf %253 : vector<2x64xf32>
    %255 = math.exp %254 : vector<2x64xf32>
    %cst_76 = arith.constant 1.000000e+00 : f32
    %256 = vector.broadcast %cst_76 : f32 to vector<2x64xf32>
    %257 = arith.addf %256, %255 : vector<2x64xf32>
    %258 = arith.divf %256, %257 : vector<2x64xf32>
    %259 = vector.extract_strided_slice %258 {offsets = [0, 0], sizes = [2, 32], strides = [1, 1]} : vector<2x64xf32> to vector<2x32xf32>
    %260 = vector.extract_strided_slice %258 {offsets = [0, 32], sizes = [2, 32], strides = [1, 1]} : vector<2x64xf32> to vector<2x32xf32>
    %261 = vector.extract_strided_slice %246 {offsets = [0, 64], sizes = [2, 32], strides = [1, 1]} : vector<2x96xf32> to vector<2x32xf32>
    %262 = vector.extract_strided_slice %250 {offsets = [0, 64], sizes = [2, 32], strides = [1, 1]} : vector<2x96xf32> to vector<2x32xf32>
    %263 = arith.mulf %259, %262 : vector<2x32xf32>
    %264 = arith.addf %261, %263 : vector<2x32xf32>
    %265 = math.tanh %264 : vector<2x32xf32>
    %cst_77 = arith.constant 1.000000e+00 : f32
    %266 = vector.broadcast %cst_77 : f32 to vector<2x32xf32>
    %267 = arith.subf %266, %260 : vector<2x32xf32>
    %268 = arith.mulf %267, %265 : vector<2x32xf32>
    %269 = arith.mulf %260, %203 : vector<2x32xf32>
    %270 = arith.addf %268, %269 : vector<2x32xf32>
    %271 = arith.truncf %242 : vector<2x32xf32> to vector<2x32xbf16>
    %272 = arith.index_cast %c3_i32 : i32 to index
    %c0_78 = arith.constant 0 : index
    %c0_79 = arith.constant 0 : index
    %273 = vector.load %arg6[%272, %c0_78, %c0_79] : memref<8x2x32xbf16, #tpu.memory_space<vmem>>, vector<1x2x32xbf16>
    %274 = vector.shape_cast %273 : vector<1x2x32xbf16> to vector<2x32xbf16>
    %275 = vector.shape_cast %271 : vector<2x32xbf16> to vector<1x2x32xbf16>
    tpu.vector_store %arg6[%272, %c0_78, %c0_79], %275 {strides = array<i32>} : memref<8x2x32xbf16, #tpu.memory_space<vmem>>, vector<1x2x32xbf16>,
    %276 = arith.truncf %270 : vector<2x32xf32> to vector<2x32xbf16>
    %277 = arith.index_cast %214 : i32 to index
    %c0_80 = arith.constant 0 : index
    %c0_81 = arith.constant 0 : index
    %278 = vector.load %arg7[%277, %c0_80, %c0_81] : memref<8x2x32xbf16, #tpu.memory_space<vmem>>, vector<1x2x32xbf16>
    %279 = vector.shape_cast %278 : vector<1x2x32xbf16> to vector<2x32xbf16>
    %280 = vector.shape_cast %276 : vector<2x32xbf16> to vector<1x2x32xbf16>
    tpu.vector_store %arg7[%277, %c0_80, %c0_81], %280 {strides = array<i32>} : memref<8x2x32xbf16, #tpu.memory_space<vmem>>, vector<1x2x32xbf16>,
    %c4_i32 = arith.constant 4 : i32
    %c7_i32_82 = arith.constant 7 : i32
    %281 = arith.subi %c7_i32_82, %c4_i32 : i32
    %c0_83 = arith.constant 0 : index
    %282 = arith.index_cast %c4_i32 : i32 to index
    %c0_84 = arith.constant 0 : index
    %c0_85 = arith.constant 0 : index
    %283 = vector.load %arg1[%c0_83, %282, %c0_84, %c0_85] : memref<1x8x2x96xbf16, #tpu.memory_space<vmem>>, vector<1x1x2x96xbf16>
    %284 = vector.shape_cast %283 : vector<1x1x2x96xbf16> to vector<2x96xbf16>
    %285 = arith.extf %284 : vector<2x96xbf16> to vector<2x96xf32>
    %286 = arith.truncf %242 : vector<2x32xf32> to vector<2x32xbf16>
    %cst_86 = arith.constant dense<0.000000e+00> : vector<2x96xf32>
    %287 = tpu.matmul %286, %4, %cst_86 {dimension_numbers = #tpu.dot_dimension_numbers<[1], [0], [0], [1], [0, 0, 1, 1], [], []>} : vector<2x32xbf16>, vector<32x96xbf16>, vector<2x96xf32> -> vector<2x96xf32>
    %288 = vector.broadcast %8 : vector<1x96xf32> to vector<2x96xf32>
    %289 = arith.addf %287, %288 : vector<2x96xf32>
    %290 = vector.extract_strided_slice %285 {offsets = [0, 0], sizes = [2, 64], strides = [1, 1]} : vector<2x96xf32> to vector<2x64xf32>
    %291 = vector.extract_strided_slice %289 {offsets = [0, 0], sizes = [2, 64], strides = [1, 1]} : vector<2x96xf32> to vector<2x64xf32>
    %292 = arith.addf %290, %291 : vector<2x64xf32>
    %293 = arith.negf %292 : vector<2x64xf32>
    %294 = math.exp %293 : vector<2x64xf32>
    %cst_87 = arith.constant 1.000000e+00 : f32
    %295 = vector.broadcast %cst_87 : f32 to vector<2x64xf32>
    %296 = arith.addf %295, %294 : vector<2x64xf32>
    %297 = arith.divf %295, %296 : vector<2x64xf32>
    %298 = vector.extract_strided_slice %297 {offsets = [0, 0], sizes = [2, 32], strides = [1, 1]} : vector<2x64xf32> to vector<2x32xf32>
    %299 = vector.extract_strided_slice %297 {offsets = [0, 32], sizes = [2, 32], strides = [1, 1]} : vector<2x64xf32> to vector<2x32xf32>
    %300 = vector.extract_strided_slice %285 {offsets = [0, 64], sizes = [2, 32], strides = [1, 1]} : vector<2x96xf32> to vector<2x32xf32>
    %301 = vector.extract_strided_slice %289 {offsets = [0, 64], sizes = [2, 32], strides = [1, 1]} : vector<2x96xf32> to vector<2x32xf32>
    %302 = arith.mulf %298, %301 : vector<2x32xf32>
    %303 = arith.addf %300, %302 : vector<2x32xf32>
    %304 = math.tanh %303 : vector<2x32xf32>
    %cst_88 = arith.constant 1.000000e+00 : f32
    %305 = vector.broadcast %cst_88 : f32 to vector<2x32xf32>
    %306 = arith.subf %305, %299 : vector<2x32xf32>
    %307 = arith.mulf %306, %304 : vector<2x32xf32>
    %308 = arith.mulf %299, %242 : vector<2x32xf32>
    %309 = arith.addf %307, %308 : vector<2x32xf32>
    %c0_89 = arith.constant 0 : index
    %310 = arith.index_cast %281 : i32 to index
    %c0_90 = arith.constant 0 : index
    %c0_91 = arith.constant 0 : index
    %311 = vector.load %arg2[%c0_89, %310, %c0_90, %c0_91] : memref<1x8x2x96xbf16, #tpu.memory_space<vmem>>, vector<1x1x2x96xbf16>
    %312 = vector.shape_cast %311 : vector<1x1x2x96xbf16> to vector<2x96xbf16>
    %313 = arith.extf %312 : vector<2x96xbf16> to vector<2x96xf32>
    %314 = arith.truncf %270 : vector<2x32xf32> to vector<2x32xbf16>
    %cst_92 = arith.constant dense<0.000000e+00> : vector<2x96xf32>
    %315 = tpu.matmul %314, %6, %cst_92 {dimension_numbers = #tpu.dot_dimension_numbers<[1], [0], [0], [1], [0, 0, 1, 1], [], []>} : vector<2x32xbf16>, vector<32x96xbf16>, vector<2x96xf32> -> vector<2x96xf32>
    %316 = vector.broadcast %10 : vector<1x96xf32> to vector<2x96xf32>
    %317 = arith.addf %315, %316 : vector<2x96xf32>
    %318 = vector.extract_strided_slice %313 {offsets = [0, 0], sizes = [2, 64], strides = [1, 1]} : vector<2x96xf32> to vector<2x64xf32>
    %319 = vector.extract_strided_slice %317 {offsets = [0, 0], sizes = [2, 64], strides = [1, 1]} : vector<2x96xf32> to vector<2x64xf32>
    %320 = arith.addf %318, %319 : vector<2x64xf32>
    %321 = arith.negf %320 : vector<2x64xf32>
    %322 = math.exp %321 : vector<2x64xf32>
    %cst_93 = arith.constant 1.000000e+00 : f32
    %323 = vector.broadcast %cst_93 : f32 to vector<2x64xf32>
    %324 = arith.addf %323, %322 : vector<2x64xf32>
    %325 = arith.divf %323, %324 : vector<2x64xf32>
    %326 = vector.extract_strided_slice %325 {offsets = [0, 0], sizes = [2, 32], strides = [1, 1]} : vector<2x64xf32> to vector<2x32xf32>
    %327 = vector.extract_strided_slice %325 {offsets = [0, 32], sizes = [2, 32], strides = [1, 1]} : vector<2x64xf32> to vector<2x32xf32>
    %328 = vector.extract_strided_slice %313 {offsets = [0, 64], sizes = [2, 32], strides = [1, 1]} : vector<2x96xf32> to vector<2x32xf32>
    %329 = vector.extract_strided_slice %317 {offsets = [0, 64], sizes = [2, 32], strides = [1, 1]} : vector<2x96xf32> to vector<2x32xf32>
    %330 = arith.mulf %326, %329 : vector<2x32xf32>
    %331 = arith.addf %328, %330 : vector<2x32xf32>
    %332 = math.tanh %331 : vector<2x32xf32>
    %cst_94 = arith.constant 1.000000e+00 : f32
    %333 = vector.broadcast %cst_94 : f32 to vector<2x32xf32>
    %334 = arith.subf %333, %327 : vector<2x32xf32>
    %335 = arith.mulf %334, %332 : vector<2x32xf32>
    %336 = arith.mulf %327, %270 : vector<2x32xf32>
    %337 = arith.addf %335, %336 : vector<2x32xf32>
    %338 = arith.truncf %309 : vector<2x32xf32> to vector<2x32xbf16>
    %339 = arith.index_cast %c4_i32 : i32 to index
    %c0_95 = arith.constant 0 : index
    %c0_96 = arith.constant 0 : index
    %340 = vector.load %arg6[%339, %c0_95, %c0_96] : memref<8x2x32xbf16, #tpu.memory_space<vmem>>, vector<1x2x32xbf16>
    %341 = vector.shape_cast %340 : vector<1x2x32xbf16> to vector<2x32xbf16>
    %342 = vector.shape_cast %338 : vector<2x32xbf16> to vector<1x2x32xbf16>
    tpu.vector_store %arg6[%339, %c0_95, %c0_96], %342 {strides = array<i32>} : memref<8x2x32xbf16, #tpu.memory_space<vmem>>, vector<1x2x32xbf16>,
    %343 = arith.truncf %337 : vector<2x32xf32> to vector<2x32xbf16>
    %344 = arith.index_cast %281 : i32 to index
    %c0_97 = arith.constant 0 : index
    %c0_98 = arith.constant 0 : index
    %345 = vector.load %arg7[%344, %c0_97, %c0_98] : memref<8x2x32xbf16, #tpu.memory_space<vmem>>, vector<1x2x32xbf16>
    %346 = vector.shape_cast %345 : vector<1x2x32xbf16> to vector<2x32xbf16>
    %347 = vector.shape_cast %343 : vector<2x32xbf16> to vector<1x2x32xbf16>
    tpu.vector_store %arg7[%344, %c0_97, %c0_98], %347 {strides = array<i32>} : memref<8x2x32xbf16, #tpu.memory_space<vmem>>, vector<1x2x32xbf16>,
    %c5_i32 = arith.constant 5 : i32
    %c7_i32_99 = arith.constant 7 : i32
    %348 = arith.subi %c7_i32_99, %c5_i32 : i32
    %c0_100 = arith.constant 0 : index
    %349 = arith.index_cast %c5_i32 : i32 to index
    %c0_101 = arith.constant 0 : index
    %c0_102 = arith.constant 0 : index
    %350 = vector.load %arg1[%c0_100, %349, %c0_101, %c0_102] : memref<1x8x2x96xbf16, #tpu.memory_space<vmem>>, vector<1x1x2x96xbf16>
    %351 = vector.shape_cast %350 : vector<1x1x2x96xbf16> to vector<2x96xbf16>
    %352 = arith.extf %351 : vector<2x96xbf16> to vector<2x96xf32>
    %353 = arith.truncf %309 : vector<2x32xf32> to vector<2x32xbf16>
    %cst_103 = arith.constant dense<0.000000e+00> : vector<2x96xf32>
    %354 = tpu.matmul %353, %4, %cst_103 {dimension_numbers = #tpu.dot_dimension_numbers<[1], [0], [0], [1], [0, 0, 1, 1], [], []>} : vector<2x32xbf16>, vector<32x96xbf16>, vector<2x96xf32> -> vector<2x96xf32>
    %355 = vector.broadcast %8 : vector<1x96xf32> to vector<2x96xf32>
    %356 = arith.addf %354, %355 : vector<2x96xf32>
    %357 = vector.extract_strided_slice %352 {offsets = [0, 0], sizes = [2, 64], strides = [1, 1]} : vector<2x96xf32> to vector<2x64xf32>
    %358 = vector.extract_strided_slice %356 {offsets = [0, 0], sizes = [2, 64], strides = [1, 1]} : vector<2x96xf32> to vector<2x64xf32>
    %359 = arith.addf %357, %358 : vector<2x64xf32>
    %360 = arith.negf %359 : vector<2x64xf32>
    %361 = math.exp %360 : vector<2x64xf32>
    %cst_104 = arith.constant 1.000000e+00 : f32
    %362 = vector.broadcast %cst_104 : f32 to vector<2x64xf32>
    %363 = arith.addf %362, %361 : vector<2x64xf32>
    %364 = arith.divf %362, %363 : vector<2x64xf32>
    %365 = vector.extract_strided_slice %364 {offsets = [0, 0], sizes = [2, 32], strides = [1, 1]} : vector<2x64xf32> to vector<2x32xf32>
    %366 = vector.extract_strided_slice %364 {offsets = [0, 32], sizes = [2, 32], strides = [1, 1]} : vector<2x64xf32> to vector<2x32xf32>
    %367 = vector.extract_strided_slice %352 {offsets = [0, 64], sizes = [2, 32], strides = [1, 1]} : vector<2x96xf32> to vector<2x32xf32>
    %368 = vector.extract_strided_slice %356 {offsets = [0, 64], sizes = [2, 32], strides = [1, 1]} : vector<2x96xf32> to vector<2x32xf32>
    %369 = arith.mulf %365, %368 : vector<2x32xf32>
    %370 = arith.addf %367, %369 : vector<2x32xf32>
    %371 = math.tanh %370 : vector<2x32xf32>
    %cst_105 = arith.constant 1.000000e+00 : f32
    %372 = vector.broadcast %cst_105 : f32 to vector<2x32xf32>
    %373 = arith.subf %372, %366 : vector<2x32xf32>
    %374 = arith.mulf %373, %371 : vector<2x32xf32>
    %375 = arith.mulf %366, %309 : vector<2x32xf32>
    %376 = arith.addf %374, %375 : vector<2x32xf32>
    %c0_106 = arith.constant 0 : index
    %377 = arith.index_cast %348 : i32 to index
    %c0_107 = arith.constant 0 : index
    %c0_108 = arith.constant 0 : index
    %378 = vector.load %arg2[%c0_106, %377, %c0_107, %c0_108] : memref<1x8x2x96xbf16, #tpu.memory_space<vmem>>, vector<1x1x2x96xbf16>
    %379 = vector.shape_cast %378 : vector<1x1x2x96xbf16> to vector<2x96xbf16>
    %380 = arith.extf %379 : vector<2x96xbf16> to vector<2x96xf32>
    %381 = arith.truncf %337 : vector<2x32xf32> to vector<2x32xbf16>
    %cst_109 = arith.constant dense<0.000000e+00> : vector<2x96xf32>
    %382 = tpu.matmul %381, %6, %cst_109 {dimension_numbers = #tpu.dot_dimension_numbers<[1], [0], [0], [1], [0, 0, 1, 1], [], []>} : vector<2x32xbf16>, vector<32x96xbf16>, vector<2x96xf32> -> vector<2x96xf32>
    %383 = vector.broadcast %10 : vector<1x96xf32> to vector<2x96xf32>
    %384 = arith.addf %382, %383 : vector<2x96xf32>
    %385 = vector.extract_strided_slice %380 {offsets = [0, 0], sizes = [2, 64], strides = [1, 1]} : vector<2x96xf32> to vector<2x64xf32>
    %386 = vector.extract_strided_slice %384 {offsets = [0, 0], sizes = [2, 64], strides = [1, 1]} : vector<2x96xf32> to vector<2x64xf32>
    %387 = arith.addf %385, %386 : vector<2x64xf32>
    %388 = arith.negf %387 : vector<2x64xf32>
    %389 = math.exp %388 : vector<2x64xf32>
    %cst_110 = arith.constant 1.000000e+00 : f32
    %390 = vector.broadcast %cst_110 : f32 to vector<2x64xf32>
    %391 = arith.addf %390, %389 : vector<2x64xf32>
    %392 = arith.divf %390, %391 : vector<2x64xf32>
    %393 = vector.extract_strided_slice %392 {offsets = [0, 0], sizes = [2, 32], strides = [1, 1]} : vector<2x64xf32> to vector<2x32xf32>
    %394 = vector.extract_strided_slice %392 {offsets = [0, 32], sizes = [2, 32], strides = [1, 1]} : vector<2x64xf32> to vector<2x32xf32>
    %395 = vector.extract_strided_slice %380 {offsets = [0, 64], sizes = [2, 32], strides = [1, 1]} : vector<2x96xf32> to vector<2x32xf32>
    %396 = vector.extract_strided_slice %384 {offsets = [0, 64], sizes = [2, 32], strides = [1, 1]} : vector<2x96xf32> to vector<2x32xf32>
    %397 = arith.mulf %393, %396 : vector<2x32xf32>
    %398 = arith.addf %395, %397 : vector<2x32xf32>
    %399 = math.tanh %398 : vector<2x32xf32>
    %cst_111 = arith.constant 1.000000e+00 : f32
    %400 = vector.broadcast %cst_111 : f32 to vector<2x32xf32>
    %401 = arith.subf %400, %394 : vector<2x32xf32>
    %402 = arith.mulf %401, %399 : vector<2x32xf32>
    %403 = arith.mulf %394, %337 : vector<2x32xf32>
    %404 = arith.addf %402, %403 : vector<2x32xf32>
    %405 = arith.truncf %376 : vector<2x32xf32> to vector<2x32xbf16>
    %406 = arith.index_cast %c5_i32 : i32 to index
    %c0_112 = arith.constant 0 : index
    %c0_113 = arith.constant 0 : index
    %407 = vector.load %arg6[%406, %c0_112, %c0_113] : memref<8x2x32xbf16, #tpu.memory_space<vmem>>, vector<1x2x32xbf16>
    %408 = vector.shape_cast %407 : vector<1x2x32xbf16> to vector<2x32xbf16>
    %409 = vector.shape_cast %405 : vector<2x32xbf16> to vector<1x2x32xbf16>
    tpu.vector_store %arg6[%406, %c0_112, %c0_113], %409 {strides = array<i32>} : memref<8x2x32xbf16, #tpu.memory_space<vmem>>, vector<1x2x32xbf16>,
    %410 = arith.truncf %404 : vector<2x32xf32> to vector<2x32xbf16>
    %411 = arith.index_cast %348 : i32 to index
    %c0_114 = arith.constant 0 : index
    %c0_115 = arith.constant 0 : index
    %412 = vector.load %arg7[%411, %c0_114, %c0_115] : memref<8x2x32xbf16, #tpu.memory_space<vmem>>, vector<1x2x32xbf16>
    %413 = vector.shape_cast %412 : vector<1x2x32xbf16> to vector<2x32xbf16>
    %414 = vector.shape_cast %410 : vector<2x32xbf16> to vector<1x2x32xbf16>
    tpu.vector_store %arg7[%411, %c0_114, %c0_115], %414 {strides = array<i32>} : memref<8x2x32xbf16, #tpu.memory_space<vmem>>, vector<1x2x32xbf16>,
    %c6_i32 = arith.constant 6 : i32
    %c7_i32_116 = arith.constant 7 : i32
    %415 = arith.subi %c7_i32_116, %c6_i32 : i32
    %c0_117 = arith.constant 0 : index
    %416 = arith.index_cast %c6_i32 : i32 to index
    %c0_118 = arith.constant 0 : index
    %c0_119 = arith.constant 0 : index
    %417 = vector.load %arg1[%c0_117, %416, %c0_118, %c0_119] : memref<1x8x2x96xbf16, #tpu.memory_space<vmem>>, vector<1x1x2x96xbf16>
    %418 = vector.shape_cast %417 : vector<1x1x2x96xbf16> to vector<2x96xbf16>
    %419 = arith.extf %418 : vector<2x96xbf16> to vector<2x96xf32>
    %420 = arith.truncf %376 : vector<2x32xf32> to vector<2x32xbf16>
    %cst_120 = arith.constant dense<0.000000e+00> : vector<2x96xf32>
    %421 = tpu.matmul %420, %4, %cst_120 {dimension_numbers = #tpu.dot_dimension_numbers<[1], [0], [0], [1], [0, 0, 1, 1], [], []>} : vector<2x32xbf16>, vector<32x96xbf16>, vector<2x96xf32> -> vector<2x96xf32>
    %422 = vector.broadcast %8 : vector<1x96xf32> to vector<2x96xf32>
    %423 = arith.addf %421, %422 : vector<2x96xf32>
    %424 = vector.extract_strided_slice %419 {offsets = [0, 0], sizes = [2, 64], strides = [1, 1]} : vector<2x96xf32> to vector<2x64xf32>
    %425 = vector.extract_strided_slice %423 {offsets = [0, 0], sizes = [2, 64], strides = [1, 1]} : vector<2x96xf32> to vector<2x64xf32>
    %426 = arith.addf %424, %425 : vector<2x64xf32>
    %427 = arith.negf %426 : vector<2x64xf32>
    %428 = math.exp %427 : vector<2x64xf32>
    %cst_121 = arith.constant 1.000000e+00 : f32
    %429 = vector.broadcast %cst_121 : f32 to vector<2x64xf32>
    %430 = arith.addf %429, %428 : vector<2x64xf32>
    %431 = arith.divf %429, %430 : vector<2x64xf32>
    %432 = vector.extract_strided_slice %431 {offsets = [0, 0], sizes = [2, 32], strides = [1, 1]} : vector<2x64xf32> to vector<2x32xf32>
    %433 = vector.extract_strided_slice %431 {offsets = [0, 32], sizes = [2, 32], strides = [1, 1]} : vector<2x64xf32> to vector<2x32xf32>
    %434 = vector.extract_strided_slice %419 {offsets = [0, 64], sizes = [2, 32], strides = [1, 1]} : vector<2x96xf32> to vector<2x32xf32>
    %435 = vector.extract_strided_slice %423 {offsets = [0, 64], sizes = [2, 32], strides = [1, 1]} : vector<2x96xf32> to vector<2x32xf32>
    %436 = arith.mulf %432, %435 : vector<2x32xf32>
    %437 = arith.addf %434, %436 : vector<2x32xf32>
    %438 = math.tanh %437 : vector<2x32xf32>
    %cst_122 = arith.constant 1.000000e+00 : f32
    %439 = vector.broadcast %cst_122 : f32 to vector<2x32xf32>
    %440 = arith.subf %439, %433 : vector<2x32xf32>
    %441 = arith.mulf %440, %438 : vector<2x32xf32>
    %442 = arith.mulf %433, %376 : vector<2x32xf32>
    %443 = arith.addf %441, %442 : vector<2x32xf32>
    %c0_123 = arith.constant 0 : index
    %444 = arith.index_cast %415 : i32 to index
    %c0_124 = arith.constant 0 : index
    %c0_125 = arith.constant 0 : index
    %445 = vector.load %arg2[%c0_123, %444, %c0_124, %c0_125] : memref<1x8x2x96xbf16, #tpu.memory_space<vmem>>, vector<1x1x2x96xbf16>
    %446 = vector.shape_cast %445 : vector<1x1x2x96xbf16> to vector<2x96xbf16>
    %447 = arith.extf %446 : vector<2x96xbf16> to vector<2x96xf32>
    %448 = arith.truncf %404 : vector<2x32xf32> to vector<2x32xbf16>
    %cst_126 = arith.constant dense<0.000000e+00> : vector<2x96xf32>
    %449 = tpu.matmul %448, %6, %cst_126 {dimension_numbers = #tpu.dot_dimension_numbers<[1], [0], [0], [1], [0, 0, 1, 1], [], []>} : vector<2x32xbf16>, vector<32x96xbf16>, vector<2x96xf32> -> vector<2x96xf32>
    %450 = vector.broadcast %10 : vector<1x96xf32> to vector<2x96xf32>
    %451 = arith.addf %449, %450 : vector<2x96xf32>
    %452 = vector.extract_strided_slice %447 {offsets = [0, 0], sizes = [2, 64], strides = [1, 1]} : vector<2x96xf32> to vector<2x64xf32>
    %453 = vector.extract_strided_slice %451 {offsets = [0, 0], sizes = [2, 64], strides = [1, 1]} : vector<2x96xf32> to vector<2x64xf32>
    %454 = arith.addf %452, %453 : vector<2x64xf32>
    %455 = arith.negf %454 : vector<2x64xf32>
    %456 = math.exp %455 : vector<2x64xf32>
    %cst_127 = arith.constant 1.000000e+00 : f32
    %457 = vector.broadcast %cst_127 : f32 to vector<2x64xf32>
    %458 = arith.addf %457, %456 : vector<2x64xf32>
    %459 = arith.divf %457, %458 : vector<2x64xf32>
    %460 = vector.extract_strided_slice %459 {offsets = [0, 0], sizes = [2, 32], strides = [1, 1]} : vector<2x64xf32> to vector<2x32xf32>
    %461 = vector.extract_strided_slice %459 {offsets = [0, 32], sizes = [2, 32], strides = [1, 1]} : vector<2x64xf32> to vector<2x32xf32>
    %462 = vector.extract_strided_slice %447 {offsets = [0, 64], sizes = [2, 32], strides = [1, 1]} : vector<2x96xf32> to vector<2x32xf32>
    %463 = vector.extract_strided_slice %451 {offsets = [0, 64], sizes = [2, 32], strides = [1, 1]} : vector<2x96xf32> to vector<2x32xf32>
    %464 = arith.mulf %460, %463 : vector<2x32xf32>
    %465 = arith.addf %462, %464 : vector<2x32xf32>
    %466 = math.tanh %465 : vector<2x32xf32>
    %cst_128 = arith.constant 1.000000e+00 : f32
    %467 = vector.broadcast %cst_128 : f32 to vector<2x32xf32>
    %468 = arith.subf %467, %461 : vector<2x32xf32>
    %469 = arith.mulf %468, %466 : vector<2x32xf32>
    %470 = arith.mulf %461, %404 : vector<2x32xf32>
    %471 = arith.addf %469, %470 : vector<2x32xf32>
    %472 = arith.truncf %443 : vector<2x32xf32> to vector<2x32xbf16>
    %473 = arith.index_cast %c6_i32 : i32 to index
    %c0_129 = arith.constant 0 : index
    %c0_130 = arith.constant 0 : index
    %474 = vector.load %arg6[%473, %c0_129, %c0_130] : memref<8x2x32xbf16, #tpu.memory_space<vmem>>, vector<1x2x32xbf16>
    %475 = vector.shape_cast %474 : vector<1x2x32xbf16> to vector<2x32xbf16>
    %476 = vector.shape_cast %472 : vector<2x32xbf16> to vector<1x2x32xbf16>
    tpu.vector_store %arg6[%473, %c0_129, %c0_130], %476 {strides = array<i32>} : memref<8x2x32xbf16, #tpu.memory_space<vmem>>, vector<1x2x32xbf16>,
    %477 = arith.truncf %471 : vector<2x32xf32> to vector<2x32xbf16>
    %478 = arith.index_cast %415 : i32 to index
    %c0_131 = arith.constant 0 : index
    %c0_132 = arith.constant 0 : index
    %479 = vector.load %arg7[%478, %c0_131, %c0_132] : memref<8x2x32xbf16, #tpu.memory_space<vmem>>, vector<1x2x32xbf16>
    %480 = vector.shape_cast %479 : vector<1x2x32xbf16> to vector<2x32xbf16>
    %481 = vector.shape_cast %477 : vector<2x32xbf16> to vector<1x2x32xbf16>
    tpu.vector_store %arg7[%478, %c0_131, %c0_132], %481 {strides = array<i32>} : memref<8x2x32xbf16, #tpu.memory_space<vmem>>, vector<1x2x32xbf16>,
    %c7_i32_133 = arith.constant 7 : i32
    %c7_i32_134 = arith.constant 7 : i32
    %482 = arith.subi %c7_i32_134, %c7_i32_133 : i32
    %c0_135 = arith.constant 0 : index
    %483 = arith.index_cast %c7_i32_133 : i32 to index
    %c0_136 = arith.constant 0 : index
    %c0_137 = arith.constant 0 : index
    %484 = vector.load %arg1[%c0_135, %483, %c0_136, %c0_137] : memref<1x8x2x96xbf16, #tpu.memory_space<vmem>>, vector<1x1x2x96xbf16>
    %485 = vector.shape_cast %484 : vector<1x1x2x96xbf16> to vector<2x96xbf16>
    %486 = arith.extf %485 : vector<2x96xbf16> to vector<2x96xf32>
    %487 = arith.truncf %443 : vector<2x32xf32> to vector<2x32xbf16>
    %cst_138 = arith.constant dense<0.000000e+00> : vector<2x96xf32>
    %488 = tpu.matmul %487, %4, %cst_138 {dimension_numbers = #tpu.dot_dimension_numbers<[1], [0], [0], [1], [0, 0, 1, 1], [], []>} : vector<2x32xbf16>, vector<32x96xbf16>, vector<2x96xf32> -> vector<2x96xf32>
    %489 = vector.broadcast %8 : vector<1x96xf32> to vector<2x96xf32>
    %490 = arith.addf %488, %489 : vector<2x96xf32>
    %491 = vector.extract_strided_slice %486 {offsets = [0, 0], sizes = [2, 64], strides = [1, 1]} : vector<2x96xf32> to vector<2x64xf32>
    %492 = vector.extract_strided_slice %490 {offsets = [0, 0], sizes = [2, 64], strides = [1, 1]} : vector<2x96xf32> to vector<2x64xf32>
    %493 = arith.addf %491, %492 : vector<2x64xf32>
    %494 = arith.negf %493 : vector<2x64xf32>
    %495 = math.exp %494 : vector<2x64xf32>
    %cst_139 = arith.constant 1.000000e+00 : f32
    %496 = vector.broadcast %cst_139 : f32 to vector<2x64xf32>
    %497 = arith.addf %496, %495 : vector<2x64xf32>
    %498 = arith.divf %496, %497 : vector<2x64xf32>
    %499 = vector.extract_strided_slice %498 {offsets = [0, 0], sizes = [2, 32], strides = [1, 1]} : vector<2x64xf32> to vector<2x32xf32>
    %500 = vector.extract_strided_slice %498 {offsets = [0, 32], sizes = [2, 32], strides = [1, 1]} : vector<2x64xf32> to vector<2x32xf32>
    %501 = vector.extract_strided_slice %486 {offsets = [0, 64], sizes = [2, 32], strides = [1, 1]} : vector<2x96xf32> to vector<2x32xf32>
    %502 = vector.extract_strided_slice %490 {offsets = [0, 64], sizes = [2, 32], strides = [1, 1]} : vector<2x96xf32> to vector<2x32xf32>
    %503 = arith.mulf %499, %502 : vector<2x32xf32>
    %504 = arith.addf %501, %503 : vector<2x32xf32>
    %505 = math.tanh %504 : vector<2x32xf32>
    %cst_140 = arith.constant 1.000000e+00 : f32
    %506 = vector.broadcast %cst_140 : f32 to vector<2x32xf32>
    %507 = arith.subf %506, %500 : vector<2x32xf32>
    %508 = arith.mulf %507, %505 : vector<2x32xf32>
    %509 = arith.mulf %500, %443 : vector<2x32xf32>
    %510 = arith.addf %508, %509 : vector<2x32xf32>
    %c0_141 = arith.constant 0 : index
    %511 = arith.index_cast %482 : i32 to index
    %c0_142 = arith.constant 0 : index
    %c0_143 = arith.constant 0 : index
    %512 = vector.load %arg2[%c0_141, %511, %c0_142, %c0_143] : memref<1x8x2x96xbf16, #tpu.memory_space<vmem>>, vector<1x1x2x96xbf16>
    %513 = vector.shape_cast %512 : vector<1x1x2x96xbf16> to vector<2x96xbf16>
    %514 = arith.extf %513 : vector<2x96xbf16> to vector<2x96xf32>
    %515 = arith.truncf %471 : vector<2x32xf32> to vector<2x32xbf16>
    %cst_144 = arith.constant dense<0.000000e+00> : vector<2x96xf32>
    %516 = tpu.matmul %515, %6, %cst_144 {dimension_numbers = #tpu.dot_dimension_numbers<[1], [0], [0], [1], [0, 0, 1, 1], [], []>} : vector<2x32xbf16>, vector<32x96xbf16>, vector<2x96xf32> -> vector<2x96xf32>
    %517 = vector.broadcast %10 : vector<1x96xf32> to vector<2x96xf32>
    %518 = arith.addf %516, %517 : vector<2x96xf32>
    %519 = vector.extract_strided_slice %514 {offsets = [0, 0], sizes = [2, 64], strides = [1, 1]} : vector<2x96xf32> to vector<2x64xf32>
    %520 = vector.extract_strided_slice %518 {offsets = [0, 0], sizes = [2, 64], strides = [1, 1]} : vector<2x96xf32> to vector<2x64xf32>
    %521 = arith.addf %519, %520 : vector<2x64xf32>
    %522 = arith.negf %521 : vector<2x64xf32>
    %523 = math.exp %522 : vector<2x64xf32>
    %cst_145 = arith.constant 1.000000e+00 : f32
    %524 = vector.broadcast %cst_145 : f32 to vector<2x64xf32>
    %525 = arith.addf %524, %523 : vector<2x64xf32>
    %526 = arith.divf %524, %525 : vector<2x64xf32>
    %527 = vector.extract_strided_slice %526 {offsets = [0, 0], sizes = [2, 32], strides = [1, 1]} : vector<2x64xf32> to vector<2x32xf32>
    %528 = vector.extract_strided_slice %526 {offsets = [0, 32], sizes = [2, 32], strides = [1, 1]} : vector<2x64xf32> to vector<2x32xf32>
    %529 = vector.extract_strided_slice %514 {offsets = [0, 64], sizes = [2, 32], strides = [1, 1]} : vector<2x96xf32> to vector<2x32xf32>
    %530 = vector.extract_strided_slice %518 {offsets = [0, 64], sizes = [2, 32], strides = [1, 1]} : vector<2x96xf32> to vector<2x32xf32>
    %531 = arith.mulf %527, %530 : vector<2x32xf32>
    %532 = arith.addf %529, %531 : vector<2x32xf32>
    %533 = math.tanh %532 : vector<2x32xf32>
    %cst_146 = arith.constant 1.000000e+00 : f32
    %534 = vector.broadcast %cst_146 : f32 to vector<2x32xf32>
    %535 = arith.subf %534, %528 : vector<2x32xf32>
    %536 = arith.mulf %535, %533 : vector<2x32xf32>
    %537 = arith.mulf %528, %471 : vector<2x32xf32>
    %538 = arith.addf %536, %537 : vector<2x32xf32>
    %539 = arith.truncf %510 : vector<2x32xf32> to vector<2x32xbf16>
    %540 = arith.index_cast %c7_i32_133 : i32 to index
    %c0_147 = arith.constant 0 : index
    %c0_148 = arith.constant 0 : index
    %541 = vector.load %arg6[%540, %c0_147, %c0_148] : memref<8x2x32xbf16, #tpu.memory_space<vmem>>, vector<1x2x32xbf16>
    %542 = vector.shape_cast %541 : vector<1x2x32xbf16> to vector<2x32xbf16>
    %543 = vector.shape_cast %539 : vector<2x32xbf16> to vector<1x2x32xbf16>
    tpu.vector_store %arg6[%540, %c0_147, %c0_148], %543 {strides = array<i32>} : memref<8x2x32xbf16, #tpu.memory_space<vmem>>, vector<1x2x32xbf16>,
    %544 = arith.truncf %538 : vector<2x32xf32> to vector<2x32xbf16>
    %545 = arith.index_cast %482 : i32 to index
    %c0_149 = arith.constant 0 : index
    %c0_150 = arith.constant 0 : index
    %546 = vector.load %arg7[%545, %c0_149, %c0_150] : memref<8x2x32xbf16, #tpu.memory_space<vmem>>, vector<1x2x32xbf16>
    %547 = vector.shape_cast %546 : vector<1x2x32xbf16> to vector<2x32xbf16>
    %548 = vector.shape_cast %544 : vector<2x32xbf16> to vector<1x2x32xbf16>
    tpu.vector_store %arg7[%545, %c0_149, %c0_150], %548 {strides = array<i32>} : memref<8x2x32xbf16, #tpu.memory_space<vmem>>, vector<1x2x32xbf16>,
    %c8_i32 = arith.constant 8 : i32
    %c0_151 = arith.constant 0 : index
    %c0_152 = arith.constant 0 : index
    %549 = vector.load %arg9[%c0_151, %c0_152] : memref<2x32xf32, #tpu.memory_space<vmem>>, vector<2x32xf32>
    tpu.vector_store %arg9[%c0_151, %c0_152], %510 {strides = array<i32>} : memref<2x32xf32, #tpu.memory_space<vmem>>, vector<2x32xf32>,
    %c0_153 = arith.constant 0 : index
    %c0_154 = arith.constant 0 : index
    %550 = vector.load %arg10[%c0_153, %c0_154] : memref<2x32xf32, #tpu.memory_space<vmem>>, vector<2x32xf32>
    tpu.vector_store %arg10[%c0_153, %c0_154], %538 {strides = array<i32>} : memref<2x32xf32, #tpu.memory_space<vmem>>, vector<2x32xf32>,
    %c0_i32_155 = arith.constant 0 : i32
    %551 = arith.cmpi eq, %arg0, %c0_i32_155 : i32
    %552 = arith.extui %551 : i1 to i32
    %c0_i32_156 = arith.constant 0 : i32
    %553 = arith.cmpi ne, %552, %c0_i32_156 : i32
    scf.if %553 {
      %c0_157 = arith.constant 0 : index
      %c0_158 = arith.constant 0 : index
      %c0_159 = arith.constant 0 : index
      %554 = vector.load %arg8[%c0_157, %c0_158, %c0_159] : memref<2x2x32xf32, #tpu.memory_space<vmem>>, vector<1x2x32xf32>
      %555 = vector.shape_cast %554 : vector<1x2x32xf32> to vector<2x32xf32>
      %556 = vector.shape_cast %510 : vector<2x32xf32> to vector<1x2x32xf32>
      tpu.vector_store %arg8[%c0_157, %c0_158, %c0_159], %556 {strides = array<i32>} : memref<2x2x32xf32, #tpu.memory_space<vmem>>, vector<1x2x32xf32>,
      %c1_160 = arith.constant 1 : index
      %c0_161 = arith.constant 0 : index
      %c0_162 = arith.constant 0 : index
      %557 = vector.load %arg8[%c1_160, %c0_161, %c0_162] : memref<2x2x32xf32, #tpu.memory_space<vmem>>, vector<1x2x32xf32>
      %558 = vector.shape_cast %557 : vector<1x2x32xf32> to vector<2x32xf32>
      %559 = vector.shape_cast %538 : vector<2x32xf32> to vector<1x2x32xf32>
      tpu.vector_store %arg8[%c1_160, %c0_161, %c0_162], %559 {strides = array<i32>} : memref<2x2x32xf32, #tpu.memory_space<vmem>>, vector<1x2x32xf32>,
    } else {
    }
    return
  }
  func.func @transform_0(%arg0: i32) -> (i32, i32, i32, i32) {
    %c0_i32 = arith.constant 0 : i32
    %c0_i32_0 = arith.constant 0 : i32
    %c0_i32_1 = arith.constant 0 : i32
    %c0_i32_2 = arith.constant 0 : i32
    return %c0_i32, %arg0, %c0_i32_0, %c0_i32_1 : i32, i32, i32, i32
  }
  func.func @transform_1(%arg0: i32) -> (i32, i32, i32, i32) {
    %c0_i32 = arith.constant 0 : i32
    %0 = arith.subi %c0_i32, %arg0 : i32
    %c1_i32 = arith.constant 1 : i32
    %c0_i32_0 = arith.constant 0 : i32
    %c0_i32_1 = arith.constant 0 : i32
    %c0_i32_2 = arith.constant 0 : i32
    return %c1_i32, %0, %c0_i32_0, %c0_i32_1 : i32, i32, i32, i32
  }
  func.func @transform_2(%arg0: i32) -> (i32, i32, i32) {
    %c0_i32 = arith.constant 0 : i32
    %c0_i32_0 = arith.constant 0 : i32
    %c0_i32_1 = arith.constant 0 : i32
    %c0_i32_2 = arith.constant 0 : i32
    return %c0_i32, %c0_i32_0, %c0_i32_1 : i32, i32, i32
  }
  func.func @transform_3(%arg0: i32) -> (i32, i32, i32) {
    %c0_i32 = arith.constant 0 : i32
    %c0_i32_0 = arith.constant 0 : i32
    %c0_i32_1 = arith.constant 0 : i32
    %c0_i32_2 = arith.constant 0 : i32
    return %c0_i32, %c0_i32_0, %c0_i32_1 : i32, i32, i32
  }
  func.func @transform_4(%arg0: i32) -> (i32, i32, i32) {
    %c0_i32 = arith.constant 0 : i32
    %c0_i32_0 = arith.constant 0 : i32
    %c0_i32_1 = arith.constant 0 : i32
    %c0_i32_2 = arith.constant 0 : i32
    return %c0_i32, %c0_i32_0, %c0_i32_1 : i32, i32, i32
  }
  func.func @transform_5(%arg0: i32) -> (i32, i32, i32) {
    %c0_i32 = arith.constant 0 : i32
    %c0_i32_0 = arith.constant 0 : i32
    %c0_i32_1 = arith.constant 0 : i32
    return %arg0, %c0_i32, %c0_i32_0 : i32, i32, i32
  }
  func.func @transform_6(%arg0: i32) -> (i32, i32, i32) {
    %c0_i32 = arith.constant 0 : i32
    %0 = arith.subi %c0_i32, %arg0 : i32
    %c0_i32_0 = arith.constant 0 : i32
    %c0_i32_1 = arith.constant 0 : i32
    %c0_i32_2 = arith.constant 0 : i32
    return %0, %c0_i32_0, %c0_i32_1 : i32, i32, i32
  }
  func.func @transform_7(%arg0: i32) -> (i32, i32, i32) {
    %c0_i32 = arith.constant 0 : i32
    %c0_i32_0 = arith.constant 0 : i32
    %c0_i32_1 = arith.constant 0 : i32
    %c0_i32_2 = arith.constant 0 : i32
    return %c0_i32, %c0_i32_0, %c0_i32_1 : i32, i32, i32
  }
}

</mosaic_0001>

<llo_original>
// kernel: word_attn_forward.3
$region0: #{word_attn_forward.3}
  #allocation0 [shape = 'u32[]', space=smem, size = 0x4, offset = 0x4, fixed_abs, tag = 'smem constant byte address 0x4 - core index']
  #allocation1 [shape = 'u32[144,128]{1,0:T(1,128)}', space=vmem, size = 0x12000, scoped, tag = 'internal scratch']
  %s0 = inlined_call_operand.vmem [shape: bf16[16,32], index: 0, kind: input, shape index: {}]
  %s1 = inlined_call_operand.vmem [shape: bf16[2,32,96], index: 1, kind: input, shape index: {}]
  %s2 = inlined_call_operand.vmem [shape: f32[2,1,96], index: 2, kind: input, shape index: {}]
  %s3 = inlined_call_operand.vmem [shape: bf16[2,16,96], index: 3, kind: output, shape index: {}]
  %s4 = sld [smem:[#allocation0]]
  $region45: #{word_attn_forward.3} parent=0
    _
  %s6 = ssub.s32 1, %s4
  %s7 = scalar_select 0, %s6, %s4
  loop: start=0, step=1, limit=4
  $region2: #{word_attn_forward.3} parent=0 // loop_pre_header
    _
  $region3: #{word_attn_forward.3} parent=0 // loop_header
    %s9 = sphi 0, %s13
    %p10 = scmp.ge.s32.totalorder %s9, 4
    %s16 = sphi 0, %s28
    %s17 = sphi 0, %s24
    %s18 = sphi 0, %s16
    %s19 = sphi 0, %s17
    %s20 = sphi 0, %s18
    %s21 = sphi 0, %s19
    %s31 = sphi 0, %s33
    %s34 = sphi 0, %s31
    %s35 = sphi 0, %s34
    %s51 = sphi 0, %s35
    %s57 = sphi 0, %s59
    %s60 = sphi 0, %s57
    %s61 = sphi 0, %s60
    %s77 = sphi 0, %s61
    %s83 = sphi 0, %s85
    %s86 = sphi 0, %s83
    %s87 = sphi 0, %s86
    %s103 = sphi 0, %s87
    %s111 = sphi 0, %s113
    %s114 = sphi 0, %s111
    %s115 = sphi 0, %s114
    %s131 = sphi 0, %s115
  $region4: #{word_attn_forward.3} parent=0 // loop_header_branch
    %12 = sbr.rel (%p10) target = $region8
  $region5: #{word_attn_forward.3} parent=0 // loop_body
    %s14 = ssub.s32 %s9, 1
    %s15 = ssub.s32 %s9, 2
    %s22 = sadd.s32 1, %s17
    %p23 = scmp.ge.s32.totalorder %s22, 1
    %s24 = scalar_select %p23, 0, %s22
    %s25 = sadd.s32 1, %s16
    %s26 = scalar_select %p23, %s25, %s16
    %p27 = scmp.ge.s32.totalorder %s26, 2
    %s28 = scalar_select %p27, 0, %s26
    %s29 = ssub.s32 %s17, %s24
    %p30 = scmp.eq.s32.totalorder %s29, 0
    %s32 = sadd.s32 %s31, 1
    %s33 = scalar_select %p30, %s31, %s32
    %p36 = pneg %p30
    %p37 = scmp.eq.s32.totalorder %s9, 1
    %p38 = por %p36, %p37
    %p39 = scmp.ne.s32.totalorder %s31, %s34
    %p40 = scmp.eq.s32.totalorder %s9, 0
    %p41 = por %p39, %p40
    %p42 = scmp.ne.s32.totalorder %s31, %s34
    %p43 = scmp.eq.s32.totalorder %s14, 1
    %p44 = por %p42, %p43
    %p45 = scmp.ne.s32.totalorder %s34, %s35
    %p46 = scmp.eq.s32.totalorder %s14, 0
    %p47 = por %p45, %p46
    %p48 = scmp.ne.s32.totalorder %s34, %s35
    %p49 = scmp.eq.s32.totalorder %s15, 1
    %p50 = por %p48, %p49
    %p52 = scmp.ne.s32.totalorder %s35, %s51
    %p53 = scmp.eq.s32.totalorder %s15, 0
    %p54 = por %p52, %p53
    %s55 = ssub.s32 %s16, %s28
    %p56 = scmp.eq.s32.totalorder %s55, 0
    %s58 = sadd.s32 %s57, 1
    %s59 = scalar_select %p56, %s57, %s58
    %p62 = pneg %p56
    %p63 = scmp.eq.s32.totalorder %s9, 1
    %p64 = por %p62, %p63
    %p65 = scmp.ne.s32.totalorder %s57, %s60
    %p66 = scmp.eq.s32.totalorder %s9, 0
    %p67 = por %p65, %p66
    %p68 = scmp.ne.s32.totalorder %s57, %s60
    %p69 = scmp.eq.s32.totalorder %s14, 1
    %p70 = por %p68, %p69
    %p71 = scmp.ne.s32.totalorder %s60, %s61
    %p72 = scmp.eq.s32.totalorder %s14, 0
    %p73 = por %p71, %p72
    %p74 = scmp.ne.s32.totalorder %s60, %s61
    %p75 = scmp.eq.s32.totalorder %s15, 1
    %p76 = por %p74, %p75
    %p78 = scmp.ne.s32.totalorder %s61, %s77
    %p79 = scmp.eq.s32.totalorder %s15, 0
    %p80 = por %p78, %p79
    %s81 = ssub.s32 %s16, %s28
    %p82 = scmp.eq.s32.totalorder %s81, 0
    %s84 = sadd.s32 %s83, 1
    %s85 = scalar_select %p82, %s83, %s84
    %p88 = pneg %p82
    %p89 = scmp.eq.s32.totalorder %s9, 1
    %p90 = por %p88, %p89
    %p91 = scmp.ne.s32.totalorder %s83, %s86
    %p92 = scmp.eq.s32.totalorder %s9, 0
    %p93 = por %p91, %p92
    %p94 = scmp.ne.s32.totalorder %s83, %s86
    %p95 = scmp.eq.s32.totalorder %s14, 1
    %p96 = por %p94, %p95
    %p97 = scmp.ne.s32.totalorder %s86, %s87
    %p98 = scmp.eq.s32.totalorder %s14, 0
    %p99 = por %p97, %p98
    %p100 = scmp.ne.s32.totalorder %s86, %s87
    %p101 = scmp.eq.s32.totalorder %s15, 1
    %p102 = por %p100, %p101
    %p104 = scmp.ne.s32.totalorder %s87, %s103
    %p105 = scmp.eq.s32.totalorder %s15, 0
    %p106 = por %p104, %p105
    %s107 = ssub.s32 %s16, %s28
    %s108 = ssub.s32 %s17, %s24
    %s109 = sor.u32 %s107, %s108
    %p110 = scmp.eq.s32.totalorder %s109, 0
    %s112 = sadd.s32 %s111, 1
    %s113 = scalar_select %p110, %s111, %s112
    %p116 = pneg %p110
    %p117 = scmp.eq.s32.totalorder %s9, 1
    %p118 = por %p116, %p117
    %p119 = scmp.ne.s32.totalorder %s111, %s114
    %p120 = scmp.eq.s32.totalorder %s9, 0
    %p121 = por %p119, %p120
    %p122 = scmp.ne.s32.totalorder %s111, %s114
    %p123 = scmp.eq.s32.totalorder %s14, 1
    %p124 = por %p122, %p123
    %p125 = scmp.ne.s32.totalorder %s114, %s115
    %p126 = scmp.eq.s32.totalorder %s14, 0
    %p127 = por %p125, %p126
    %p128 = scmp.ne.s32.totalorder %s114, %s115
    %p129 = scmp.eq.s32.totalorder %s15, 1
    %p130 = por %p128, %p129
    %p132 = scmp.ne.s32.totalorder %s115, %s131
    %p133 = scmp.eq.s32.totalorder %s15, 0
    %p134 = por %p132, %p133
    %p135 = scmp.le.s32.totalorder 1, %s9
    %p136 = scmp.lt.s32.totalorder %s9, 3
    %p137 = pnand %p135, %p136
    %p138 = pneg %p137
    // Predicated region
    $region9: #{word_attn_forward.3} parent=5 // pred_check
      _
    $region10: #{word_attn_forward.3} parent=5 // pred_check_branch
      %140 = sbr.rel (%p137) target = $region12
    $region11: #{word_attn_forward.3} parent=5 // pred_region
      %s141 = ssub.s32 %s9, 1
      // Predicated region
      $region13: #{word_attn_forward.3} parent=11 // pred_check
        %p142 = pneg %p47
      $region14: #{word_attn_forward.3} parent=11 // pred_check_branch
        %144 = sbr.rel (%p142) target = $region16
      $region15: #{word_attn_forward.3} parent=11 // pred_region
        %s145 = smul.u32 2, %s19
        %p146 = scmp.lt.s32.totalorder %s145, 1
        %s147 = scalar_select %p146, %s145, 1
        %s148 = smul.addr %s147, 4
        %s149 = scalar_lea.vmem %s0, %s148
        %s150 = smul.u32 2, %s19
      $region16: #{word_attn_forward.3} parent=11 // pred_fallthru
        _
    $region12: #{word_attn_forward.3} parent=5 // pred_fallthru
      _
    %p151 = scmp.lt.s32.totalorder %s9, 2
    // Predicated region
    $region17: #{word_attn_forward.3} parent=5 // pred_check
      %p152 = pneg %p151
    $region18: #{word_attn_forward.3} parent=5 // pred_check_branch
      %154 = sbr.rel (%p152) target = $region20
    $region19: #{word_attn_forward.3} parent=5 // pred_region
      // Predicated region
      $region21: #{word_attn_forward.3} parent=19 // pred_check
        %p155 = pneg %p67
      $region22: #{word_attn_forward.3} parent=19 // pred_check_branch
        %157 = sbr.rel (%p155) target = $region24
      $region23: #{word_attn_forward.3} parent=19 // pred_region
        %p158 = scmp.lt.s32.totalorder %s16, 1
        %s159 = scalar_select %p158, %s16, 1
        %s160 = smul.addr %s159, 4
        %s161 = smul.addr %s160, 4
        %s162 = scalar_lea.vmem %s1, %s161
      $region24: #{word_attn_forward.3} parent=19 // pred_fallthru
        _
      // Predicated region
      $region25: #{word_attn_forward.3} parent=19 // pred_check
        %p163 = pneg %p93
      $region26: #{word_attn_forward.3} parent=19 // pred_check_branch
        %165 = sbr.rel (%p163) target = $region28
      $region27: #{word_attn_forward.3} parent=19 // pred_region
        %p166 = scmp.lt.s32.totalorder %s16, 1
        %s167 = scalar_select %p166, %s16, 1
        %s168 = scalar_lea.vmem %s2, %s167
      $region28: #{word_attn_forward.3} parent=19 // pred_fallthru
        _
    $region20: #{word_attn_forward.3} parent=5 // pred_fallthru
      _
    %p169 = scmp.le.s32.totalorder 1, %s9
    %p170 = scmp.lt.s32.totalorder %s9, 3
    %p171 = pnand %p169, %p170
    %p172 = pneg %p171
    // Predicated region
    $region29: #{word_attn_forward.3} parent=5 // pred_check
      _
    $region30: #{word_attn_forward.3} parent=5 // pred_check_branch
      %174 = sbr.rel (%p171) target = $region32
    $region31: #{word_attn_forward.3} parent=5 // pred_region
      %s175 = ssub.s32 %s9, 1
      %s176 = smul.u32 2, %s19
      %p177 = scmp.lt.s32.totalorder %s176, 1
      %s178 = scalar_select %p177, %s176, 1
      %s179 = smul.addr %s178, 4
      %s180 = scalar_lea.vmem %s0, %s179
      %p181 = pneg %p47
      %p182 = pneg %p44
      %p183 = scmp.lt.s32.totalorder %s18, 1
      %s184 = scalar_select %p183, %s18, 1
      %s185 = smul.addr %s184, 4
      %s186 = smul.addr %s185, 4
      %s187 = scalar_lea.vmem %s1, %s186
      %p188 = pneg %p73
      %p189 = pneg %p70
      %p190 = scmp.lt.s32.totalorder %s18, 1
      %s191 = scalar_select %p190, %s18, 1
      %s192 = scalar_lea.vmem %s2, %s191
      %p193 = pneg %p99
      %p194 = pneg %p96
      %p195 = pneg %p127
      %p196 = pneg %p124
      %s197 = smul.u32 2, %s19
      %p198 = scmp.lt.s32.totalorder %s18, 1
      %s199 = scalar_select %p198, %s18, 1
      %p200 = scmp.lt.s32.totalorder %s197, 1
      %s201 = scalar_select %p200, %s197, 1
      %s202 = smul.addr %s199, 2
      %s203 = sadd.s32 %s201, %s202
      %s204 = smul.addr %s203, 4
      %s205 = scalar_lea.vmem %s3, %s204
      %s206 = smul.u32 2, %s19
      %p207 = scmp.lt.s32.totalorder %s206, 1
      %s208 = scalar_select %p207, %s206, 1
      %s209 = smul.addr %s208, 4
      %s210 = scalar_lea.vmem %s0, %s209
      %s211 = smul.u32 2, %s19
      %p212 = scmp.lt.s32.totalorder %s18, 1
      %s213 = scalar_select %p212, %s18, 1
      %s214 = smul.addr %s213, 4
      %s215 = smul.addr %s214, 4
      %s216 = scalar_lea.vmem %s1, %s215
      %p217 = scmp.lt.s32.totalorder %s18, 1
      %s218 = scalar_select %p217, %s18, 1
      %s219 = scalar_lea.vmem %s2, %s218
      %s220 = smul.u32 2, %s19
      %p221 = scmp.lt.s32.totalorder %s18, 1
      %s222 = scalar_select %p221, %s18, 1
      %p223 = scmp.lt.s32.totalorder %s220, 1
      %s224 = scalar_select %p223, %s220, 1
      %s225 = smul.addr %s222, 2
      %s226 = sadd.s32 %s224, %s225
      %s227 = smul.addr %s226, 4
      %s228 = scalar_lea.vmem %s3, %s227
      %s229 = smul.u32 2, %s19
      %v231 = vld [vmem:[%s210] sm:$0xf]
      %v232 = vld [vmem:[%s210 + $0x4] sm:$0xf]
      %v233 = vld [vmem:[%s216] sm:$0xf]
      %v234 = vld [vmem:[%s216 + $0x4] sm:$0xf]
      %v235 = vld [vmem:[%s216 + $0x8] sm:$0xf]
      %v236 = vld [vmem:[%s216 + $0xc] sm:$0xf]
      %v237 = vld [vmem:[%s219] sm:$0x1]
      %v239 = vlaneseq
      %v240 = vshrl.u32 %v239, 7
      %v241 = vsub.s32 0, %v240
      %v242 = vrot.slane %v237, %v241
      %v246 = vunpack.c.l.b16 %v231
      %v247 = vunpack.c.l.b16 %v232
      %v248 = vpack.c.b16 %v247, %v246
      %v253 = vunpack.c.l.b16 %v233
      %v254 = vunpack.c.l.b16 %v234
      %v255 = vunpack.c.l.b16 %v235
      %v256 = vunpack.c.l.b16 %v236
      %v257 = vpack.c.b16 %v254, %v253
      %v258 = vpack.c.b16 %v256, %v255
      %vm261 = vcmask 261120
      %v263 = vsel %vm261, %v248, 0
      %265 = vmatprep.subr.bf16.mxu0 0
      %266 = vmatpush1.bf16.msra.mxu0 %v257
      %267 = vmatprep.subr.bf16.mxu0 0
      %268 = vmatpush1.bf16.msra.mxu0 %v258
      %269 = vmatprep.subr.bf16.mxu0 0
      %270 = vmatpush1.bf16.msra.mxu0 0
      %271 = vmatprep.subr.bf16.mxu0 0
      %272 = vmatpush1.bf16.msra.mxu0 0
      %273 = vmatprep.subr.bf16.mxu0 0
      %274 = vmatpush1.bf16.msra.mxu0 0
      %275 = vmatprep.subr.bf16.mxu0 0
      %276 = vmatpush1.bf16.msra.mxu0 0
      %277 = vmatprep.subr.bf16.mxu0 0
      %278 = vmatpush1.bf16.msra.mxu0 0
      %279 = vmatprep.subr.bf16.mxu0 0
      %280 = vmatpush1.bf16.msra.mxu0 0
      %281 = vmatprep.subr.bf16.mxu0 0
      %282 = vmatpush1.bf16.msra.mxu0 0
      %283 = vmatprep.subr.bf16.mxu0 0
      %284 = vmatpush1.bf16.msra.mxu0 0
      %285 = vmatprep.subr.bf16.mxu0 0
      %286 = vmatpush1.bf16.msra.mxu0 0
      %287 = vmatprep.subr.bf16.mxu0 0
      %288 = vmatpush1.bf16.msra.mxu0 0
      %289 = vmatprep.subr.bf16.mxu0 0
      %290 = vmatpush1.bf16.msra.mxu0 0
      %291 = vmatprep.subr.bf16.mxu0 0
      %292 = vmatpush1.bf16.msra.mxu0 0
      %293 = vmatprep.subr.bf16.mxu0 0
      %294 = vmatpush1.bf16.msra.mxu0 0
      %295 = vmatprep.subr.bf16.mxu0 0
      %296 = vmatpush1.bf16.msra.mxu0 0
      %297 = vmatprep.mubr.bf16.mxu0 0
      %298 = vmatmul.mubr.bf16.gmra.mrb[0].mxu0 %v263
      %v299 = vpop.f32.mrb[0].mxu0
      %v300 = vadd.f32 %v242, %v299
      %v301 = vpop.f32.mrb[0].mxu0
      %v302 = vpop.f32.mrb[0].mxu0
      %v303 = vadd.f32 %v242, %v302
      %v304 = vpop.f32.mrb[0].mxu0
      %305 = vdwg.mxu0
      %v306 = vpack.c.bf16 %v303, %v300
      %v308 = vunpack.c.l.b16 %v306
      %v309 = vunpack.c.h.b16 %v306
      %v310 = vpack.c.b16 %v308, %v308
      %v311 = vpack.c.b16 %v309, %v309
      %vm314 = vcmask 781312
      %315 = vst.msk [vmem:[%s228] sm:$0xf] %vm314, %v310
      %316 = vst.msk [vmem:[%s228 + $0x4] sm:$0xf] %vm314, %v311
      %s317 = smul.u32 2, %s19
      %p318 = scmp.lt.s32.totalorder %s18, 1
      %s319 = scalar_select %p318, %s18, 1
      %p320 = scmp.lt.s32.totalorder %s317, 1
      %s321 = scalar_select %p320, %s317, 1
      %s322 = smul.addr %s319, 2
      %s323 = sadd.s32 %s321, %s322
      %s324 = smul.addr %s323, 4
      %s325 = scalar_lea.vmem %s3, %s324
      // Predicated region
      $region33: #{word_attn_forward.3} parent=31 // pred_check
        %p326 = pneg %p124
      $region34: #{word_attn_forward.3} parent=31 // pred_check_branch
        %328 = sbr.rel (%p326) target = $region36
      $region35: #{word_attn_forward.3} parent=31 // pred_region
        %s329 = smul.u32 2, %s19
      $region36: #{word_attn_forward.3} parent=31 // pred_fallthru
        _
    $region32: #{word_attn_forward.3} parent=5 // pred_fallthru
      _
    %p330 = scmp.le.s32.totalorder 2, %s9
    // Predicated region
    $region37: #{word_attn_forward.3} parent=5 // pred_check
      %p331 = pneg %p330
    $region38: #{word_attn_forward.3} parent=5 // pred_check_branch
      %333 = sbr.rel (%p331) target = $region40
    $region39: #{word_attn_forward.3} parent=5 // pred_region
      %s334 = ssub.s32 %s9, 2
      // Predicated region
      $region41: #{word_attn_forward.3} parent=39 // pred_check
        %p335 = pneg %p130
      $region42: #{word_attn_forward.3} parent=39 // pred_check_branch
        %337 = sbr.rel (%p335) target = $region44
      $region43: #{word_attn_forward.3} parent=39 // pred_region
        %s338 = smul.u32 2, %s21
        %p339 = scmp.lt.s32.totalorder %s20, 1
        %s340 = scalar_select %p339, %s20, 1
        %p341 = scmp.lt.s32.totalorder %s338, 1
        %s342 = scalar_select %p341, %s338, 1
        %s343 = smul.addr %s340, 2
        %s344 = sadd.s32 %s342, %s343
        %s345 = smul.addr %s344, 4
        %s346 = scalar_lea.vmem %s3, %s345
      $region44: #{word_attn_forward.3} parent=39 // pred_fallthru
        _
    $region40: #{word_attn_forward.3} parent=5 // pred_fallthru
      _
  $region6: #{word_attn_forward.3} parent=0 // loop_footer
    %s13 = sadd.s32 1, %s9
  $region7: #{word_attn_forward.3} parent=0 // loop_footer_branch
    %8 = sbr.rel target = $region3
  $region8: #{word_attn_forward.3} parent=0 // loop_exit
    _

// kernel: word_attn_forward.5
$region0: #{word_attn_forward.5}
  #allocation0 [shape = 'u32[]', space=smem, size = 0x4, offset = 0x4, fixed_abs, tag = 'smem constant byte address 0x4 - core index']
  #allocation1 [shape = 'u32[144,128]{1,0:T(1,128)}', space=vmem, size = 0x12000, scoped, tag = 'internal scratch']
  #allocation2 [shape = 'f32[2,32]{1,0:T(2,128)}', space=vmem, size = 0x400, scoped, tag = 'scratch operand']
  #allocation3 [shape = 'f32[2,32]{1,0:T(2,128)}', space=vmem, size = 0x400, scoped, tag = 'scratch operand']
  #allocation4 [shape = 'f32[2,1]{1,0:T(2,128)}', space=vmem, size = 0x400, scoped, tag = 'scratch operand']
  %s0 = inlined_call_operand.vmem [shape: bf16[16,32], index: 0, kind: input, shape index: {}]
  %s1 = inlined_call_operand.vmem [shape: bf16[16,32], index: 1, kind: input, shape index: {}]
  %s2 = inlined_call_operand.vmem [shape: bf16[2,32,64], index: 2, kind: input, shape index: {}]
  %s3 = inlined_call_operand.vmem [shape: f32[1,64], index: 3, kind: input, shape index: {}]
  %s4 = inlined_call_operand.vmem [shape: f32[1,64], index: 4, kind: input, shape index: {}]
  %s5 = inlined_call_operand.hbm [shape: f32[2,64], index: 5, kind: output, shape index: {}]
  %s6 = sld [smem:[#allocation0]]
  $region38: #{word_attn_forward.5} parent=0
    _
  %s8 = ssub.s32 1, %s6
  %s9 = scalar_select 0, %s8, %s6
  $region1: #{word_attn_forward.5} parent=0
    #allocation5 [shape = 'u8[1024]{0}', space=vmem, size = 0x400, scoped, tag = 'output window, operand 0, single buffered']
    #allocation6 [shape = 's32[1]{0}', space=sflag, size = 0x4, scoped, tag = 'scoped memory for word_attn_forward.5']
    %10 = vsyncpa [#allocation6], 0
    // Predicated region
    $region2: #{word_attn_forward.5} parent=1 // pred_check
      _
    $region3: #{word_attn_forward.5} parent=1 // pred_check_branch
      %12 = sbr.rel (0) target = $region5
    $region4: #{word_attn_forward.5} parent=1 // pred_region
      _
    $region5: #{word_attn_forward.5} parent=1 // pred_fallthru
      _
    // Predicated region
    $region6: #{word_attn_forward.5} parent=1 // pred_check
      _
    $region7: #{word_attn_forward.5} parent=1 // pred_check_branch
      %14 = sbr.rel (0) target = $region9
    $region8: #{word_attn_forward.5} parent=1 // pred_region
      _
    $region9: #{word_attn_forward.5} parent=1 // pred_fallthru
      _
    // Predicated region
    $region10: #{word_attn_forward.5} parent=1 // pred_check
      _
    $region11: #{word_attn_forward.5} parent=1 // pred_check_branch
      %16 = sbr.rel (0) target = $region13
    $region12: #{word_attn_forward.5} parent=1 // pred_region
      _
    $region13: #{word_attn_forward.5} parent=1 // pred_fallthru
      _
    // Predicated region
    $region14: #{word_attn_forward.5} parent=1 // pred_check
      _
    $region15: #{word_attn_forward.5} parent=1 // pred_check_branch
      %18 = sbr.rel (0) target = $region17
    $region16: #{word_attn_forward.5} parent=1 // pred_region
      _
    $region17: #{word_attn_forward.5} parent=1 // pred_fallthru
      _
    // Predicated region
    $region18: #{word_attn_forward.5} parent=1 // pred_check
      _
    $region19: #{word_attn_forward.5} parent=1 // pred_check_branch
      %20 = sbr.rel (0) target = $region21
    $region20: #{word_attn_forward.5} parent=1 // pred_region
      _
    $region21: #{word_attn_forward.5} parent=1 // pred_fallthru
      _
    %p22 = scmp.eq.s32.totalorder 0, 0
    // Predicated region
    $region22: #{word_attn_forward.5} parent=1 // pred_check
      %p23 = pneg %p22
    $region23: #{word_attn_forward.5} parent=1 // pred_check_branch
      %25 = sbr.rel (%p23) target = $region25
    $region24: #{word_attn_forward.5} parent=1 // pred_region
      %vm26 = vcmask 254976
      %27 = vst.msk [vmem:[#allocation2] sm:$0x3] %vm26, 0.0
      %28 = vst.msk [vmem:[#allocation3] sm:$0x3] %vm26, 0.0
      %vm29 = vcmask 1024
      %30 = vst.msk [vmem:[#allocation4] sm:$0x3] %vm29, 0.0
    $region25: #{word_attn_forward.5} parent=1 // pred_fallthru
      _
    %v31 = vld [vmem:[%s0] sm:$0xf]
    %v32 = vld [vmem:[%s0 + $0x4] sm:$0xf]
    %v33 = vld [vmem:[%s1] sm:$0xf]
    %v34 = vld [vmem:[%s1 + $0x4] sm:$0xf]
    %v35 = vld [vmem:[%s2] sm:$0xf]
    %v36 = vld [vmem:[%s2 + $0x4] sm:$0xf]
    %v37 = vld [vmem:[%s2 + $0x8] sm:$0xf]
    %v38 = vld [vmem:[%s2 + $0xc] sm:$0xf]
    %s39 = scalar_lea.vmem %s2, 16
    %v40 = vld [vmem:[%s39] sm:$0xf]
    %v41 = vld [vmem:[%s39 + $0x4] sm:$0xf]
    %v42 = vld [vmem:[%s39 + $0x8] sm:$0xf]
    %v43 = vld [vmem:[%s39 + $0xc] sm:$0xf]
    %v46 = vunpack.c.l.b16 %v33
    %v47 = vunpack.c.l.b16 %v34
    %v48 = vpack.c.b16 %v47, %v46
    %v53 = vunpack.c.l.b16 %v40
    %v54 = vunpack.c.l.b16 %v41
    %v55 = vunpack.c.l.b16 %v42
    %v56 = vunpack.c.l.b16 %v43
    %v57 = vpack.c.b16 %v54, %v53
    %v58 = vpack.c.b16 %v56, %v55
    %vm61 = vcmask 261120
    %v63 = vsel %vm61, %v48, 0
    %65 = vmatprep.subr.bf16.mxu0 0
    %66 = vmatpush1.bf16.msra.mxu0 %v57
    %67 = vmatprep.subr.bf16.mxu0 0
    %68 = vmatpush1.bf16.msra.mxu0 %v58
    %69 = vmatprep.subr.bf16.mxu0 0
    %70 = vmatpush1.bf16.msra.mxu0 0
    %71 = vmatprep.subr.bf16.mxu0 0
    %72 = vmatpush1.bf16.msra.mxu0 0
    %73 = vmatprep.subr.bf16.mxu0 0
    %74 = vmatpush1.bf16.msra.mxu0 0
    %75 = vmatprep.subr.bf16.mxu0 0
    %76 = vmatpush1.bf16.msra.mxu0 0
    %77 = vmatprep.subr.bf16.mxu0 0
    %78 = vmatpush1.bf16.msra.mxu0 0
    %79 = vmatprep.subr.bf16.mxu0 0
    %80 = vmatpush1.bf16.msra.mxu0 0
    %81 = vmatprep.subr.bf16.mxu0 0
    %82 = vmatpush1.bf16.msra.mxu0 0
    %83 = vmatprep.subr.bf16.mxu0 0
    %84 = vmatpush1.bf16.msra.mxu0 0
    %85 = vmatprep.subr.bf16.mxu0 0
    %86 = vmatpush1.bf16.msra.mxu0 0
    %87 = vmatprep.subr.bf16.mxu0 0
    %88 = vmatpush1.bf16.msra.mxu0 0
    %89 = vmatprep.subr.bf16.mxu0 0
    %90 = vmatpush1.bf16.msra.mxu0 0
    %91 = vmatprep.subr.bf16.mxu0 0
    %92 = vmatpush1.bf16.msra.mxu0 0
    %93 = vmatprep.subr.bf16.mxu0 0
    %94 = vmatpush1.bf16.msra.mxu0 0
    %95 = vmatprep.subr.bf16.mxu0 0
    %96 = vmatpush1.bf16.msra.mxu0 0
    %97 = vmatprep.mubr.bf16.mxu0 0
    %98 = vmatmul.mubr.bf16.gmra.mrb[0].mxu0 %v63
    %v99 = vpop.f32.mrb[0].mxu0
    %v100 = vadd.f32 0.0, %v99
    %v101 = vpop.f32.mrb[0].mxu0
    %v102 = vpop.f32.mrb[0].mxu0
    %v103 = vadd.f32 0.0, %v102
    %v104 = vpop.f32.mrb[0].mxu0
    %105 = vdwg.mxu0
    %v108 = vunpack.c.l.b16 %v31
    %v109 = vunpack.c.l.b16 %v32
    %v110 = vpack.c.b16 %v109, %v108
    %v115 = vunpack.c.l.b16 %v35
    %v116 = vunpack.c.l.b16 %v36
    %v117 = vunpack.c.l.b16 %v37
    %v118 = vunpack.c.l.b16 %v38
    %v119 = vpack.c.b16 %v116, %v115
    %v120 = vpack.c.b16 %v118, %v117
    %v124 = vsel %vm61, %v110, 0
    %126 = vmatprep.subr.bf16.mxu0 0
    %127 = vmatpush1.bf16.msra.mxu0 %v119
    %128 = vmatprep.subr.bf16.mxu0 0
    %129 = vmatpush1.bf16.msra.mxu0 %v120
    %130 = vmatprep.subr.bf16.mxu0 0
    %131 = vmatpush1.bf16.msra.mxu0 0
    %132 = vmatprep.subr.bf16.mxu0 0
    %133 = vmatpush1.bf16.msra.mxu0 0
    %134 = vmatprep.subr.bf16.mxu0 0
    %135 = vmatpush1.bf16.msra.mxu0 0
    %136 = vmatprep.subr.bf16.mxu0 0
    %137 = vmatpush1.bf16.msra.mxu0 0
    %138 = vmatprep.subr.bf16.mxu0 0
    %139 = vmatpush1.bf16.msra.mxu0 0
    %140 = vmatprep.subr.bf16.mxu0 0
    %141 = vmatpush1.bf16.msra.mxu0 0
    %142 = vmatprep.subr.bf16.mxu0 0
    %143 = vmatpush1.bf16.msra.mxu0 0
    %144 = vmatprep.subr.bf16.mxu0 0
    %145 = vmatpush1.bf16.msra.mxu0 0
    %146 = vmatprep.subr.bf16.mxu0 0
    %147 = vmatpush1.bf16.msra.mxu0 0
    %148 = vmatprep.subr.bf16.mxu0 0
    %149 = vmatpush1.bf16.msra.mxu0 0
    %150 = vmatprep.subr.bf16.mxu0 0
    %151 = vmatpush1.bf16.msra.mxu0 0
    %152 = vmatprep.subr.bf16.mxu0 0
    %153 = vmatpush1.bf16.msra.mxu0 0
    %154 = vmatprep.subr.bf16.mxu0 0
    %155 = vmatpush1.bf16.msra.mxu0 0
    %156 = vmatprep.subr.bf16.mxu0 0
    %157 = vmatpush1.bf16.msra.mxu0 0
    %158 = vmatprep.mubr.bf16.mxu0 0
    %159 = vmatmul.mubr.bf16.gmra.mrb[0].mxu0 %v124
    %v160 = vpop.f32.mrb[0].mxu0
    %v161 = vadd.f32 %v100, %v160
    %v162 = vpop.f32.mrb[0].mxu0
    %v163 = vpop.f32.mrb[0].mxu0
    %v164 = vadd.f32 %v103, %v163
    %v165 = vpop.f32.mrb[0].mxu0
    %166 = vdwg.mxu0
    %v167 = vld [vmem:[%s3] sm:$0x1]
    %v169 = vlaneseq
    %v170 = vshrl.u32 %v169, 7
    %v171 = vsub.s32 0, %v170
    %v172 = vrot.slane %v167, %v171
    %v174 = vadd.f32 %v161, %v172
    %v175 = vadd.f32 %v164, %v172
    %v176 = vtanh.pop %v174
    %v177 = vtanh.pop %v175
    %v178 = vld [vmem:[%s4] sm:$0x1]
    %v180 = vlaneseq
    %v181 = vshrl.u32 %v180, 7
    %v182 = vsub.s32 0, %v181
    %v183 = vrot.slane %v178, %v182
    %v185 = vmul.f32 %v176, %v183
    %v186 = vmul.f32 %v177, %v183
    %vm187 = vcmask 523264
    %v188 = vsel %vm187, %v185, 0.0
    %189 = vadd.xlane.f32.xlu0 %v188
    %v190 = vpop.xlane.xlu0 %189
    %v191 = vsel %vm187, %v186, 0.0
    %192 = vadd.xlane.f32.xlu0 %v191
    %v193 = vpop.xlane.xlu0 %192
    %v194 = vtanh.pop %v190
    %v195 = vtanh.pop %v193
    %v196 = vmul.f32 %v194, 1.442695
    %v197 = vpow.pop %v196
    %v198 = vmul.f32 %v195, 1.442695
    %v199 = vpow.pop %v198
    %v200 = vlaneseq
    %v201 = vshrl.u32 %v200, 7
    %v202 = vlaneseq
    %v203 = vand.u32 %v202, 127
    %vm204 = vcmp.lt.s32.totalorder %v203, 0
    %v205 = vsub.s32 0, %v203
    %v206 = vsel %vm204, %v205, %v203
    %v207 = vshrl.u32 %v206, 1
    %v208 = vand.u32 %v206, 1
    %v209 = vsub.s32 0, %v208
    %v210 = vsel %vm204, %v209, %v208
    %vm211 = vcmp.ne.s32.totalorder %v210, 0
    %vm212 = vcmp.lt.s32.totalorder %v210, 0
    %vm213 = vmand %vm212, %vm211
    %v214 = vadd.s32 %v210, 2
    %v215 = vsel %vm213, %v214, %v210
    %vm216 = vcmp.eq.s32.totalorder %v215, %v201
    %v217 = vsel %vm216, 1.0, 0.0
    %v218 = vld [vmem:[#allocation2] sm:$0x3]
    %v219 = vunpack.c.l.bf16 %v31
    %v220 = vunpack.c.l.bf16 %v32
    %v221 = vmul.f32 %v197, %v219
    %v222 = vmul.f32 %v199, %v220
    %vm223 = vcmask 130048
    %v225 = vsel %vm223, %v217, 0
    %227 = vmatprep.subr.mxu0 0.0
    %228 = vmatpush1.msra.mxu0 %v221
    %229 = vmatprep.subr.mxu0 0.0
    %230 = vmatpush1.msra.mxu0 %v222
    %231 = vmatprep.subr.mxu0 0.0
    %232 = vmatpush1.msra.mxu0 0.0
    %233 = vmatprep.subr.mxu0 0.0
    %234 = vmatpush1.msra.mxu0 0.0
    %235 = vmatprep.subr.mxu0 0.0
    %236 = vmatpush1.msra.mxu0 0.0
    %237 = vmatprep.subr.mxu0 0.0
    %238 = vmatpush1.msra.mxu0 0.0
    %239 = vmatprep.subr.mxu0 0.0
    %240 = vmatpush1.msra.mxu0 0.0
    %241 = vmatprep.subr.mxu0 0.0
    %242 = vmatpush1.msra.mxu0 0.0
    %243 = vmatprep.subr.mxu0 0.0
    %244 = vmatpush1.msra.mxu0 0.0
    %245 = vmatprep.subr.mxu0 0.0
    %246 = vmatpush1.msra.mxu0 0.0
    %247 = vmatprep.subr.mxu0 0.0
    %248 = vmatpush1.msra.mxu0 0.0
    %249 = vmatprep.subr.mxu0 0.0
    %250 = vmatpush1.msra.mxu0 0.0
    %251 = vmatprep.subr.mxu0 0.0
    %252 = vmatpush1.msra.mxu0 0.0
    %253 = vmatprep.subr.mxu0 0.0
    %254 = vmatpush1.msra.mxu0 0.0
    %255 = vmatprep.subr.mxu0 0.0
    %256 = vmatpush1.msra.mxu0 0.0
    %257 = vmatprep.subr.mxu0 0.0
    %258 = vmatpush1.msra.mxu0 0.0
    %259 = vmatprep.subr.mxu0 0.0
    %260 = vmatpush1.msra.mxu0 0.0
    %261 = vmatprep.subr.mxu0 0.0
    %262 = vmatpush1.msra.mxu0 0.0
    %263 = vmatprep.subr.mxu0 0.0
    %264 = vmatpush1.msra.mxu0 0.0
    %265 = vmatprep.subr.mxu0 0.0
    %266 = vmatpush1.msra.mxu0 0.0
    %267 = vmatprep.subr.mxu0 0.0
    %268 = vmatpush1.msra.mxu0 0.0
    %269 = vmatprep.subr.mxu0 0.0
    %270 = vmatpush1.msra.mxu0 0.0
    %271 = vmatprep.subr.mxu0 0.0
    %272 = vmatpush1.msra.mxu0 0.0
    %273 = vmatprep.subr.mxu0 0.0
    %274 = vmatpush1.msra.mxu0 0.0
    %275 = vmatprep.subr.mxu0 0.0
    %276 = vmatpush1.msra.mxu0 0.0
    %277 = vmatprep.subr.mxu0 0.0
    %278 = vmatpush1.msra.mxu0 0.0
    %279 = vmatprep.subr.mxu0 0.0
    %280 = vmatpush1.msra.mxu0 0.0
    %281 = vmatprep.subr.mxu0 0.0
    %282 = vmatpush1.msra.mxu0 0.0
    %283 = vmatprep.subr.mxu0 0.0
    %284 = vmatpush1.msra.mxu0 0.0
    %285 = vmatprep.subr.mxu0 0.0
    %286 = vmatpush1.msra.mxu0 0.0
    %287 = vmatprep.subr.mxu0 0.0
    %288 = vmatpush1.msra.mxu0 0.0
    %289 = vmatprep.subr.mxu0 0.0
    %290 = vmatpush1.msra.mxu0 0.0
    %291 = vmatprep.mubr.f32.mxu0 0.0
    %292 = vmatmul.mubr.f32.gmra.mrb[0].mxu0 %v225
    %v293 = vpop.f32.mrb[0].mxu0
    %v294 = vadd.f32 0.0, %v293
    %v295 = vpop.f32.mrb[0].mxu0
    %296 = vdwg.mxu0
    %v297 = vadd.f32 %v218, %v294
    %vm298 = vcmask 254976
    %299 = vst.msk [vmem:[#allocation2] sm:$0x3] %vm298, %v297
    %v300 = vld [vmem:[#allocation3] sm:$0x3]
    %v301 = vunpack.c.l.bf16 %v33
    %v302 = vunpack.c.l.bf16 %v34
    %v303 = vmul.f32 %v197, %v301
    %v304 = vmul.f32 %v199, %v302
    %305 = vmatprep.subr.mxu0 0.0
    %306 = vmatpush1.msra.mxu0 %v303
    %307 = vmatprep.subr.mxu0 0.0
    %308 = vmatpush1.msra.mxu0 %v304
    %309 = vmatprep.subr.mxu0 0.0
    %310 = vmatpush1.msra.mxu0 0.0
    %311 = vmatprep.subr.mxu0 0.0
    %312 = vmatpush1.msra.mxu0 0.0
    %313 = vmatprep.subr.mxu0 0.0
    %314 = vmatpush1.msra.mxu0 0.0
    %315 = vmatprep.subr.mxu0 0.0
    %316 = vmatpush1.msra.mxu0 0.0
    %317 = vmatprep.subr.mxu0 0.0
    %318 = vmatpush1.msra.mxu0 0.0
    %319 = vmatprep.subr.mxu0 0.0
    %320 = vmatpush1.msra.mxu0 0.0
    %321 = vmatprep.subr.mxu0 0.0
    %322 = vmatpush1.msra.mxu0 0.0
    %323 = vmatprep.subr.mxu0 0.0
    %324 = vmatpush1.msra.mxu0 0.0
    %325 = vmatprep.subr.mxu0 0.0
    %326 = vmatpush1.msra.mxu0 0.0
    %327 = vmatprep.subr.mxu0 0.0
    %328 = vmatpush1.msra.mxu0 0.0
    %329 = vmatprep.subr.mxu0 0.0
    %330 = vmatpush1.msra.mxu0 0.0
    %331 = vmatprep.subr.mxu0 0.0
    %332 = vmatpush1.msra.mxu0 0.0
    %333 = vmatprep.subr.mxu0 0.0
    %334 = vmatpush1.msra.mxu0 0.0
    %335 = vmatprep.subr.mxu0 0.0
    %336 = vmatpush1.msra.mxu0 0.0
    %337 = vmatprep.subr.mxu0 0.0
    %338 = vmatpush1.msra.mxu0 0.0
    %339 = vmatprep.subr.mxu0 0.0
    %340 = vmatpush1.msra.mxu0 0.0
    %341 = vmatprep.subr.mxu0 0.0
    %342 = vmatpush1.msra.mxu0 0.0
    %343 = vmatprep.subr.mxu0 0.0
    %344 = vmatpush1.msra.mxu0 0.0
    %345 = vmatprep.subr.mxu0 0.0
    %346 = vmatpush1.msra.mxu0 0.0
    %347 = vmatprep.subr.mxu0 0.0
    %348 = vmatpush1.msra.mxu0 0.0
    %349 = vmatprep.subr.mxu0 0.0
    %350 = vmatpush1.msra.mxu0 0.0
    %351 = vmatprep.subr.mxu0 0.0
    %352 = vmatpush1.msra.mxu0 0.0
    %353 = vmatprep.subr.mxu0 0.0
    %354 = vmatpush1.msra.mxu0 0.0
    %355 = vmatprep.subr.mxu0 0.0
    %356 = vmatpush1.msra.mxu0 0.0
    %357 = vmatprep.subr.mxu0 0.0
    %358 = vmatpush1.msra.mxu0 0.0
    %359 = vmatprep.subr.mxu0 0.0
    %360 = vmatpush1.msra.mxu0 0.0
    %361 = vmatprep.subr.mxu0 0.0
    %362 = vmatpush1.msra.mxu0 0.0
    %363 = vmatprep.subr.mxu0 0.0
    %364 = vmatpush1.msra.mxu0 0.0
    %365 = vmatprep.subr.mxu0 0.0
    %366 = vmatpush1.msra.mxu0 0.0
    %367 = vmatprep.subr.mxu0 0.0
    %368 = vmatpush1.msra.mxu0 0.0
    %369 = vmatprep.mubr.f32.mxu0 0.0
    %370 = vmatmul.mubr.f32.gmra.mrb[0].mxu0 %v225
    %v371 = vpop.f32.mrb[0].mxu0
    %v372 = vadd.f32 0.0, %v371
    %v373 = vpop.f32.mrb[0].mxu0
    %374 = vdwg.mxu0
    %v375 = vadd.f32 %v300, %v372
    %376 = vst.msk [vmem:[#allocation3] sm:$0x3] %vm298, %v375
    %v377 = vld [vmem:[#allocation4] sm:$0x3]
    %378 = vmatprep.subr.mxu0 0.0
    %379 = vmatpush1.msra.mxu0 %v197
    %380 = vmatprep.subr.mxu0 0.0
    %381 = vmatpush1.msra.mxu0 %v199
    %382 = vmatprep.subr.mxu0 0.0
    %383 = vmatpush1.msra.mxu0 0.0
    %384 = vmatprep.subr.mxu0 0.0
    %385 = vmatpush1.msra.mxu0 0.0
    %386 = vmatprep.subr.mxu0 0.0
    %387 = vmatpush1.msra.mxu0 0.0
    %388 = vmatprep.subr.mxu0 0.0
    %389 = vmatpush1.msra.mxu0 0.0
    %390 = vmatprep.subr.mxu0 0.0
    %391 = vmatpush1.msra.mxu0 0.0
    %392 = vmatprep.subr.mxu0 0.0
    %393 = vmatpush1.msra.mxu0 0.0
    %394 = vmatprep.subr.mxu0 0.0
    %395 = vmatpush1.msra.mxu0 0.0
    %396 = vmatprep.subr.mxu0 0.0
    %397 = vmatpush1.msra.mxu0 0.0
    %398 = vmatprep.subr.mxu0 0.0
    %399 = vmatpush1.msra.mxu0 0.0
    %400 = vmatprep.subr.mxu0 0.0
    %401 = vmatpush1.msra.mxu0 0.0
    %402 = vmatprep.subr.mxu0 0.0
    %403 = vmatpush1.msra.mxu0 0.0
    %404 = vmatprep.subr.mxu0 0.0
    %405 = vmatpush1.msra.mxu0 0.0
    %406 = vmatprep.subr.mxu0 0.0
    %407 = vmatpush1.msra.mxu0 0.0
    %408 = vmatprep.subr.mxu0 0.0
    %409 = vmatpush1.msra.mxu0 0.0
    %410 = vmatprep.subr.mxu0 0.0
    %411 = vmatpush1.msra.mxu0 0.0
    %412 = vmatprep.subr.mxu0 0.0
    %413 = vmatpush1.msra.mxu0 0.0
    %414 = vmatprep.subr.mxu0 0.0
    %415 = vmatpush1.msra.mxu0 0.0
    %416 = vmatprep.subr.mxu0 0.0
    %417 = vmatpush1.msra.mxu0 0.0
    %418 = vmatprep.subr.mxu0 0.0
    %419 = vmatpush1.msra.mxu0 0.0
    %420 = vmatprep.subr.mxu0 0.0
    %421 = vmatpush1.msra.mxu0 0.0
    %422 = vmatprep.subr.mxu0 0.0
    %423 = vmatpush1.msra.mxu0 0.0
    %424 = vmatprep.subr.mxu0 0.0
    %425 = vmatpush1.msra.mxu0 0.0
    %426 = vmatprep.subr.mxu0 0.0
    %427 = vmatpush1.msra.mxu0 0.0
    %428 = vmatprep.subr.mxu0 0.0
    %429 = vmatpush1.msra.mxu0 0.0
    %430 = vmatprep.subr.mxu0 0.0
    %431 = vmatpush1.msra.mxu0 0.0
    %432 = vmatprep.subr.mxu0 0.0
    %433 = vmatpush1.msra.mxu0 0.0
    %434 = vmatprep.subr.mxu0 0.0
    %435 = vmatpush1.msra.mxu0 0.0
    %436 = vmatprep.subr.mxu0 0.0
    %437 = vmatpush1.msra.mxu0 0.0
    %438 = vmatprep.subr.mxu0 0.0
    %439 = vmatpush1.msra.mxu0 0.0
    %440 = vmatprep.subr.mxu0 0.0
    %441 = vmatpush1.msra.mxu0 0.0
    %442 = vmatprep.mubr.f32.mxu0 0.0
    %443 = vmatmul.mubr.f32.gmra.mrb[0].mxu0 %v225
    %v444 = vpop.f32.mrb[0].mxu0
    %v445 = vadd.f32 0.0, %v444
    %v446 = vpop.f32.mrb[0].mxu0
    %447 = vdwg.mxu0
    %v448 = vadd.f32 %v377, %v445
    %vm449 = vcmask 1024
    %450 = vst.msk [vmem:[#allocation4] sm:$0x3] %vm449, %v448
    // Predicated region
    $region26: #{word_attn_forward.5} parent=1 // pred_check
      %p451 = pneg %p22
    $region27: #{word_attn_forward.5} parent=1 // pred_check_branch
      %453 = sbr.rel (%p451) target = $region29
    $region28: #{word_attn_forward.5} parent=1 // pred_region
      %v454 = vld [vmem:[#allocation4] sm:$0x3]
      %v455 = vrcp.pop %v454
      %v456 = vmul.f32 1.0, %v455
      %v457 = vld [vmem:[#allocation2] sm:$0x3]
      %459 = vset.pattern.permute.xlu0 0
      %460 = vperm.xlu0 %459, %v456
      %v461 = vpop.permute.xlu0 %460
      %v463 = vmul.f32 %v457, %v461
      %v464 = vld [vmem:[#allocation3] sm:$0x3]
      %v465 = vmul.f32 %v464, %v461
      %467 = vrot.lane.b32.xlu0 %v465, 32
      %v468 = vpop.permute.xlu0 %467
      %v470 = vsel %vm61, %v463, %v468
      %vm471 = vcmask 517120
      %472 = vst.msk [vmem:[#allocation5] sm:$0x3] %vm471, %v470
    $region29: #{word_attn_forward.5} parent=1 // pred_fallthru
      _
    // Predicated region
    $region30: #{word_attn_forward.5} parent=1 // pred_check
      _
    $region31: #{word_attn_forward.5} parent=1 // pred_check_branch
      %474 = sbr.rel (0) target = $region33
    $region32: #{word_attn_forward.5} parent=1 // pred_region
      %s476 = ssub.s32 32, 32
      %477 = vsyncadd [#allocation6], %s476
      %s479 = sshll.u32 [#allocation5], 4
      %s480 = int_to_ptr.vmem [resolvable:$true] %s479
      %482 = dma.vmem_to_hbm [thread:$0]  %s480, 32, %s5, [#allocation6]
    $region33: #{word_attn_forward.5} parent=1 // pred_fallthru
      _
    // Predicated region
    $region34: #{word_attn_forward.5} parent=1 // pred_check
      _
    $region35: #{word_attn_forward.5} parent=1 // pred_check_branch
      %484 = sbr.rel (0) target = $region37
    $region36: #{word_attn_forward.5} parent=1 // pred_region
      %485 = dma.done [#allocation6], 32
    $region37: #{word_attn_forward.5} parent=1 // pred_fallthru
      _
    %486 = vsyncpa [#allocation6], 1

// kernel: word_attn_forward.4
$region0: #{word_attn_forward.4}
  #allocation0 [shape = 'u32[]', space=smem, size = 0x4, offset = 0x4, fixed_abs, tag = 'smem constant byte address 0x4 - core index']
  #allocation1 [shape = 'u32[144,128]{1,0:T(1,128)}', space=vmem, size = 0x12000, scoped, tag = 'internal scratch']
  #allocation2 [shape = 'f32[2,32]{1,0:T(2,128)}', space=vmem, size = 0x400, scoped, tag = 'scratch operand']
  #allocation3 [shape = 'f32[2,32]{1,0:T(2,128)}', space=vmem, size = 0x400, scoped, tag = 'scratch operand']
  %s0 = inlined_call_operand.vmem [shape: bf16[2,8,2,96], index: 0, kind: input, shape index: {}, may-alias: {0,1}]
  %s1 = inlined_call_operand.vmem [shape: bf16[2,8,2,96], index: 1, kind: input, shape index: {}, may-alias: {0,1}]
  %s2 = inlined_call_operand.vmem [shape: bf16[2,32,96], index: 2, kind: input, shape index: {}]
  %s3 = inlined_call_operand.vmem [shape: f32[2,1,96], index: 3, kind: input, shape index: {}]
  %s4 = inlined_call_operand.vmem [shape: f32[2,2,32], index: 4, kind: input, shape index: {}]
  %s5 = inlined_call_operand.vmem [shape: bf16[8,2,32], index: 5, kind: output, shape index: {0}]
  %s6 = inlined_call_operand.vmem [shape: bf16[8,2,32], index: 6, kind: output, shape index: {1}]
  %s7 = inlined_call_operand.hbm [shape: f32[2,2,32], index: 7, kind: output, shape index: {2}]
  %8 = xla_tuple %s5, %s6, %s7
  %s9 = sld [smem:[#allocation0]]
  $region54: #{word_attn_forward.4} parent=0
    _
  %s11 = ssub.s32 1, %s9
  %s12 = scalar_select 0, %s11, %s9
  $region1: #{word_attn_forward.4} parent=0
    #allocation4 [shape = 'u8[2048]{0}', space=vmem, size = 0x800, scoped, tag = 'output window, operand 2, single buffered']
    #allocation5 [shape = 's32[1]{0}', space=sflag, size = 0x4, scoped, tag = 'scoped memory for word_attn_forward.4']
    %13 = vsyncpa [#allocation5], 0
    // Predicated region
    $region2: #{word_attn_forward.4} parent=1 // pred_check
      _
    $region3: #{word_attn_forward.4} parent=1 // pred_check_branch
      %15 = sbr.rel (0) target = $region5
    $region4: #{word_attn_forward.4} parent=1 // pred_region
      _
    $region5: #{word_attn_forward.4} parent=1 // pred_fallthru
      _
    // Predicated region
    $region6: #{word_attn_forward.4} parent=1 // pred_check
      _
    $region7: #{word_attn_forward.4} parent=1 // pred_check_branch
      %17 = sbr.rel (0) target = $region9
    $region8: #{word_attn_forward.4} parent=1 // pred_region
      %s18 = ssub.s32 0, 0
      %s19 = smul.u32 8, %s18
      %p20 = scmp.lt.s32.totalorder %s19, 7
      %s21 = scalar_select %p20, %s19, 7
      %s22 = sadd.s32 %s21, 8
      %s23 = scalar_lea.vmem %s1, %s22
      %s24 = ssub.s32 0, 0
      %s25 = smul.u32 8, %s24
    $region9: #{word_attn_forward.4} parent=1 // pred_fallthru
      _
    // Predicated region
    $region10: #{word_attn_forward.4} parent=1 // pred_check
      _
    $region11: #{word_attn_forward.4} parent=1 // pred_check_branch
      %27 = sbr.rel (0) target = $region13
    $region12: #{word_attn_forward.4} parent=1 // pred_region
      _
    $region13: #{word_attn_forward.4} parent=1 // pred_fallthru
      _
    // Predicated region
    $region14: #{word_attn_forward.4} parent=1 // pred_check
      _
    $region15: #{word_attn_forward.4} parent=1 // pred_check_branch
      %29 = sbr.rel (0) target = $region17
    $region16: #{word_attn_forward.4} parent=1 // pred_region
      _
    $region17: #{word_attn_forward.4} parent=1 // pred_fallthru
      _
    // Predicated region
    $region18: #{word_attn_forward.4} parent=1 // pred_check
      _
    $region19: #{word_attn_forward.4} parent=1 // pred_check_branch
      %31 = sbr.rel (0) target = $region21
    $region20: #{word_attn_forward.4} parent=1 // pred_region
      _
    $region21: #{word_attn_forward.4} parent=1 // pred_fallthru
      _
    %s32 = ssub.s32 0, 0
    %s33 = smul.u32 8, %s32
    %p34 = scmp.lt.s32.totalorder %s33, 7
    %s35 = scalar_select %p34, %s33, 7
    %s36 = sadd.s32 %s35, 8
    %s37 = scalar_lea.vmem %s1, %s36
    %s38 = ssub.s32 0, 0
    %s39 = smul.u32 8, %s38
    %p40 = scmp.lt.s32.totalorder %s39, 7
    %s41 = scalar_select %p40, %s39, 7
    %s42 = scalar_lea.vmem %s6, %s41
    %s43 = ssub.s32 0, 0
    %s44 = smul.u32 8, %s43
    %p45 = scmp.lt.s32.totalorder %s44, 7
    %s46 = scalar_select %p45, %s44, 7
    %s47 = sadd.s32 %s46, 8
    %s48 = scalar_lea.vmem %s1, %s47
    %s49 = ssub.s32 0, 0
    %s50 = smul.u32 8, %s49
    %s51 = ssub.s32 0, 0
    %s52 = smul.u32 8, %s51
    %p53 = scmp.lt.s32.totalorder %s52, 7
    %s54 = scalar_select %p53, %s52, 7
    %s55 = scalar_lea.vmem %s6, %s54
    %s56 = ssub.s32 0, 0
    %s57 = smul.u32 8, %s56
    %p59 = scmp.eq.s32.totalorder 0, 0
    // Predicated region
    $region22: #{word_attn_forward.4} parent=1 // pred_check
      %p60 = pneg %p59
    $region23: #{word_attn_forward.4} parent=1 // pred_check_branch
      %62 = sbr.rel (%p60) target = $region25
    $region24: #{word_attn_forward.4} parent=1 // pred_region
      %v63 = vld [vmem:[%s4] sm:$0x3]
      %vm64 = vcmask 254976
      %65 = vst.msk [vmem:[#allocation2] sm:$0x3] %vm64, %v63
      %s66 = scalar_lea.vmem %s4, 2
      %v67 = vld [vmem:[%s66] sm:$0x3]
      %68 = vst.msk [vmem:[#allocation3] sm:$0x3] %vm64, %v67
    $region25: #{word_attn_forward.4} parent=1 // pred_fallthru
      _
    %v69 = vld [vmem:[%s2] sm:$0xf]
    %v70 = vld [vmem:[%s2 + $0x4] sm:$0xf]
    %v71 = vld [vmem:[%s2 + $0x8] sm:$0xf]
    %v72 = vld [vmem:[%s2 + $0xc] sm:$0xf]
    %s73 = scalar_lea.vmem %s2, 16
    %v74 = vld [vmem:[%s73] sm:$0xf]
    %v75 = vld [vmem:[%s73 + $0x4] sm:$0xf]
    %v76 = vld [vmem:[%s73 + $0x8] sm:$0xf]
    %v77 = vld [vmem:[%s73 + $0xc] sm:$0xf]
    %v78 = vld [vmem:[%s3] sm:$0x1]
    %s79 = scalar_lea.vmem %s3, 1
    %v80 = vld [vmem:[%s79] sm:$0x1]
    %v81 = vld [vmem:[#allocation2] sm:$0x3]
    %v82 = vld [vmem:[#allocation3] sm:$0x3]
    %v83 = vld [vmem:[%s0] sm:$0x1]
    %v84 = vunpack.c.l.bf16 %v83
    %v85 = vpack.c.bf16 %v81, %v81
    %v87 = vlaneseq
    %v88 = vshrl.u32 %v87, 7
    %v89 = vsub.s32 0, %v88
    %v90 = vrot.slane %v78, %v89
    %v96 = vunpack.c.l.b16 %v69
    %v97 = vunpack.c.l.b16 %v70
    %v98 = vunpack.c.l.b16 %v71
    %v99 = vunpack.c.l.b16 %v72
    %v100 = vpack.c.b16 %v97, %v96
    %v101 = vpack.c.b16 %v99, %v98
    %vm104 = vcmask 261120
    %v106 = vsel %vm104, %v85, 0
    %108 = vmatprep.subr.bf16.mxu0 0
    %109 = vmatpush1.bf16.msra.mxu0 %v100
    %110 = vmatprep.subr.bf16.mxu0 0
    %111 = vmatpush1.bf16.msra.mxu0 %v101
    %112 = vmatprep.subr.bf16.mxu0 0
    %113 = vmatpush1.bf16.msra.mxu0 0
    %114 = vmatprep.subr.bf16.mxu0 0
    %115 = vmatpush1.bf16.msra.mxu0 0
    %116 = vmatprep.subr.bf16.mxu0 0
    %117 = vmatpush1.bf16.msra.mxu0 0
    %118 = vmatprep.subr.bf16.mxu0 0
    %119 = vmatpush1.bf16.msra.mxu0 0
    %120 = vmatprep.subr.bf16.mxu0 0
    %121 = vmatpush1.bf16.msra.mxu0 0
    %122 = vmatprep.subr.bf16.mxu0 0
    %123 = vmatpush1.bf16.msra.mxu0 0
    %124 = vmatprep.subr.bf16.mxu0 0
    %125 = vmatpush1.bf16.msra.mxu0 0
    %126 = vmatprep.subr.bf16.mxu0 0
    %127 = vmatpush1.bf16.msra.mxu0 0
    %128 = vmatprep.subr.bf16.mxu0 0
    %129 = vmatpush1.bf16.msra.mxu0 0
    %130 = vmatprep.subr.bf16.mxu0 0
    %131 = vmatpush1.bf16.msra.mxu0 0
    %132 = vmatprep.subr.bf16.mxu0 0
    %133 = vmatpush1.bf16.msra.mxu0 0
    %134 = vmatprep.subr.bf16.mxu0 0
    %135 = vmatpush1.bf16.msra.mxu0 0
    %136 = vmatprep.subr.bf16.mxu0 0
    %137 = vmatpush1.bf16.msra.mxu0 0
    %138 = vmatprep.subr.bf16.mxu0 0
    %139 = vmatpush1.bf16.msra.mxu0 0
    %140 = vmatprep.mubr.bf16.mxu0 0
    %141 = vmatmul.mubr.bf16.gmra.mrb[0].mxu0 %v106
    %v142 = vpop.f32.mrb[0].mxu0
    %v143 = vadd.f32 %v90, %v142
    %v144 = vpop.f32.mrb[0].mxu0
    %v145 = vpop.f32.mrb[0].mxu0
    %v146 = vpop.f32.mrb[0].mxu0
    %147 = vdwg.mxu0
    %v148 = vadd.f32 %v84, %v143
    %v149 = vxor.u32 %v148, 2147483648
    %v150 = vmul.f32 %v149, 1.442695
    %v151 = vpow.pop %v150
    %v152 = vadd.f32 %v151, 1.0
    %v153 = vrcp.pop %v152
    %v154 = vmul.f32 1.0, %v153
    %v157 = vunpack.c.l.s4 1983009808
    %v158 = vunpack.c.0.s8 %v157
    %v159 = vlaneseq
    %v160 = vshrl.u32 %v159, 7
    %v161 = vsub.s32 %v158, %v160
    %v162 = vrot.slane %v143, %v161
    %163 = vrot.lane.b32.xlu0 %v162, 64
    %v164 = vpop.permute.xlu0 %163
    %v166 = vmul.f32 %v154, %v164
    %168 = vrot.lane.b32.xlu0 %v166, 64
    %v169 = vpop.permute.xlu0 %168
    %v171 = vadd.f32 %v84, %v169
    %v172 = vtanh.pop %v171
    %v173 = vsub.f32 1.0, %v154
    %175 = vrot.lane.b32.xlu0 %v172, 96
    %v176 = vpop.permute.xlu0 %175
    %v178 = vmul.f32 %v173, %v176
    %v181 = vunpack.c.l.s4 1983009808
    %v182 = vunpack.c.0.s8 %v181
    %v183 = vlaneseq
    %v184 = vshrl.u32 %v183, 7
    %v185 = vsub.s32 %v182, %v184
    %v186 = vrot.slane %v81, %v185
    %187 = vrot.lane.b32.xlu0 %v186, 32
    %v188 = vpop.permute.xlu0 %187
    %v190 = vmul.f32 %v154, %v188
    %v191 = vadd.f32 %v178, %v190
    %s192 = scalar_lea.vmem %s48, 7
    %v193 = vld [vmem:[%s192] sm:$0x1]
    %v194 = vunpack.c.l.bf16 %v193
    %v195 = vpack.c.bf16 %v82, %v82
    %v197 = vlaneseq
    %v198 = vshrl.u32 %v197, 7
    %v199 = vsub.s32 0, %v198
    %v200 = vrot.slane %v80, %v199
    %v206 = vunpack.c.l.b16 %v74
    %v207 = vunpack.c.l.b16 %v75
    %v208 = vunpack.c.l.b16 %v76
    %v209 = vunpack.c.l.b16 %v77
    %v210 = vpack.c.b16 %v207, %v206
    %v211 = vpack.c.b16 %v209, %v208
    %v215 = vsel %vm104, %v195, 0
    %217 = vmatprep.subr.bf16.mxu0 0
    %218 = vmatpush1.bf16.msra.mxu0 %v210
    %219 = vmatprep.subr.bf16.mxu0 0
    %220 = vmatpush1.bf16.msra.mxu0 %v211
    %221 = vmatprep.subr.bf16.mxu0 0
    %222 = vmatpush1.bf16.msra.mxu0 0
    %223 = vmatprep.subr.bf16.mxu0 0
    %224 = vmatpush1.bf16.msra.mxu0 0
    %225 = vmatprep.subr.bf16.mxu0 0
    %226 = vmatpush1.bf16.msra.mxu0 0
    %227 = vmatprep.subr.bf16.mxu0 0
    %228 = vmatpush1.bf16.msra.mxu0 0
    %229 = vmatprep.subr.bf16.mxu0 0
    %230 = vmatpush1.bf16.msra.mxu0 0
    %231 = vmatprep.subr.bf16.mxu0 0
    %232 = vmatpush1.bf16.msra.mxu0 0
    %233 = vmatprep.subr.bf16.mxu0 0
    %234 = vmatpush1.bf16.msra.mxu0 0
    %235 = vmatprep.subr.bf16.mxu0 0
    %236 = vmatpush1.bf16.msra.mxu0 0
    %237 = vmatprep.subr.bf16.mxu0 0
    %238 = vmatpush1.bf16.msra.mxu0 0
    %239 = vmatprep.subr.bf16.mxu0 0
    %240 = vmatpush1.bf16.msra.mxu0 0
    %241 = vmatprep.subr.bf16.mxu0 0
    %242 = vmatpush1.bf16.msra.mxu0 0
    %243 = vmatprep.subr.bf16.mxu0 0
    %244 = vmatpush1.bf16.msra.mxu0 0
    %245 = vmatprep.subr.bf16.mxu0 0
    %246 = vmatpush1.bf16.msra.mxu0 0
    %247 = vmatprep.subr.bf16.mxu0 0
    %248 = vmatpush1.bf16.msra.mxu0 0
    %249 = vmatprep.mubr.bf16.mxu0 0
    %250 = vmatmul.mubr.bf16.gmra.mrb[0].mxu0 %v215
    %v251 = vpop.f32.mrb[0].mxu0
    %v252 = vadd.f32 %v200, %v251
    %v253 = vpop.f32.mrb[0].mxu0
    %v254 = vpop.f32.mrb[0].mxu0
    %v255 = vpop.f32.mrb[0].mxu0
    %256 = vdwg.mxu0
    %v257 = vadd.f32 %v194, %v252
    %v258 = vxor.u32 %v257, 2147483648
    %v259 = vmul.f32 %v258, 1.442695
    %v260 = vpow.pop %v259
    %v261 = vadd.f32 %v260, 1.0
    %v262 = vrcp.pop %v261
    %v263 = vmul.f32 1.0, %v262
    %v266 = vunpack.c.l.s4 1983009808
    %v267 = vunpack.c.0.s8 %v266
    %v268 = vlaneseq
    %v269 = vshrl.u32 %v268, 7
    %v270 = vsub.s32 %v267, %v269
    %v271 = vrot.slane %v252, %v270
    %272 = vrot.lane.b32.xlu0 %v271, 64
    %v273 = vpop.permute.xlu0 %272
    %v275 = vmul.f32 %v263, %v273
    %277 = vrot.lane.b32.xlu0 %v275, 64
    %v278 = vpop.permute.xlu0 %277
    %v280 = vadd.f32 %v194, %v278
    %v281 = vtanh.pop %v280
    %v282 = vsub.f32 1.0, %v263
    %284 = vrot.lane.b32.xlu0 %v281, 96
    %v285 = vpop.permute.xlu0 %284
    %v287 = vmul.f32 %v282, %v285
    %v290 = vunpack.c.l.s4 1983009808
    %v291 = vunpack.c.0.s8 %v290
    %v292 = vlaneseq
    %v293 = vshrl.u32 %v292, 7
    %v294 = vsub.s32 %v291, %v293
    %v295 = vrot.slane %v82, %v294
    %296 = vrot.lane.b32.xlu0 %v295, 32
    %v297 = vpop.permute.xlu0 %296
    %v299 = vmul.f32 %v263, %v297
    %v300 = vadd.f32 %v287, %v299
    %v301 = vpack.c.bf16 %v191, %v191
    %v304 = vunpack.c.l.s4 1966171168
    %v305 = vunpack.c.0.s8 %v304
    %v306 = vlaneseq
    %v307 = vshrl.u32 %v306, 7
    %v308 = vsub.s32 %v305, %v307
    %v309 = vrot.slane %v301, %v308
    %v311 = vunpack.c.l.s4 1966171168
    %v312 = vunpack.c.0.s8 %v311
    %v313 = vlaneseq
    %v314 = vshrl.u32 %v313, 7
    %v315 = vsub.s32 %v312, %v314
    %v316 = vrot.slane %v309, %v315
    %317 = vrot.lane.b32.xlu0 %v316, 96
    %v318 = vpop.permute.xlu0 %317
    %vm320 = vcmask 253952
    %321 = vst.msk [vmem:[%s5] sm:$0x1] %vm320, %v318
    %v322 = vpack.c.bf16 %v300, %v300
    %v325 = vunpack.c.l.s4 1966171168
    %v326 = vunpack.c.0.s8 %v325
    %v327 = vlaneseq
    %v328 = vshrl.u32 %v327, 7
    %v329 = vsub.s32 %v326, %v328
    %v330 = vrot.slane %v322, %v329
    %v332 = vunpack.c.l.s4 1966171168
    %v333 = vunpack.c.0.s8 %v332
    %v334 = vlaneseq
    %v335 = vshrl.u32 %v334, 7
    %v336 = vsub.s32 %v333, %v335
    %v337 = vrot.slane %v330, %v336
    %338 = vrot.lane.b32.xlu0 %v337, 96
    %v339 = vpop.permute.xlu0 %338
    %s341 = scalar_lea.vmem %s55, 7
    %342 = vst.msk [vmem:[%s341] sm:$0x1] %vm320, %v339
    %s343 = scalar_lea.vmem %s0, 1
    %v344 = vld [vmem:[%s343] sm:$0x1]
    %v345 = vunpack.c.l.bf16 %v344
    %346 = vrot.lane.b32.xlu0 %v301, 96
    %v347 = vpop.permute.xlu0 %346
    %v349 = vsel %vm104, %v347, 0
    %351 = vmatprep.subr.bf16.mxu0 0
    %352 = vmatpush1.bf16.msra.mxu0 %v100
    %353 = vmatprep.subr.bf16.mxu0 0
    %354 = vmatpush1.bf16.msra.mxu0 %v101
    %355 = vmatprep.subr.bf16.mxu0 0
    %356 = vmatpush1.bf16.msra.mxu0 0
    %357 = vmatprep.subr.bf16.mxu0 0
    %358 = vmatpush1.bf16.msra.mxu0 0
    %359 = vmatprep.subr.bf16.mxu0 0
    %360 = vmatpush1.bf16.msra.mxu0 0
    %361 = vmatprep.subr.bf16.mxu0 0
    %362 = vmatpush1.bf16.msra.mxu0 0
    %363 = vmatprep.subr.bf16.mxu0 0
    %364 = vmatpush1.bf16.msra.mxu0 0
    %365 = vmatprep.subr.bf16.mxu0 0
    %366 = vmatpush1.bf16.msra.mxu0 0
    %367 = vmatprep.subr.bf16.mxu0 0
    %368 = vmatpush1.bf16.msra.mxu0 0
    %369 = vmatprep.subr.bf16.mxu0 0
    %370 = vmatpush1.bf16.msra.mxu0 0
    %371 = vmatprep.subr.bf16.mxu0 0
    %372 = vmatpush1.bf16.msra.mxu0 0
    %373 = vmatprep.subr.bf16.mxu0 0
    %374 = vmatpush1.bf16.msra.mxu0 0
    %375 = vmatprep.subr.bf16.mxu0 0
    %376 = vmatpush1.bf16.msra.mxu0 0
    %377 = vmatprep.subr.bf16.mxu0 0
    %378 = vmatpush1.bf16.msra.mxu0 0
    %379 = vmatprep.subr.bf16.mxu0 0
    %380 = vmatpush1.bf16.msra.mxu0 0
    %381 = vmatprep.subr.bf16.mxu0 0
    %382 = vmatpush1.bf16.msra.mxu0 0
    %383 = vmatprep.mubr.bf16.mxu0 0
    %384 = vmatmul.mubr.bf16.gmra.mrb[0].mxu0 %v349
    %v385 = vpop.f32.mrb[0].mxu0
    %v386 = vadd.f32 %v90, %v385
    %v387 = vpop.f32.mrb[0].mxu0
    %v388 = vpop.f32.mrb[0].mxu0
    %v389 = vpop.f32.mrb[0].mxu0
    %390 = vdwg.mxu0
    %v391 = vadd.f32 %v345, %v386
    %v392 = vxor.u32 %v391, 2147483648
    %v393 = vmul.f32 %v392, 1.442695
    %v394 = vpow.pop %v393
    %v395 = vadd.f32 %v394, 1.0
    %v396 = vrcp.pop %v395
    %v397 = vmul.f32 1.0, %v396
    %v400 = vunpack.c.l.s4 1983009808
    %v401 = vunpack.c.0.s8 %v400
    %v402 = vlaneseq
    %v403 = vshrl.u32 %v402, 7
    %v404 = vsub.s32 %v401, %v403
    %v405 = vrot.slane %v386, %v404
    %406 = vrot.lane.b32.xlu0 %v405, 64
    %v407 = vpop.permute.xlu0 %406
    %v409 = vmul.f32 %v397, %v407
    %411 = vrot.lane.b32.xlu0 %v409, 64
    %v412 = vpop.permute.xlu0 %411
    %v414 = vadd.f32 %v345, %v412
    %v415 = vtanh.pop %v414
    %v416 = vsub.f32 1.0, %v397
    %418 = vrot.lane.b32.xlu0 %v415, 96
    %v419 = vpop.permute.xlu0 %418
    %v421 = vmul.f32 %v416, %v419
    %v422 = vmul.f32 %v397, %v191
    %v423 = vadd.f32 %v421, %v422
    %s424 = scalar_lea.vmem %s48, 6
    %v425 = vld [vmem:[%s424] sm:$0x1]
    %v426 = vunpack.c.l.bf16 %v425
    %427 = vrot.lane.b32.xlu0 %v322, 96
    %v428 = vpop.permute.xlu0 %427
    %v430 = vsel %vm104, %v428, 0
    %432 = vmatprep.subr.bf16.mxu0 0
    %433 = vmatpush1.bf16.msra.mxu0 %v210
    %434 = vmatprep.subr.bf16.mxu0 0
    %435 = vmatpush1.bf16.msra.mxu0 %v211
    %436 = vmatprep.subr.bf16.mxu0 0
    %437 = vmatpush1.bf16.msra.mxu0 0
    %438 = vmatprep.subr.bf16.mxu0 0
    %439 = vmatpush1.bf16.msra.mxu0 0
    %440 = vmatprep.subr.bf16.mxu0 0
    %441 = vmatpush1.bf16.msra.mxu0 0
    %442 = vmatprep.subr.bf16.mxu0 0
    %443 = vmatpush1.bf16.msra.mxu0 0
    %444 = vmatprep.subr.bf16.mxu0 0
    %445 = vmatpush1.bf16.msra.mxu0 0
    %446 = vmatprep.subr.bf16.mxu0 0
    %447 = vmatpush1.bf16.msra.mxu0 0
    %448 = vmatprep.subr.bf16.mxu0 0
    %449 = vmatpush1.bf16.msra.mxu0 0
    %450 = vmatprep.subr.bf16.mxu0 0
    %451 = vmatpush1.bf16.msra.mxu0 0
    %452 = vmatprep.subr.bf16.mxu0 0
    %453 = vmatpush1.bf16.msra.mxu0 0
    %454 = vmatprep.subr.bf16.mxu0 0
    %455 = vmatpush1.bf16.msra.mxu0 0
    %456 = vmatprep.subr.bf16.mxu0 0
    %457 = vmatpush1.bf16.msra.mxu0 0
    %458 = vmatprep.subr.bf16.mxu0 0
    %459 = vmatpush1.bf16.msra.mxu0 0
    %460 = vmatprep.subr.bf16.mxu0 0
    %461 = vmatpush1.bf16.msra.mxu0 0
    %462 = vmatprep.subr.bf16.mxu0 0
    %463 = vmatpush1.bf16.msra.mxu0 0
    %464 = vmatprep.mubr.bf16.mxu0 0
    %465 = vmatmul.mubr.bf16.gmra.mrb[0].mxu0 %v430
    %v466 = vpop.f32.mrb[0].mxu0
    %v467 = vadd.f32 %v200, %v466
    %v468 = vpop.f32.mrb[0].mxu0
    %v469 = vpop.f32.mrb[0].mxu0
    %v470 = vpop.f32.mrb[0].mxu0
    %471 = vdwg.mxu0
    %v472 = vadd.f32 %v426, %v467
    %v473 = vxor.u32 %v472, 2147483648
    %v474 = vmul.f32 %v473, 1.442695
    %v475 = vpow.pop %v474
    %v476 = vadd.f32 %v475, 1.0
    %v477 = vrcp.pop %v476
    %v478 = vmul.f32 1.0, %v477
    %v481 = vunpack.c.l.s4 1983009808
    %v482 = vunpack.c.0.s8 %v481
    %v483 = vlaneseq
    %v484 = vshrl.u32 %v483, 7
    %v485 = vsub.s32 %v482, %v484
    %v486 = vrot.slane %v467, %v485
    %487 = vrot.lane.b32.xlu0 %v486, 64
    %v488 = vpop.permute.xlu0 %487
    %v490 = vmul.f32 %v478, %v488
    %492 = vrot.lane.b32.xlu0 %v490, 64
    %v493 = vpop.permute.xlu0 %492
    %v495 = vadd.f32 %v426, %v493
    %v496 = vtanh.pop %v495
    %v497 = vsub.f32 1.0, %v478
    %499 = vrot.lane.b32.xlu0 %v496, 96
    %v500 = vpop.permute.xlu0 %499
    %v502 = vmul.f32 %v497, %v500
    %v503 = vmul.f32 %v478, %v300
    %v504 = vadd.f32 %v502, %v503
    %v505 = vpack.c.bf16 %v423, %v423
    %v508 = vunpack.c.l.s4 1966171168
    %v509 = vunpack.c.0.s8 %v508
    %v510 = vlaneseq
    %v511 = vshrl.u32 %v510, 7
    %v512 = vsub.s32 %v509, %v511
    %v513 = vrot.slane %v505, %v512
    %v515 = vunpack.c.l.s4 1966171168
    %v516 = vunpack.c.0.s8 %v515
    %v517 = vlaneseq
    %v518 = vshrl.u32 %v517, 7
    %v519 = vsub.s32 %v516, %v518
    %v520 = vrot.slane %v513, %v519
    %521 = vrot.lane.b32.xlu0 %v520, 96
    %v522 = vpop.permute.xlu0 %521
    %s524 = scalar_lea.vmem %s5, 1
    %525 = vst.msk [vmem:[%s524] sm:$0x1] %vm320, %v522
    %v526 = vpack.c.bf16 %v504, %v504
    %v529 = vunpack.c.l.s4 1966171168
    %v530 = vunpack.c.0.s8 %v529
    %v531 = vlaneseq
    %v532 = vshrl.u32 %v531, 7
    %v533 = vsub.s32 %v530, %v532
    %v534 = vrot.slane %v526, %v533
    %v536 = vunpack.c.l.s4 1966171168
    %v537 = vunpack.c.0.s8 %v536
    %v538 = vlaneseq
    %v539 = vshrl.u32 %v538, 7
    %v540 = vsub.s32 %v537, %v539
    %v541 = vrot.slane %v534, %v540
    %542 = vrot.lane.b32.xlu0 %v541, 96
    %v543 = vpop.permute.xlu0 %542
    %s545 = scalar_lea.vmem %s55, 6
    %546 = vst.msk [vmem:[%s545] sm:$0x1] %vm320, %v543
    %s547 = scalar_lea.vmem %s0, 2
    %v548 = vld [vmem:[%s547] sm:$0x1]
    %v549 = vunpack.c.l.bf16 %v548
    %550 = vrot.lane.b32.xlu0 %v505, 96
    %v551 = vpop.permute.xlu0 %550
    %v553 = vsel %vm104, %v551, 0
    %555 = vmatprep.subr.bf16.mxu0 0
    %556 = vmatpush1.bf16.msra.mxu0 %v100
    %557 = vmatprep.subr.bf16.mxu0 0
    %558 = vmatpush1.bf16.msra.mxu0 %v101
    %559 = vmatprep.subr.bf16.mxu0 0
    %560 = vmatpush1.bf16.msra.mxu0 0
    %561 = vmatprep.subr.bf16.mxu0 0
    %562 = vmatpush1.bf16.msra.mxu0 0
    %563 = vmatprep.subr.bf16.mxu0 0
    %564 = vmatpush1.bf16.msra.mxu0 0
    %565 = vmatprep.subr.bf16.mxu0 0
    %566 = vmatpush1.bf16.msra.mxu0 0
    %567 = vmatprep.subr.bf16.mxu0 0
    %568 = vmatpush1.bf16.msra.mxu0 0
    %569 = vmatprep.subr.bf16.mxu0 0
    %570 = vmatpush1.bf16.msra.mxu0 0
    %571 = vmatprep.subr.bf16.mxu0 0
    %572 = vmatpush1.bf16.msra.mxu0 0
    %573 = vmatprep.subr.bf16.mxu0 0
    %574 = vmatpush1.bf16.msra.mxu0 0
    %575 = vmatprep.subr.bf16.mxu0 0
    %576 = vmatpush1.bf16.msra.mxu0 0
    %577 = vmatprep.subr.bf16.mxu0 0
    %578 = vmatpush1.bf16.msra.mxu0 0
    %579 = vmatprep.subr.bf16.mxu0 0
    %580 = vmatpush1.bf16.msra.mxu0 0
    %581 = vmatprep.subr.bf16.mxu0 0
    %582 = vmatpush1.bf16.msra.mxu0 0
    %583 = vmatprep.subr.bf16.mxu0 0
    %584 = vmatpush1.bf16.msra.mxu0 0
    %585 = vmatprep.subr.bf16.mxu0 0
    %586 = vmatpush1.bf16.msra.mxu0 0
    %587 = vmatprep.mubr.bf16.mxu0 0
    %588 = vmatmul.mubr.bf16.gmra.mrb[0].mxu0 %v553
    %v589 = vpop.f32.mrb[0].mxu0
    %v590 = vadd.f32 %v90, %v589
    %v591 = vpop.f32.mrb[0].mxu0
    %v592 = vpop.f32.mrb[0].mxu0
    %v593 = vpop.f32.mrb[0].mxu0
    %594 = vdwg.mxu0
    %v595 = vadd.f32 %v549, %v590
    %v596 = vxor.u32 %v595, 2147483648
    %v597 = vmul.f32 %v596, 1.442695
    %v598 = vpow.pop %v597
    %v599 = vadd.f32 %v598, 1.0
    %v600 = vrcp.pop %v599
    %v601 = vmul.f32 1.0, %v600
    %v604 = vunpack.c.l.s4 1983009808
    %v605 = vunpack.c.0.s8 %v604
    %v606 = vlaneseq
    %v607 = vshrl.u32 %v606, 7
    %v608 = vsub.s32 %v605, %v607
    %v609 = vrot.slane %v590, %v608
    %610 = vrot.lane.b32.xlu0 %v609, 64
    %v611 = vpop.permute.xlu0 %610
    %v613 = vmul.f32 %v601, %v611
    %615 = vrot.lane.b32.xlu0 %v613, 64
    %v616 = vpop.permute.xlu0 %615
    %v618 = vadd.f32 %v549, %v616
    %v619 = vtanh.pop %v618
    %v620 = vsub.f32 1.0, %v601
    %622 = vrot.lane.b32.xlu0 %v619, 96
    %v623 = vpop.permute.xlu0 %622
    %v625 = vmul.f32 %v620, %v623
    %v626 = vmul.f32 %v601, %v423
    %v627 = vadd.f32 %v625, %v626
    %s628 = scalar_lea.vmem %s48, 5
    %v629 = vld [vmem:[%s628] sm:$0x1]
    %v630 = vunpack.c.l.bf16 %v629
    %631 = vrot.lane.b32.xlu0 %v526, 96
    %v632 = vpop.permute.xlu0 %631
    %v634 = vsel %vm104, %v632, 0
    %636 = vmatprep.subr.bf16.mxu0 0
    %637 = vmatpush1.bf16.msra.mxu0 %v210
    %638 = vmatprep.subr.bf16.mxu0 0
    %639 = vmatpush1.bf16.msra.mxu0 %v211
    %640 = vmatprep.subr.bf16.mxu0 0
    %641 = vmatpush1.bf16.msra.mxu0 0
    %642 = vmatprep.subr.bf16.mxu0 0
    %643 = vmatpush1.bf16.msra.mxu0 0
    %644 = vmatprep.subr.bf16.mxu0 0
    %645 = vmatpush1.bf16.msra.mxu0 0
    %646 = vmatprep.subr.bf16.mxu0 0
    %647 = vmatpush1.bf16.msra.mxu0 0
    %648 = vmatprep.subr.bf16.mxu0 0
    %649 = vmatpush1.bf16.msra.mxu0 0
    %650 = vmatprep.subr.bf16.mxu0 0
    %651 = vmatpush1.bf16.msra.mxu0 0
    %652 = vmatprep.subr.bf16.mxu0 0
    %653 = vmatpush1.bf16.msra.mxu0 0
    %654 = vmatprep.subr.bf16.mxu0 0
    %655 = vmatpush1.bf16.msra.mxu0 0
    %656 = vmatprep.subr.bf16.mxu0 0
    %657 = vmatpush1.bf16.msra.mxu0 0
    %658 = vmatprep.subr.bf16.mxu0 0
    %659 = vmatpush1.bf16.msra.mxu0 0
    %660 = vmatprep.subr.bf16.mxu0 0
    %661 = vmatpush1.bf16.msra.mxu0 0
    %662 = vmatprep.subr.bf16.mxu0 0
    %663 = vmatpush1.bf16.msra.mxu0 0
    %664 = vmatprep.subr.bf16.mxu0 0
    %665 = vmatpush1.bf16.msra.mxu0 0
    %666 = vmatprep.subr.bf16.mxu0 0
    %667 = vmatpush1.bf16.msra.mxu0 0
    %668 = vmatprep.mubr.bf16.mxu0 0
    %669 = vmatmul.mubr.bf16.gmra.mrb[0].mxu0 %v634
    %v670 = vpop.f32.mrb[0].mxu0
    %v671 = vadd.f32 %v200, %v670
    %v672 = vpop.f32.mrb[0].mxu0
    %v673 = vpop.f32.mrb[0].mxu0
    %v674 = vpop.f32.mrb[0].mxu0
    %675 = vdwg.mxu0
    %v676 = vadd.f32 %v630, %v671
    %v677 = vxor.u32 %v676, 2147483648
    %v678 = vmul.f32 %v677, 1.442695
    %v679 = vpow.pop %v678
    %v680 = vadd.f32 %v679, 1.0
    %v681 = vrcp.pop %v680
    %v682 = vmul.f32 1.0, %v681
    %v685 = vunpack.c.l.s4 1983009808
    %v686 = vunpack.c.0.s8 %v685
    %v687 = vlaneseq
    %v688 = vshrl.u32 %v687, 7
    %v689 = vsub.s32 %v686, %v688
    %v690 = vrot.slane %v671, %v689
    %691 = vrot.lane.b32.xlu0 %v690, 64
    %v692 = vpop.permute.xlu0 %691
    %v694 = vmul.f32 %v682, %v692
    %696 = vrot.lane.b32.xlu0 %v694, 64
    %v697 = vpop.permute.xlu0 %696
    %v699 = vadd.f32 %v630, %v697
    %v700 = vtanh.pop %v699
    %v701 = vsub.f32 1.0, %v682
    %703 = vrot.lane.b32.xlu0 %v700, 96
    %v704 = vpop.permute.xlu0 %703
    %v706 = vmul.f32 %v701, %v704
    %v707 = vmul.f32 %v682, %v504
    %v708 = vadd.f32 %v706, %v707
    %v709 = vpack.c.bf16 %v627, %v627
    %v712 = vunpack.c.l.s4 1966171168
    %v713 = vunpack.c.0.s8 %v712
    %v714 = vlaneseq
    %v715 = vshrl.u32 %v714, 7
    %v716 = vsub.s32 %v713, %v715
    %v717 = vrot.slane %v709, %v716
    %v719 = vunpack.c.l.s4 1966171168
    %v720 = vunpack.c.0.s8 %v719
    %v721 = vlaneseq
    %v722 = vshrl.u32 %v721, 7
    %v723 = vsub.s32 %v720, %v722
    %v724 = vrot.slane %v717, %v723
    %725 = vrot.lane.b32.xlu0 %v724, 96
    %v726 = vpop.permute.xlu0 %725
    %s728 = scalar_lea.vmem %s5, 2
    %729 = vst.msk [vmem:[%s728] sm:$0x1] %vm320, %v726
    %v730 = vpack.c.bf16 %v708, %v708
    %v733 = vunpack.c.l.s4 1966171168
    %v734 = vunpack.c.0.s8 %v733
    %v735 = vlaneseq
    %v736 = vshrl.u32 %v735, 7
    %v737 = vsub.s32 %v734, %v736
    %v738 = vrot.slane %v730, %v737
    %v740 = vunpack.c.l.s4 1966171168
    %v741 = vunpack.c.0.s8 %v740
    %v742 = vlaneseq
    %v743 = vshrl.u32 %v742, 7
    %v744 = vsub.s32 %v741, %v743
    %v745 = vrot.slane %v738, %v744
    %746 = vrot.lane.b32.xlu0 %v745, 96
    %v747 = vpop.permute.xlu0 %746
    %s749 = scalar_lea.vmem %s55, 5
    %750 = vst.msk [vmem:[%s749] sm:$0x1] %vm320, %v747
    %s751 = scalar_lea.vmem %s0, 3
    %v752 = vld [vmem:[%s751] sm:$0x1]
    %v753 = vunpack.c.l.bf16 %v752
    %754 = vrot.lane.b32.xlu0 %v709, 96
    %v755 = vpop.permute.xlu0 %754
    %v757 = vsel %vm104, %v755, 0
    %759 = vmatprep.subr.bf16.mxu0 0
    %760 = vmatpush1.bf16.msra.mxu0 %v100
    %761 = vmatprep.subr.bf16.mxu0 0
    %762 = vmatpush1.bf16.msra.mxu0 %v101
    %763 = vmatprep.subr.bf16.mxu0 0
    %764 = vmatpush1.bf16.msra.mxu0 0
    %765 = vmatprep.subr.bf16.mxu0 0
    %766 = vmatpush1.bf16.msra.mxu0 0
    %767 = vmatprep.subr.bf16.mxu0 0
    %768 = vmatpush1.bf16.msra.mxu0 0
    %769 = vmatprep.subr.bf16.mxu0 0
    %770 = vmatpush1.bf16.msra.mxu0 0
    %771 = vmatprep.subr.bf16.mxu0 0
    %772 = vmatpush1.bf16.msra.mxu0 0
    %773 = vmatprep.subr.bf16.mxu0 0
    %774 = vmatpush1.bf16.msra.mxu0 0
    %775 = vmatprep.subr.bf16.mxu0 0
    %776 = vmatpush1.bf16.msra.mxu0 0
    %777 = vmatprep.subr.bf16.mxu0 0
    %778 = vmatpush1.bf16.msra.mxu0 0
    %779 = vmatprep.subr.bf16.mxu0 0
    %780 = vmatpush1.bf16.msra.mxu0 0
    %781 = vmatprep.subr.bf16.mxu0 0
    %782 = vmatpush1.bf16.msra.mxu0 0
    %783 = vmatprep.subr.bf16.mxu0 0
    %784 = vmatpush1.bf16.msra.mxu0 0
    %785 = vmatprep.subr.bf16.mxu0 0
    %786 = vmatpush1.bf16.msra.mxu0 0
    %787 = vmatprep.subr.bf16.mxu0 0
    %788 = vmatpush1.bf16.msra.mxu0 0
    %789 = vmatprep.subr.bf16.mxu0 0
    %790 = vmatpush1.bf16.msra.mxu0 0
    %791 = vmatprep.mubr.bf16.mxu0 0
    %792 = vmatmul.mubr.bf16.gmra.mrb[0].mxu0 %v757
    %v793 = vpop.f32.mrb[0].mxu0
    %v794 = vadd.f32 %v90, %v793
    %v795 = vpop.f32.mrb[0].mxu0
    %v796 = vpop.f32.mrb[0].mxu0
    %v797 = vpop.f32.mrb[0].mxu0
    %798 = vdwg.mxu0
    %v799 = vadd.f32 %v753, %v794
    %v800 = vxor.u32 %v799, 2147483648
    %v801 = vmul.f32 %v800, 1.442695
    %v802 = vpow.pop %v801
    %v803 = vadd.f32 %v802, 1.0
    %v804 = vrcp.pop %v803
    %v805 = vmul.f32 1.0, %v804
    %v808 = vunpack.c.l.s4 1983009808
    %v809 = vunpack.c.0.s8 %v808
    %v810 = vlaneseq
    %v811 = vshrl.u32 %v810, 7
    %v812 = vsub.s32 %v809, %v811
    %v813 = vrot.slane %v794, %v812
    %814 = vrot.lane.b32.xlu0 %v813, 64
    %v815 = vpop.permute.xlu0 %814
    %v817 = vmul.f32 %v805, %v815
    %819 = vrot.lane.b32.xlu0 %v817, 64
    %v820 = vpop.permute.xlu0 %819
    %v822 = vadd.f32 %v753, %v820
    %v823 = vtanh.pop %v822
    %v824 = vsub.f32 1.0, %v805
    %826 = vrot.lane.b32.xlu0 %v823, 96
    %v827 = vpop.permute.xlu0 %826
    %v829 = vmul.f32 %v824, %v827
    %v830 = vmul.f32 %v805, %v627
    %v831 = vadd.f32 %v829, %v830
    %s832 = scalar_lea.vmem %s48, 4
    %v833 = vld [vmem:[%s832] sm:$0x1]
    %v834 = vunpack.c.l.bf16 %v833
    %835 = vrot.lane.b32.xlu0 %v730, 96
    %v836 = vpop.permute.xlu0 %835
    %v838 = vsel %vm104, %v836, 0
    %840 = vmatprep.subr.bf16.mxu0 0
    %841 = vmatpush1.bf16.msra.mxu0 %v210
    %842 = vmatprep.subr.bf16.mxu0 0
    %843 = vmatpush1.bf16.msra.mxu0 %v211
    %844 = vmatprep.subr.bf16.mxu0 0
    %845 = vmatpush1.bf16.msra.mxu0 0
    %846 = vmatprep.subr.bf16.mxu0 0
    %847 = vmatpush1.bf16.msra.mxu0 0
    %848 = vmatprep.subr.bf16.mxu0 0
    %849 = vmatpush1.bf16.msra.mxu0 0
    %850 = vmatprep.subr.bf16.mxu0 0
    %851 = vmatpush1.bf16.msra.mxu0 0
    %852 = vmatprep.subr.bf16.mxu0 0
    %853 = vmatpush1.bf16.msra.mxu0 0
    %854 = vmatprep.subr.bf16.mxu0 0
    %855 = vmatpush1.bf16.msra.mxu0 0
    %856 = vmatprep.subr.bf16.mxu0 0
    %857 = vmatpush1.bf16.msra.mxu0 0
    %858 = vmatprep.subr.bf16.mxu0 0
    %859 = vmatpush1.bf16.msra.mxu0 0
    %860 = vmatprep.subr.bf16.mxu0 0
    %861 = vmatpush1.bf16.msra.mxu0 0
    %862 = vmatprep.subr.bf16.mxu0 0
    %863 = vmatpush1.bf16.msra.mxu0 0
    %864 = vmatprep.subr.bf16.mxu0 0
    %865 = vmatpush1.bf16.msra.mxu0 0
    %866 = vmatprep.subr.bf16.mxu0 0
    %867 = vmatpush1.bf16.msra.mxu0 0
    %868 = vmatprep.subr.bf16.mxu0 0
    %869 = vmatpush1.bf16.msra.mxu0 0
    %870 = vmatprep.subr.bf16.mxu0 0
    %871 = vmatpush1.bf16.msra.mxu0 0
    %872 = vmatprep.mubr.bf16.mxu0 0
    %873 = vmatmul.mubr.bf16.gmra.mrb[0].mxu0 %v838
    %v874 = vpop.f32.mrb[0].mxu0
    %v875 = vadd.f32 %v200, %v874
    %v876 = vpop.f32.mrb[0].mxu0
    %v877 = vpop.f32.mrb[0].mxu0
    %v878 = vpop.f32.mrb[0].mxu0
    %879 = vdwg.mxu0
    %v880 = vadd.f32 %v834, %v875
    %v881 = vxor.u32 %v880, 2147483648
    %v882 = vmul.f32 %v881, 1.442695
    %v883 = vpow.pop %v882
    %v884 = vadd.f32 %v883, 1.0
    %v885 = vrcp.pop %v884
    %v886 = vmul.f32 1.0, %v885
    %v889 = vunpack.c.l.s4 1983009808
    %v890 = vunpack.c.0.s8 %v889
    %v891 = vlaneseq
    %v892 = vshrl.u32 %v891, 7
    %v893 = vsub.s32 %v890, %v892
    %v894 = vrot.slane %v875, %v893
    %895 = vrot.lane.b32.xlu0 %v894, 64
    %v896 = vpop.permute.xlu0 %895
    %v898 = vmul.f32 %v886, %v896
    %900 = vrot.lane.b32.xlu0 %v898, 64
    %v901 = vpop.permute.xlu0 %900
    %v903 = vadd.f32 %v834, %v901
    %v904 = vtanh.pop %v903
    %v905 = vsub.f32 1.0, %v886
    %907 = vrot.lane.b32.xlu0 %v904, 96
    %v908 = vpop.permute.xlu0 %907
    %v910 = vmul.f32 %v905, %v908
    %v911 = vmul.f32 %v886, %v708
    %v912 = vadd.f32 %v910, %v911
    %v913 = vpack.c.bf16 %v831, %v831
    %v916 = vunpack.c.l.s4 1966171168
    %v917 = vunpack.c.0.s8 %v916
    %v918 = vlaneseq
    %v919 = vshrl.u32 %v918, 7
    %v920 = vsub.s32 %v917, %v919
    %v921 = vrot.slane %v913, %v920
    %v923 = vunpack.c.l.s4 1966171168
    %v924 = vunpack.c.0.s8 %v923
    %v925 = vlaneseq
    %v926 = vshrl.u32 %v925, 7
    %v927 = vsub.s32 %v924, %v926
    %v928 = vrot.slane %v921, %v927
    %929 = vrot.lane.b32.xlu0 %v928, 96
    %v930 = vpop.permute.xlu0 %929
    %s932 = scalar_lea.vmem %s5, 3
    %933 = vst.msk [vmem:[%s932] sm:$0x1] %vm320, %v930
    %v934 = vpack.c.bf16 %v912, %v912
    %v937 = vunpack.c.l.s4 1966171168
    %v938 = vunpack.c.0.s8 %v937
    %v939 = vlaneseq
    %v940 = vshrl.u32 %v939, 7
    %v941 = vsub.s32 %v938, %v940
    %v942 = vrot.slane %v934, %v941
    %v944 = vunpack.c.l.s4 1966171168
    %v945 = vunpack.c.0.s8 %v944
    %v946 = vlaneseq
    %v947 = vshrl.u32 %v946, 7
    %v948 = vsub.s32 %v945, %v947
    %v949 = vrot.slane %v942, %v948
    %950 = vrot.lane.b32.xlu0 %v949, 96
    %v951 = vpop.permute.xlu0 %950
    %s953 = scalar_lea.vmem %s55, 4
    %954 = vst.msk [vmem:[%s953] sm:$0x1] %vm320, %v951
    %s955 = scalar_lea.vmem %s0, 4
    %v956 = vld [vmem:[%s955] sm:$0x1]
    %v957 = vunpack.c.l.bf16 %v956
    %958 = vrot.lane.b32.xlu0 %v913, 96
    %v959 = vpop.permute.xlu0 %958
    %v961 = vsel %vm104, %v959, 0
    %963 = vmatprep.subr.bf16.mxu0 0
    %964 = vmatpush1.bf16.msra.mxu0 %v100
    %965 = vmatprep.subr.bf16.mxu0 0
    %966 = vmatpush1.bf16.msra.mxu0 %v101
    %967 = vmatprep.subr.bf16.mxu0 0
    %968 = vmatpush1.bf16.msra.mxu0 0
    %969 = vmatprep.subr.bf16.mxu0 0
    %970 = vmatpush1.bf16.msra.mxu0 0
    %971 = vmatprep.subr.bf16.mxu0 0
    %972 = vmatpush1.bf16.msra.mxu0 0
    %973 = vmatprep.subr.bf16.mxu0 0
    %974 = vmatpush1.bf16.msra.mxu0 0
    %975 = vmatprep.subr.bf16.mxu0 0
    %976 = vmatpush1.bf16.msra.mxu0 0
    %977 = vmatprep.subr.bf16.mxu0 0
    %978 = vmatpush1.bf16.msra.mxu0 0
    %979 = vmatprep.subr.bf16.mxu0 0
    %980 = vmatpush1.bf16.msra.mxu0 0
    %981 = vmatprep.subr.bf16.mxu0 0
    %982 = vmatpush1.bf16.msra.mxu0 0
    %983 = vmatprep.subr.bf16.mxu0 0
    %984 = vmatpush1.bf16.msra.mxu0 0
    %985 = vmatprep.subr.bf16.mxu0 0
    %986 = vmatpush1.bf16.msra.mxu0 0
    %987 = vmatprep.subr.bf16.mxu0 0
    %988 = vmatpush1.bf16.msra.mxu0 0
    %989 = vmatprep.subr.bf16.mxu0 0
    %990 = vmatpush1.bf16.msra.mxu0 0
    %991 = vmatprep.subr.bf16.mxu0 0
    %992 = vmatpush1.bf16.msra.mxu0 0
    %993 = vmatprep.subr.bf16.mxu0 0
    %994 = vmatpush1.bf16.msra.mxu0 0
    %995 = vmatprep.mubr.bf16.mxu0 0
    %996 = vmatmul.mubr.bf16.gmra.mrb[0].mxu0 %v961
    %v997 = vpop.f32.mrb[0].mxu0
    %v998 = vadd.f32 %v90, %v997
    %v999 = vpop.f32.mrb[0].mxu0
    %v1000 = vpop.f32.mrb[0].mxu0
    %v1001 = vpop.f32.mrb[0].mxu0
    %1002 = vdwg.mxu0
    %v1003 = vadd.f32 %v957, %v998
    %v1004 = vxor.u32 %v1003, 2147483648
    %v1005 = vmul.f32 %v1004, 1.442695
    %v1006 = vpow.pop %v1005
    %v1007 = vadd.f32 %v1006, 1.0
    %v1008 = vrcp.pop %v1007
    %v1009 = vmul.f32 1.0, %v1008
    %v1012 = vunpack.c.l.s4 1983009808
    %v1013 = vunpack.c.0.s8 %v1012
    %v1014 = vlaneseq
    %v1015 = vshrl.u32 %v1014, 7
    %v1016 = vsub.s32 %v1013, %v1015
    %v1017 = vrot.slane %v998, %v1016
    %1018 = vrot.lane.b32.xlu0 %v1017, 64
    %v1019 = vpop.permute.xlu0 %1018
    %v1021 = vmul.f32 %v1009, %v1019
    %1023 = vrot.lane.b32.xlu0 %v1021, 64
    %v1024 = vpop.permute.xlu0 %1023
    %v1026 = vadd.f32 %v957, %v1024
    %v1027 = vtanh.pop %v1026
    %v1028 = vsub.f32 1.0, %v1009
    %1030 = vrot.lane.b32.xlu0 %v1027, 96
    %v1031 = vpop.permute.xlu0 %1030
    %v1033 = vmul.f32 %v1028, %v1031
    %v1034 = vmul.f32 %v1009, %v831
    %v1035 = vadd.f32 %v1033, %v1034
    %s1036 = scalar_lea.vmem %s48, 3
    %v1037 = vld [vmem:[%s1036] sm:$0x1]
    %v1038 = vunpack.c.l.bf16 %v1037
    %1039 = vrot.lane.b32.xlu0 %v934, 96
    %v1040 = vpop.permute.xlu0 %1039
    %v1042 = vsel %vm104, %v1040, 0
    %1044 = vmatprep.subr.bf16.mxu0 0
    %1045 = vmatpush1.bf16.msra.mxu0 %v210
    %1046 = vmatprep.subr.bf16.mxu0 0
    %1047 = vmatpush1.bf16.msra.mxu0 %v211
    %1048 = vmatprep.subr.bf16.mxu0 0
    %1049 = vmatpush1.bf16.msra.mxu0 0
    %1050 = vmatprep.subr.bf16.mxu0 0
    %1051 = vmatpush1.bf16.msra.mxu0 0
    %1052 = vmatprep.subr.bf16.mxu0 0
    %1053 = vmatpush1.bf16.msra.mxu0 0
    %1054 = vmatprep.subr.bf16.mxu0 0
    %1055 = vmatpush1.bf16.msra.mxu0 0
    %1056 = vmatprep.subr.bf16.mxu0 0
    %1057 = vmatpush1.bf16.msra.mxu0 0
    %1058 = vmatprep.subr.bf16.mxu0 0
    %1059 = vmatpush1.bf16.msra.mxu0 0
    %1060 = vmatprep.subr.bf16.mxu0 0
    %1061 = vmatpush1.bf16.msra.mxu0 0
    %1062 = vmatprep.subr.bf16.mxu0 0
    %1063 = vmatpush1.bf16.msra.mxu0 0
    %1064 = vmatprep.subr.bf16.mxu0 0
    %1065 = vmatpush1.bf16.msra.mxu0 0
    %1066 = vmatprep.subr.bf16.mxu0 0
    %1067 = vmatpush1.bf16.msra.mxu0 0
    %1068 = vmatprep.subr.bf16.mxu0 0
    %1069 = vmatpush1.bf16.msra.mxu0 0
    %1070 = vmatprep.subr.bf16.mxu0 0
    %1071 = vmatpush1.bf16.msra.mxu0 0
    %1072 = vmatprep.subr.bf16.mxu0 0
    %1073 = vmatpush1.bf16.msra.mxu0 0
    %1074 = vmatprep.subr.bf16.mxu0 0
    %1075 = vmatpush1.bf16.msra.mxu0 0
    %1076 = vmatprep.mubr.bf16.mxu0 0
    %1077 = vmatmul.mubr.bf16.gmra.mrb[0].mxu0 %v1042
    %v1078 = vpop.f32.mrb[0].mxu0
    %v1079 = vadd.f32 %v200, %v1078
    %v1080 = vpop.f32.mrb[0].mxu0
    %v1081 = vpop.f32.mrb[0].mxu0
    %v1082 = vpop.f32.mrb[0].mxu0
    %1083 = vdwg.mxu0
    %v1084 = vadd.f32 %v1038, %v1079
    %v1085 = vxor.u32 %v1084, 2147483648
    %v1086 = vmul.f32 %v1085, 1.442695
    %v1087 = vpow.pop %v1086
    %v1088 = vadd.f32 %v1087, 1.0
    %v1089 = vrcp.pop %v1088
    %v1090 = vmul.f32 1.0, %v1089
    %v1093 = vunpack.c.l.s4 1983009808
    %v1094 = vunpack.c.0.s8 %v1093
    %v1095 = vlaneseq
    %v1096 = vshrl.u32 %v1095, 7
    %v1097 = vsub.s32 %v1094, %v1096
    %v1098 = vrot.slane %v1079, %v1097
    %1099 = vrot.lane.b32.xlu0 %v1098, 64
    %v1100 = vpop.permute.xlu0 %1099
    %v1102 = vmul.f32 %v1090, %v1100
    %1104 = vrot.lane.b32.xlu0 %v1102, 64
    %v1105 = vpop.permute.xlu0 %1104
    %v1107 = vadd.f32 %v1038, %v1105
    %v1108 = vtanh.pop %v1107
    %v1109 = vsub.f32 1.0, %v1090
    %1111 = vrot.lane.b32.xlu0 %v1108, 96
    %v1112 = vpop.permute.xlu0 %1111
    %v1114 = vmul.f32 %v1109, %v1112
    %v1115 = vmul.f32 %v1090, %v912
    %v1116 = vadd.f32 %v1114, %v1115
    %v1117 = vpack.c.bf16 %v1035, %v1035
    %v1120 = vunpack.c.l.s4 1966171168
    %v1121 = vunpack.c.0.s8 %v1120
    %v1122 = vlaneseq
    %v1123 = vshrl.u32 %v1122, 7
    %v1124 = vsub.s32 %v1121, %v1123
    %v1125 = vrot.slane %v1117, %v1124
    %v1127 = vunpack.c.l.s4 1966171168
    %v1128 = vunpack.c.0.s8 %v1127
    %v1129 = vlaneseq
    %v1130 = vshrl.u32 %v1129, 7
    %v1131 = vsub.s32 %v1128, %v1130
    %v1132 = vrot.slane %v1125, %v1131
    %1133 = vrot.lane.b32.xlu0 %v1132, 96
    %v1134 = vpop.permute.xlu0 %1133
    %s1136 = scalar_lea.vmem %s5, 4
    %1137 = vst.msk [vmem:[%s1136] sm:$0x1] %vm320, %v1134
    %v1138 = vpack.c.bf16 %v1116, %v1116
    %v1141 = vunpack.c.l.s4 1966171168
    %v1142 = vunpack.c.0.s8 %v1141
    %v1143 = vlaneseq
    %v1144 = vshrl.u32 %v1143, 7
    %v1145 = vsub.s32 %v1142, %v1144
    %v1146 = vrot.slane %v1138, %v1145
    %v1148 = vunpack.c.l.s4 1966171168
    %v1149 = vunpack.c.0.s8 %v1148
    %v1150 = vlaneseq
    %v1151 = vshrl.u32 %v1150, 7
    %v1152 = vsub.s32 %v1149, %v1151
    %v1153 = vrot.slane %v1146, %v1152
    %1154 = vrot.lane.b32.xlu0 %v1153, 96
    %v1155 = vpop.permute.xlu0 %1154
    %s1157 = scalar_lea.vmem %s55, 3
    %1158 = vst.msk [vmem:[%s1157] sm:$0x1] %vm320, %v1155
    %s1159 = scalar_lea.vmem %s0, 5
    %v1160 = vld [vmem:[%s1159] sm:$0x1]
    %v1161 = vunpack.c.l.bf16 %v1160
    %1162 = vrot.lane.b32.xlu0 %v1117, 96
    %v1163 = vpop.permute.xlu0 %1162
    %v1165 = vsel %vm104, %v1163, 0
    %1167 = vmatprep.subr.bf16.mxu0 0
    %1168 = vmatpush1.bf16.msra.mxu0 %v100
    %1169 = vmatprep.subr.bf16.mxu0 0
    %1170 = vmatpush1.bf16.msra.mxu0 %v101
    %1171 = vmatprep.subr.bf16.mxu0 0
    %1172 = vmatpush1.bf16.msra.mxu0 0
    %1173 = vmatprep.subr.bf16.mxu0 0
    %1174 = vmatpush1.bf16.msra.mxu0 0
    %1175 = vmatprep.subr.bf16.mxu0 0
    %1176 = vmatpush1.bf16.msra.mxu0 0
    %1177 = vmatprep.subr.bf16.mxu0 0
    %1178 = vmatpush1.bf16.msra.mxu0 0
    %1179 = vmatprep.subr.bf16.mxu0 0
    %1180 = vmatpush1.bf16.msra.mxu0 0
    %1181 = vmatprep.subr.bf16.mxu0 0
    %1182 = vmatpush1.bf16.msra.mxu0 0
    %1183 = vmatprep.subr.bf16.mxu0 0
    %1184 = vmatpush1.bf16.msra.mxu0 0
    %1185 = vmatprep.subr.bf16.mxu0 0
    %1186 = vmatpush1.bf16.msra.mxu0 0
    %1187 = vmatprep.subr.bf16.mxu0 0
    %1188 = vmatpush1.bf16.msra.mxu0 0
    %1189 = vmatprep.subr.bf16.mxu0 0
    %1190 = vmatpush1.bf16.msra.mxu0 0
    %1191 = vmatprep.subr.bf16.mxu0 0
    %1192 = vmatpush1.bf16.msra.mxu0 0
    %1193 = vmatprep.subr.bf16.mxu0 0
    %1194 = vmatpush1.bf16.msra.mxu0 0
    %1195 = vmatprep.subr.bf16.mxu0 0
    %1196 = vmatpush1.bf16.msra.mxu0 0
    %1197 = vmatprep.subr.bf16.mxu0 0
    %1198 = vmatpush1.bf16.msra.mxu0 0
    %1199 = vmatprep.mubr.bf16.mxu0 0
    %1200 = vmatmul.mubr.bf16.gmra.mrb[0].mxu0 %v1165
    %v1201 = vpop.f32.mrb[0].mxu0
    %v1202 = vadd.f32 %v90, %v1201
    %v1203 = vpop.f32.mrb[0].mxu0
    %v1204 = vpop.f32.mrb[0].mxu0
    %v1205 = vpop.f32.mrb[0].mxu0
    %1206 = vdwg.mxu0
    %v1207 = vadd.f32 %v1161, %v1202
    %v1208 = vxor.u32 %v1207, 2147483648
    %v1209 = vmul.f32 %v1208, 1.442695
    %v1210 = vpow.pop %v1209
    %v1211 = vadd.f32 %v1210, 1.0
    %v1212 = vrcp.pop %v1211
    %v1213 = vmul.f32 1.0, %v1212
    %v1216 = vunpack.c.l.s4 1983009808
    %v1217 = vunpack.c.0.s8 %v1216
    %v1218 = vlaneseq
    %v1219 = vshrl.u32 %v1218, 7
    %v1220 = vsub.s32 %v1217, %v1219
    %v1221 = vrot.slane %v1202, %v1220
    %1222 = vrot.lane.b32.xlu0 %v1221, 64
    %v1223 = vpop.permute.xlu0 %1222
    %v1225 = vmul.f32 %v1213, %v1223
    %1227 = vrot.lane.b32.xlu0 %v1225, 64
    %v1228 = vpop.permute.xlu0 %1227
    %v1230 = vadd.f32 %v1161, %v1228
    %v1231 = vtanh.pop %v1230
    %v1232 = vsub.f32 1.0, %v1213
    %1234 = vrot.lane.b32.xlu0 %v1231, 96
    %v1235 = vpop.permute.xlu0 %1234
    %v1237 = vmul.f32 %v1232, %v1235
    %v1238 = vmul.f32 %v1213, %v1035
    %v1239 = vadd.f32 %v1237, %v1238
    %s1240 = scalar_lea.vmem %s48, 2
    %v1241 = vld [vmem:[%s1240] sm:$0x1]
    %v1242 = vunpack.c.l.bf16 %v1241
    %1243 = vrot.lane.b32.xlu0 %v1138, 96
    %v1244 = vpop.permute.xlu0 %1243
    %v1246 = vsel %vm104, %v1244, 0
    %1248 = vmatprep.subr.bf16.mxu0 0
    %1249 = vmatpush1.bf16.msra.mxu0 %v210
    %1250 = vmatprep.subr.bf16.mxu0 0
    %1251 = vmatpush1.bf16.msra.mxu0 %v211
    %1252 = vmatprep.subr.bf16.mxu0 0
    %1253 = vmatpush1.bf16.msra.mxu0 0
    %1254 = vmatprep.subr.bf16.mxu0 0
    %1255 = vmatpush1.bf16.msra.mxu0 0
    %1256 = vmatprep.subr.bf16.mxu0 0
    %1257 = vmatpush1.bf16.msra.mxu0 0
    %1258 = vmatprep.subr.bf16.mxu0 0
    %1259 = vmatpush1.bf16.msra.mxu0 0
    %1260 = vmatprep.subr.bf16.mxu0 0
    %1261 = vmatpush1.bf16.msra.mxu0 0
    %1262 = vmatprep.subr.bf16.mxu0 0
    %1263 = vmatpush1.bf16.msra.mxu0 0
    %1264 = vmatprep.subr.bf16.mxu0 0
    %1265 = vmatpush1.bf16.msra.mxu0 0
    %1266 = vmatprep.subr.bf16.mxu0 0
    %1267 = vmatpush1.bf16.msra.mxu0 0
    %1268 = vmatprep.subr.bf16.mxu0 0
    %1269 = vmatpush1.bf16.msra.mxu0 0
    %1270 = vmatprep.subr.bf16.mxu0 0
    %1271 = vmatpush1.bf16.msra.mxu0 0
    %1272 = vmatprep.subr.bf16.mxu0 0
    %1273 = vmatpush1.bf16.msra.mxu0 0
    %1274 = vmatprep.subr.bf16.mxu0 0
    %1275 = vmatpush1.bf16.msra.mxu0 0
    %1276 = vmatprep.subr.bf16.mxu0 0
    %1277 = vmatpush1.bf16.msra.mxu0 0
    %1278 = vmatprep.subr.bf16.mxu0 0
    %1279 = vmatpush1.bf16.msra.mxu0 0
    %1280 = vmatprep.mubr.bf16.mxu0 0
    %1281 = vmatmul.mubr.bf16.gmra.mrb[0].mxu0 %v1246
    %v1282 = vpop.f32.mrb[0].mxu0
    %v1283 = vadd.f32 %v200, %v1282
    %v1284 = vpop.f32.mrb[0].mxu0
    %v1285 = vpop.f32.mrb[0].mxu0
    %v1286 = vpop.f32.mrb[0].mxu0
    %1287 = vdwg.mxu0
    %v1288 = vadd.f32 %v1242, %v1283
    %v1289 = vxor.u32 %v1288, 2147483648
    %v1290 = vmul.f32 %v1289, 1.442695
    %v1291 = vpow.pop %v1290
    %v1292 = vadd.f32 %v1291, 1.0
    %v1293 = vrcp.pop %v1292
    %v1294 = vmul.f32 1.0, %v1293
    %v1297 = vunpack.c.l.s4 1983009808
    %v1298 = vunpack.c.0.s8 %v1297
    %v1299 = vlaneseq
    %v1300 = vshrl.u32 %v1299, 7
    %v1301 = vsub.s32 %v1298, %v1300
    %v1302 = vrot.slane %v1283, %v1301
    %1303 = vrot.lane.b32.xlu0 %v1302, 64
    %v1304 = vpop.permute.xlu0 %1303
    %v1306 = vmul.f32 %v1294, %v1304
    %1308 = vrot.lane.b32.xlu0 %v1306, 64
    %v1309 = vpop.permute.xlu0 %1308
    %v1311 = vadd.f32 %v1242, %v1309
    %v1312 = vtanh.pop %v1311
    %v1313 = vsub.f32 1.0, %v1294
    %1315 = vrot.lane.b32.xlu0 %v1312, 96
    %v1316 = vpop.permute.xlu0 %1315
    %v1318 = vmul.f32 %v1313, %v1316
    %v1319 = vmul.f32 %v1294, %v1116
    %v1320 = vadd.f32 %v1318, %v1319
    %v1321 = vpack.c.bf16 %v1239, %v1239
    %v1324 = vunpack.c.l.s4 1966171168
    %v1325 = vunpack.c.0.s8 %v1324
    %v1326 = vlaneseq
    %v1327 = vshrl.u32 %v1326, 7
    %v1328 = vsub.s32 %v1325, %v1327
    %v1329 = vrot.slane %v1321, %v1328
    %v1331 = vunpack.c.l.s4 1966171168
    %v1332 = vunpack.c.0.s8 %v1331
    %v1333 = vlaneseq
    %v1334 = vshrl.u32 %v1333, 7
    %v1335 = vsub.s32 %v1332, %v1334
    %v1336 = vrot.slane %v1329, %v1335
    %1337 = vrot.lane.b32.xlu0 %v1336, 96
    %v1338 = vpop.permute.xlu0 %1337
    %s1340 = scalar_lea.vmem %s5, 5
    %1341 = vst.msk [vmem:[%s1340] sm:$0x1] %vm320, %v1338
    %v1342 = vpack.c.bf16 %v1320, %v1320
    %v1345 = vunpack.c.l.s4 1966171168
    %v1346 = vunpack.c.0.s8 %v1345
    %v1347 = vlaneseq
    %v1348 = vshrl.u32 %v1347, 7
    %v1349 = vsub.s32 %v1346, %v1348
    %v1350 = vrot.slane %v1342, %v1349
    %v1352 = vunpack.c.l.s4 1966171168
    %v1353 = vunpack.c.0.s8 %v1352
    %v1354 = vlaneseq
    %v1355 = vshrl.u32 %v1354, 7
    %v1356 = vsub.s32 %v1353, %v1355
    %v1357 = vrot.slane %v1350, %v1356
    %1358 = vrot.lane.b32.xlu0 %v1357, 96
    %v1359 = vpop.permute.xlu0 %1358
    %s1361 = scalar_lea.vmem %s55, 2
    %1362 = vst.msk [vmem:[%s1361] sm:$0x1] %vm320, %v1359
    %s1363 = scalar_lea.vmem %s0, 6
    %v1364 = vld [vmem:[%s1363] sm:$0x1]
    %v1365 = vunpack.c.l.bf16 %v1364
    %1366 = vrot.lane.b32.xlu0 %v1321, 96
    %v1367 = vpop.permute.xlu0 %1366
    %v1369 = vsel %vm104, %v1367, 0
    %1371 = vmatprep.subr.bf16.mxu0 0
    %1372 = vmatpush1.bf16.msra.mxu0 %v100
    %1373 = vmatprep.subr.bf16.mxu0 0
    %1374 = vmatpush1.bf16.msra.mxu0 %v101
    %1375 = vmatprep.subr.bf16.mxu0 0
    %1376 = vmatpush1.bf16.msra.mxu0 0
    %1377 = vmatprep.subr.bf16.mxu0 0
    %1378 = vmatpush1.bf16.msra.mxu0 0
    %1379 = vmatprep.subr.bf16.mxu0 0
    %1380 = vmatpush1.bf16.msra.mxu0 0
    %1381 = vmatprep.subr.bf16.mxu0 0
    %1382 = vmatpush1.bf16.msra.mxu0 0
    %1383 = vmatprep.subr.bf16.mxu0 0
    %1384 = vmatpush1.bf16.msra.mxu0 0
    %1385 = vmatprep.subr.bf16.mxu0 0
    %1386 = vmatpush1.bf16.msra.mxu0 0
    %1387 = vmatprep.subr.bf16.mxu0 0
    %1388 = vmatpush1.bf16.msra.mxu0 0
    %1389 = vmatprep.subr.bf16.mxu0 0
    %1390 = vmatpush1.bf16.msra.mxu0 0
    %1391 = vmatprep.subr.bf16.mxu0 0
    %1392 = vmatpush1.bf16.msra.mxu0 0
    %1393 = vmatprep.subr.bf16.mxu0 0
    %1394 = vmatpush1.bf16.msra.mxu0 0
    %1395 = vmatprep.subr.bf16.mxu0 0
    %1396 = vmatpush1.bf16.msra.mxu0 0
    %1397 = vmatprep.subr.bf16.mxu0 0
    %1398 = vmatpush1.bf16.msra.mxu0 0
    %1399 = vmatprep.subr.bf16.mxu0 0
    %1400 = vmatpush1.bf16.msra.mxu0 0
    %1401 = vmatprep.subr.bf16.mxu0 0
    %1402 = vmatpush1.bf16.msra.mxu0 0
    %1403 = vmatprep.mubr.bf16.mxu0 0
    %1404 = vmatmul.mubr.bf16.gmra.mrb[0].mxu0 %v1369
    %v1405 = vpop.f32.mrb[0].mxu0
    %v1406 = vadd.f32 %v90, %v1405
    %v1407 = vpop.f32.mrb[0].mxu0
    %v1408 = vpop.f32.mrb[0].mxu0
    %v1409 = vpop.f32.mrb[0].mxu0
    %1410 = vdwg.mxu0
    %v1411 = vadd.f32 %v1365, %v1406
    %v1412 = vxor.u32 %v1411, 2147483648
    %v1413 = vmul.f32 %v1412, 1.442695
    %v1414 = vpow.pop %v1413
    %v1415 = vadd.f32 %v1414, 1.0
    %v1416 = vrcp.pop %v1415
    %v1417 = vmul.f32 1.0, %v1416
    %v1420 = vunpack.c.l.s4 1983009808
    %v1421 = vunpack.c.0.s8 %v1420
    %v1422 = vlaneseq
    %v1423 = vshrl.u32 %v1422, 7
    %v1424 = vsub.s32 %v1421, %v1423
    %v1425 = vrot.slane %v1406, %v1424
    %1426 = vrot.lane.b32.xlu0 %v1425, 64
    %v1427 = vpop.permute.xlu0 %1426
    %v1429 = vmul.f32 %v1417, %v1427
    %1431 = vrot.lane.b32.xlu0 %v1429, 64
    %v1432 = vpop.permute.xlu0 %1431
    %v1434 = vadd.f32 %v1365, %v1432
    %v1435 = vtanh.pop %v1434
    %v1436 = vsub.f32 1.0, %v1417
    %1438 = vrot.lane.b32.xlu0 %v1435, 96
    %v1439 = vpop.permute.xlu0 %1438
    %v1441 = vmul.f32 %v1436, %v1439
    %v1442 = vmul.f32 %v1417, %v1239
    %v1443 = vadd.f32 %v1441, %v1442
    %s1444 = scalar_lea.vmem %s48, 1
    %v1445 = vld [vmem:[%s1444] sm:$0x1]
    %v1446 = vunpack.c.l.bf16 %v1445
    %1447 = vrot.lane.b32.xlu0 %v1342, 96
    %v1448 = vpop.permute.xlu0 %1447
    %v1450 = vsel %vm104, %v1448, 0
    %1452 = vmatprep.subr.bf16.mxu0 0
    %1453 = vmatpush1.bf16.msra.mxu0 %v210
    %1454 = vmatprep.subr.bf16.mxu0 0
    %1455 = vmatpush1.bf16.msra.mxu0 %v211
    %1456 = vmatprep.subr.bf16.mxu0 0
    %1457 = vmatpush1.bf16.msra.mxu0 0
    %1458 = vmatprep.subr.bf16.mxu0 0
    %1459 = vmatpush1.bf16.msra.mxu0 0
    %1460 = vmatprep.subr.bf16.mxu0 0
    %1461 = vmatpush1.bf16.msra.mxu0 0
    %1462 = vmatprep.subr.bf16.mxu0 0
    %1463 = vmatpush1.bf16.msra.mxu0 0
    %1464 = vmatprep.subr.bf16.mxu0 0
    %1465 = vmatpush1.bf16.msra.mxu0 0
    %1466 = vmatprep.subr.bf16.mxu0 0
    %1467 = vmatpush1.bf16.msra.mxu0 0
    %1468 = vmatprep.subr.bf16.mxu0 0
    %1469 = vmatpush1.bf16.msra.mxu0 0
    %1470 = vmatprep.subr.bf16.mxu0 0
    %1471 = vmatpush1.bf16.msra.mxu0 0
    %1472 = vmatprep.subr.bf16.mxu0 0
    %1473 = vmatpush1.bf16.msra.mxu0 0
    %1474 = vmatprep.subr.bf16.mxu0 0
    %1475 = vmatpush1.bf16.msra.mxu0 0
    %1476 = vmatprep.subr.bf16.mxu0 0
    %1477 = vmatpush1.bf16.msra.mxu0 0
    %1478 = vmatprep.subr.bf16.mxu0 0
    %1479 = vmatpush1.bf16.msra.mxu0 0
    %1480 = vmatprep.subr.bf16.mxu0 0
    %1481 = vmatpush1.bf16.msra.mxu0 0
    %1482 = vmatprep.subr.bf16.mxu0 0
    %1483 = vmatpush1.bf16.msra.mxu0 0
    %1484 = vmatprep.mubr.bf16.mxu0 0
    %1485 = vmatmul.mubr.bf16.gmra.mrb[0].mxu0 %v1450
    %v1486 = vpop.f32.mrb[0].mxu0
    %v1487 = vadd.f32 %v200, %v1486
    %v1488 = vpop.f32.mrb[0].mxu0
    %v1489 = vpop.f32.mrb[0].mxu0
    %v1490 = vpop.f32.mrb[0].mxu0
    %1491 = vdwg.mxu0
    %v1492 = vadd.f32 %v1446, %v1487
    %v1493 = vxor.u32 %v1492, 2147483648
    %v1494 = vmul.f32 %v1493, 1.442695
    %v1495 = vpow.pop %v1494
    %v1496 = vadd.f32 %v1495, 1.0
    %v1497 = vrcp.pop %v1496
    %v1498 = vmul.f32 1.0, %v1497
    %v1501 = vunpack.c.l.s4 1983009808
    %v1502 = vunpack.c.0.s8 %v1501
    %v1503 = vlaneseq
    %v1504 = vshrl.u32 %v1503, 7
    %v1505 = vsub.s32 %v1502, %v1504
    %v1506 = vrot.slane %v1487, %v1505
    %1507 = vrot.lane.b32.xlu0 %v1506, 64
    %v1508 = vpop.permute.xlu0 %1507
    %v1510 = vmul.f32 %v1498, %v1508
    %1512 = vrot.lane.b32.xlu0 %v1510, 64
    %v1513 = vpop.permute.xlu0 %1512
    %v1515 = vadd.f32 %v1446, %v1513
    %v1516 = vtanh.pop %v1515
    %v1517 = vsub.f32 1.0, %v1498
    %1519 = vrot.lane.b32.xlu0 %v1516, 96
    %v1520 = vpop.permute.xlu0 %1519
    %v1522 = vmul.f32 %v1517, %v1520
    %v1523 = vmul.f32 %v1498, %v1320
    %v1524 = vadd.f32 %v1522, %v1523
    %v1525 = vpack.c.bf16 %v1443, %v1443
    %v1528 = vunpack.c.l.s4 1966171168
    %v1529 = vunpack.c.0.s8 %v1528
    %v1530 = vlaneseq
    %v1531 = vshrl.u32 %v1530, 7
    %v1532 = vsub.s32 %v1529, %v1531
    %v1533 = vrot.slane %v1525, %v1532
    %v1535 = vunpack.c.l.s4 1966171168
    %v1536 = vunpack.c.0.s8 %v1535
    %v1537 = vlaneseq
    %v1538 = vshrl.u32 %v1537, 7
    %v1539 = vsub.s32 %v1536, %v1538
    %v1540 = vrot.slane %v1533, %v1539
    %1541 = vrot.lane.b32.xlu0 %v1540, 96
    %v1542 = vpop.permute.xlu0 %1541
    %s1544 = scalar_lea.vmem %s5, 6
    %1545 = vst.msk [vmem:[%s1544] sm:$0x1] %vm320, %v1542
    %v1546 = vpack.c.bf16 %v1524, %v1524
    %v1549 = vunpack.c.l.s4 1966171168
    %v1550 = vunpack.c.0.s8 %v1549
    %v1551 = vlaneseq
    %v1552 = vshrl.u32 %v1551, 7
    %v1553 = vsub.s32 %v1550, %v1552
    %v1554 = vrot.slane %v1546, %v1553
    %v1556 = vunpack.c.l.s4 1966171168
    %v1557 = vunpack.c.0.s8 %v1556
    %v1558 = vlaneseq
    %v1559 = vshrl.u32 %v1558, 7
    %v1560 = vsub.s32 %v1557, %v1559
    %v1561 = vrot.slane %v1554, %v1560
    %1562 = vrot.lane.b32.xlu0 %v1561, 96
    %v1563 = vpop.permute.xlu0 %1562
    %s1565 = scalar_lea.vmem %s55, 1
    %1566 = vst.msk [vmem:[%s1565] sm:$0x1] %vm320, %v1563
    %s1567 = scalar_lea.vmem %s0, 7
    %v1568 = vld [vmem:[%s1567] sm:$0x1]
    %v1569 = vunpack.c.l.bf16 %v1568
    %1570 = vrot.lane.b32.xlu0 %v1525, 96
    %v1571 = vpop.permute.xlu0 %1570
    %v1573 = vsel %vm104, %v1571, 0
    %1575 = vmatprep.subr.bf16.mxu0 0
    %1576 = vmatpush1.bf16.msra.mxu0 %v100
    %1577 = vmatprep.subr.bf16.mxu0 0
    %1578 = vmatpush1.bf16.msra.mxu0 %v101
    %1579 = vmatprep.subr.bf16.mxu0 0
    %1580 = vmatpush1.bf16.msra.mxu0 0
    %1581 = vmatprep.subr.bf16.mxu0 0
    %1582 = vmatpush1.bf16.msra.mxu0 0
    %1583 = vmatprep.subr.bf16.mxu0 0
    %1584 = vmatpush1.bf16.msra.mxu0 0
    %1585 = vmatprep.subr.bf16.mxu0 0
    %1586 = vmatpush1.bf16.msra.mxu0 0
    %1587 = vmatprep.subr.bf16.mxu0 0
    %1588 = vmatpush1.bf16.msra.mxu0 0
    %1589 = vmatprep.subr.bf16.mxu0 0
    %1590 = vmatpush1.bf16.msra.mxu0 0
    %1591 = vmatprep.subr.bf16.mxu0 0
    %1592 = vmatpush1.bf16.msra.mxu0 0
    %1593 = vmatprep.subr.bf16.mxu0 0
    %1594 = vmatpush1.bf16.msra.mxu0 0
    %1595 = vmatprep.subr.bf16.mxu0 0
    %1596 = vmatpush1.bf16.msra.mxu0 0
    %1597 = vmatprep.subr.bf16.mxu0 0
    %1598 = vmatpush1.bf16.msra.mxu0 0
    %1599 = vmatprep.subr.bf16.mxu0 0
    %1600 = vmatpush1.bf16.msra.mxu0 0
    %1601 = vmatprep.subr.bf16.mxu0 0
    %1602 = vmatpush1.bf16.msra.mxu0 0
    %1603 = vmatprep.subr.bf16.mxu0 0
    %1604 = vmatpush1.bf16.msra.mxu0 0
    %1605 = vmatprep.subr.bf16.mxu0 0
    %1606 = vmatpush1.bf16.msra.mxu0 0
    %1607 = vmatprep.mubr.bf16.mxu0 0
    %1608 = vmatmul.mubr.bf16.gmra.mrb[0].mxu0 %v1573
    %v1609 = vpop.f32.mrb[0].mxu0
    %v1610 = vadd.f32 %v90, %v1609
    %v1611 = vpop.f32.mrb[0].mxu0
    %v1612 = vpop.f32.mrb[0].mxu0
    %v1613 = vpop.f32.mrb[0].mxu0
    %1614 = vdwg.mxu0
    %v1615 = vadd.f32 %v1569, %v1610
    %v1616 = vxor.u32 %v1615, 2147483648
    %v1617 = vmul.f32 %v1616, 1.442695
    %v1618 = vpow.pop %v1617
    %v1619 = vadd.f32 %v1618, 1.0
    %v1620 = vrcp.pop %v1619
    %v1621 = vmul.f32 1.0, %v1620
    %v1624 = vunpack.c.l.s4 1983009808
    %v1625 = vunpack.c.0.s8 %v1624
    %v1626 = vlaneseq
    %v1627 = vshrl.u32 %v1626, 7
    %v1628 = vsub.s32 %v1625, %v1627
    %v1629 = vrot.slane %v1610, %v1628
    %1630 = vrot.lane.b32.xlu0 %v1629, 64
    %v1631 = vpop.permute.xlu0 %1630
    %v1633 = vmul.f32 %v1621, %v1631
    %1635 = vrot.lane.b32.xlu0 %v1633, 64
    %v1636 = vpop.permute.xlu0 %1635
    %v1638 = vadd.f32 %v1569, %v1636
    %v1639 = vtanh.pop %v1638
    %v1640 = vsub.f32 1.0, %v1621
    %1642 = vrot.lane.b32.xlu0 %v1639, 96
    %v1643 = vpop.permute.xlu0 %1642
    %v1645 = vmul.f32 %v1640, %v1643
    %v1646 = vmul.f32 %v1621, %v1443
    %v1647 = vadd.f32 %v1645, %v1646
    %v1648 = vld [vmem:[%s48] sm:$0x1]
    %v1649 = vunpack.c.l.bf16 %v1648
    %1650 = vrot.lane.b32.xlu0 %v1546, 96
    %v1651 = vpop.permute.xlu0 %1650
    %v1653 = vsel %vm104, %v1651, 0
    %1655 = vmatprep.subr.bf16.mxu0 0
    %1656 = vmatpush1.bf16.msra.mxu0 %v210
    %1657 = vmatprep.subr.bf16.mxu0 0
    %1658 = vmatpush1.bf16.msra.mxu0 %v211
    %1659 = vmatprep.subr.bf16.mxu0 0
    %1660 = vmatpush1.bf16.msra.mxu0 0
    %1661 = vmatprep.subr.bf16.mxu0 0
    %1662 = vmatpush1.bf16.msra.mxu0 0
    %1663 = vmatprep.subr.bf16.mxu0 0
    %1664 = vmatpush1.bf16.msra.mxu0 0
    %1665 = vmatprep.subr.bf16.mxu0 0
    %1666 = vmatpush1.bf16.msra.mxu0 0
    %1667 = vmatprep.subr.bf16.mxu0 0
    %1668 = vmatpush1.bf16.msra.mxu0 0
    %1669 = vmatprep.subr.bf16.mxu0 0
    %1670 = vmatpush1.bf16.msra.mxu0 0
    %1671 = vmatprep.subr.bf16.mxu0 0
    %1672 = vmatpush1.bf16.msra.mxu0 0
    %1673 = vmatprep.subr.bf16.mxu0 0
    %1674 = vmatpush1.bf16.msra.mxu0 0
    %1675 = vmatprep.subr.bf16.mxu0 0
    %1676 = vmatpush1.bf16.msra.mxu0 0
    %1677 = vmatprep.subr.bf16.mxu0 0
    %1678 = vmatpush1.bf16.msra.mxu0 0
    %1679 = vmatprep.subr.bf16.mxu0 0
    %1680 = vmatpush1.bf16.msra.mxu0 0
    %1681 = vmatprep.subr.bf16.mxu0 0
    %1682 = vmatpush1.bf16.msra.mxu0 0
    %1683 = vmatprep.subr.bf16.mxu0 0
    %1684 = vmatpush1.bf16.msra.mxu0 0
    %1685 = vmatprep.subr.bf16.mxu0 0
    %1686 = vmatpush1.bf16.msra.mxu0 0
    %1687 = vmatprep.mubr.bf16.mxu0 0
    %1688 = vmatmul.mubr.bf16.gmra.mrb[0].mxu0 %v1653
    %v1689 = vpop.f32.mrb[0].mxu0
    %v1690 = vadd.f32 %v200, %v1689
    %v1691 = vpop.f32.mrb[0].mxu0
    %v1692 = vpop.f32.mrb[0].mxu0
    %v1693 = vpop.f32.mrb[0].mxu0
    %1694 = vdwg.mxu0
    %v1695 = vadd.f32 %v1649, %v1690
    %v1696 = vxor.u32 %v1695, 2147483648
    %v1697 = vmul.f32 %v1696, 1.442695
    %v1698 = vpow.pop %v1697
    %v1699 = vadd.f32 %v1698, 1.0
    %v1700 = vrcp.pop %v1699
    %v1701 = vmul.f32 1.0, %v1700
    %v1704 = vunpack.c.l.s4 1983009808
    %v1705 = vunpack.c.0.s8 %v1704
    %v1706 = vlaneseq
    %v1707 = vshrl.u32 %v1706, 7
    %v1708 = vsub.s32 %v1705, %v1707
    %v1709 = vrot.slane %v1690, %v1708
    %1710 = vrot.lane.b32.xlu0 %v1709, 64
    %v1711 = vpop.permute.xlu0 %1710
    %v1713 = vmul.f32 %v1701, %v1711
    %1715 = vrot.lane.b32.xlu0 %v1713, 64
    %v1716 = vpop.permute.xlu0 %1715
    %v1718 = vadd.f32 %v1649, %v1716
    %v1719 = vtanh.pop %v1718
    %v1720 = vsub.f32 1.0, %v1701
    %1722 = vrot.lane.b32.xlu0 %v1719, 96
    %v1723 = vpop.permute.xlu0 %1722
    %v1725 = vmul.f32 %v1720, %v1723
    %v1726 = vmul.f32 %v1701, %v1524
    %v1727 = vadd.f32 %v1725, %v1726
    %v1728 = vpack.c.bf16 %v1647, %v1647
    %v1731 = vunpack.c.l.s4 1966171168
    %v1732 = vunpack.c.0.s8 %v1731
    %v1733 = vlaneseq
    %v1734 = vshrl.u32 %v1733, 7
    %v1735 = vsub.s32 %v1732, %v1734
    %v1736 = vrot.slane %v1728, %v1735
    %v1738 = vunpack.c.l.s4 1966171168
    %v1739 = vunpack.c.0.s8 %v1738
    %v1740 = vlaneseq
    %v1741 = vshrl.u32 %v1740, 7
    %v1742 = vsub.s32 %v1739, %v1741
    %v1743 = vrot.slane %v1736, %v1742
    %1744 = vrot.lane.b32.xlu0 %v1743, 96
    %v1745 = vpop.permute.xlu0 %1744
    %s1747 = scalar_lea.vmem %s5, 7
    %1748 = vst.msk [vmem:[%s1747] sm:$0x1] %vm320, %v1745
    %v1749 = vpack.c.bf16 %v1727, %v1727
    %v1752 = vunpack.c.l.s4 1966171168
    %v1753 = vunpack.c.0.s8 %v1752
    %v1754 = vlaneseq
    %v1755 = vshrl.u32 %v1754, 7
    %v1756 = vsub.s32 %v1753, %v1755
    %v1757 = vrot.slane %v1749, %v1756
    %v1759 = vunpack.c.l.s4 1966171168
    %v1760 = vunpack.c.0.s8 %v1759
    %v1761 = vlaneseq
    %v1762 = vshrl.u32 %v1761, 7
    %v1763 = vsub.s32 %v1760, %v1762
    %v1764 = vrot.slane %v1757, %v1763
    %1765 = vrot.lane.b32.xlu0 %v1764, 96
    %v1766 = vpop.permute.xlu0 %1765
    %1768 = vst.msk [vmem:[%s55] sm:$0x1] %vm320, %v1766
    %v1771 = vunpack.c.l.s4 1983009808
    %v1772 = vunpack.c.0.s8 %v1771
    %v1773 = vlaneseq
    %v1774 = vshrl.u32 %v1773, 7
    %v1775 = vsub.s32 %v1772, %v1774
    %v1776 = vrot.slane %v1647, %v1775
    %1777 = vrot.lane.b32.xlu0 %v1776, 96
    %v1778 = vpop.permute.xlu0 %1777
    %vm1780 = vcmask 254976
    %1781 = vst.msk [vmem:[#allocation2] sm:$0x3] %vm1780, %v1778
    %v1784 = vunpack.c.l.s4 1983009808
    %v1785 = vunpack.c.0.s8 %v1784
    %v1786 = vlaneseq
    %v1787 = vshrl.u32 %v1786, 7
    %v1788 = vsub.s32 %v1785, %v1787
    %v1789 = vrot.slane %v1727, %v1788
    %1790 = vrot.lane.b32.xlu0 %v1789, 96
    %v1791 = vpop.permute.xlu0 %1790
    %1793 = vst.msk [vmem:[#allocation3] sm:$0x3] %vm1780, %v1791
    // Predicated region
    $region26: #{word_attn_forward.4} parent=1 // pred_check
      %p1794 = pneg %p59
    $region27: #{word_attn_forward.4} parent=1 // pred_check_branch
      %1796 = sbr.rel (%p1794) target = $region29
    $region28: #{word_attn_forward.4} parent=1 // pred_region
      %1797 = vst.msk [vmem:[#allocation4] sm:$0x3] %vm1780, %v1778
      %s1798 = scalar_lea.vmem [#allocation4], 2
      %1799 = vst.msk [vmem:[%s1798] sm:$0x3] %vm1780, %v1791
    $region29: #{word_attn_forward.4} parent=1 // pred_fallthru
      _
    %s1800 = ssub.s32 0, 0
    %s1801 = smul.u32 8, %s1800
    %p1802 = scmp.lt.s32.totalorder %s1801, 7
    %s1803 = scalar_select %p1802, %s1801, 7
    %s1804 = scalar_lea.vmem %s6, %s1803
    // Predicated region
    $region30: #{word_attn_forward.4} parent=1 // pred_check
      _
    $region31: #{word_attn_forward.4} parent=1 // pred_check_branch
      %1806 = sbr.rel (0) target = $region33
    $region32: #{word_attn_forward.4} parent=1 // pred_region
      _
    $region33: #{word_attn_forward.4} parent=1 // pred_fallthru
      _
    // Predicated region
    $region34: #{word_attn_forward.4} parent=1 // pred_check
      _
    $region35: #{word_attn_forward.4} parent=1 // pred_check_branch
      %1808 = sbr.rel (0) target = $region37
    $region36: #{word_attn_forward.4} parent=1 // pred_region
      %s1809 = ssub.s32 0, 0
      %s1810 = smul.u32 8, %s1809
    $region37: #{word_attn_forward.4} parent=1 // pred_fallthru
      _
    // Predicated region
    $region38: #{word_attn_forward.4} parent=1 // pred_check
      _
    $region39: #{word_attn_forward.4} parent=1 // pred_check_branch
      %1812 = sbr.rel (0) target = $region41
    $region40: #{word_attn_forward.4} parent=1 // pred_region
      %s1814 = ssub.s32 64, 64
      %1815 = vsyncadd [#allocation5], %s1814
      %s1816 = sshll.u32 [#allocation4], 4
      %s1817 = int_to_ptr.vmem [resolvable:$true] %s1816
      %1822 = dma.vmem_to_hbm [thread:$0]  %s1817, 64, %s7, [#allocation5], 32, 32, 2
    $region41: #{word_attn_forward.4} parent=1 // pred_fallthru
      _
    // Predicated region
    $region42: #{word_attn_forward.4} parent=1 // pred_check
      _
    $region43: #{word_attn_forward.4} parent=1 // pred_check_branch
      %1824 = sbr.rel (0) target = $region45
    $region44: #{word_attn_forward.4} parent=1 // pred_region
      _
    $region45: #{word_attn_forward.4} parent=1 // pred_fallthru
      _
    // Predicated region
    $region46: #{word_attn_forward.4} parent=1 // pred_check
      _
    $region47: #{word_attn_forward.4} parent=1 // pred_check_branch
      %1826 = sbr.rel (0) target = $region49
    $region48: #{word_attn_forward.4} parent=1 // pred_region
      %s1827 = ssub.s32 0, 0
      %s1828 = smul.u32 8, %s1827
      %p1829 = scmp.lt.s32.totalorder %s1828, 7
      %s1830 = scalar_select %p1829, %s1828, 7
      %s1831 = scalar_lea.vmem %s6, %s1830
    $region49: #{word_attn_forward.4} parent=1 // pred_fallthru
      _
    // Predicated region
    $region50: #{word_attn_forward.4} parent=1 // pred_check
      _
    $region51: #{word_attn_forward.4} parent=1 // pred_check_branch
      %1833 = sbr.rel (0) target = $region53
    $region52: #{word_attn_forward.4} parent=1 // pred_region
      %1834 = dma.done [#allocation5], 64
    $region53: #{word_attn_forward.4} parent=1 // pred_fallthru
      _
    %1835 = vsyncpa [#allocation5], 1

</llo_original>
